<compile_context>
chip_gen: v5e
topology: v5e:2x2
jax: 0.10.0
libtpu: 0.0.40
codegen_flags: <defaults>
</compile_context>

<pallas_src>
import functools

import jax
import jax.numpy as jnp
from jax import lax
from jax.experimental import pallas as pl
from jax.experimental.pallas import tpu as pltpu


# ----------------------------- in-kernel LSTM cell ------------------------------
def _lstm_cell(x, h, c, wih, whh, b):
    """PyTorch LSTM cell, gate order (i, f, g, o); single fused bias b = b_ih + b_hh."""
    H = h.shape[-1]
    gates = (jnp.dot(x, wih, preferred_element_type=jnp.float32)
             + jnp.dot(h, whh, preferred_element_type=jnp.float32)
             + b)
    i = jax.nn.sigmoid(gates[:, 0 * H:1 * H])
    f = jax.nn.sigmoid(gates[:, 1 * H:2 * H])
    g = jnp.tanh(gates[:, 2 * H:3 * H])
    o = jax.nn.sigmoid(gates[:, 3 * H:4 * H])
    c_new = f * c + i * g
    h_new = o * jnp.tanh(c_new)
    return h_new, c_new


# --------------------------- fused encoder+decoder kernel -----------------------
def seq2seq_kernel(enc_x_ref, dec_x_ref,
                   enc_wih_ref, enc_whh_ref, enc_b_ref,
                   dec_wih_ref, dec_whh_ref, dec_b_ref,
                   fc_w_ref, fc_b_ref,
                   logits_ref,
                   h_sc, c_sc, hall_sc,
                   *, T_enc, T_dec, Bp):
    # Encoder starts from zero state.
    h_sc[...] = jnp.zeros_like(h_sc)
    c_sc[...] = jnp.zeros_like(c_sc)

    # Hoist resident weight loads out of the serial recurrences.
    enc_wih = enc_wih_ref[...]
    enc_whh = enc_whh_ref[...]
    enc_b = enc_b_ref[...]
    dec_wih = dec_wih_ref[...]
    dec_whh = dec_whh_ref[...]
    dec_b = dec_b_ref[...]

    # ---- encoder recurrence over fliplr(source) embeddings ----
    def enc_body(t, carry):
        off = pl.multiple_of(t * Bp, Bp)
        x = enc_x_ref[pl.ds(off, Bp), :]                       # (Bp, E)
        h, c = _lstm_cell(x, h_sc[...], c_sc[...], enc_wih, enc_whh, enc_b)
        h_sc[...] = h
        c_sc[...] = c
        return carry

    lax.fori_loop(0, T_enc, enc_body, 0, unroll=True)

    # ---- decoder recurrence (teacher forced); stash per-step h for the FC head ----
    def dec_body(t, carry):
        off = pl.multiple_of(t * Bp, Bp)
        x = dec_x_ref[pl.ds(off, Bp), :]                       # (Bp, E)
        h, c = _lstm_cell(x, h_sc[...], c_sc[...], dec_wih, dec_whh, dec_b)
        h_sc[...] = h
        c_sc[...] = c
        hall_sc[pl.ds(off, Bp), :] = h
        return carry

    lax.fori_loop(0, T_dec, dec_body, 0, unroll=True)

    # ---- single lane-dense FC head matmul, off the serial critical path ----
    logits_ref[...] = (jnp.dot(hall_sc[...], fc_w_ref[...],
                               preferred_element_type=jnp.float32)
                       + fc_b_ref[...])


def _run_seq2seq(enc_x, dec_x, enc_wih, enc_whh, enc_b,
                 dec_wih, dec_whh, dec_b, fc_w, fc_b,
                 *, T_enc, T_dec, Bp, H, Vp):
    vmem = pl.BlockSpec(memory_space=pltpu.MemorySpace.VMEM)
    kernel = functools.partial(seq2seq_kernel, T_enc=T_enc, T_dec=T_dec, Bp=Bp)
    return pl.pallas_call(
        kernel,
        out_shape=jax.ShapeDtypeStruct((T_dec * Bp, Vp), jnp.float32),
        in_specs=[vmem] * 10,
        out_specs=vmem,
        scratch_shapes=[
            pltpu.VMEM((Bp, H), jnp.float32),           # h state
            pltpu.VMEM((Bp, H), jnp.float32),           # c state
            pltpu.VMEM((T_dec * Bp, H), jnp.float32),   # all decoder h (FC head input)
        ],
    )(enc_x, dec_x, enc_wih, enc_whh, enc_b,
      dec_wih, dec_whh, dec_b, fc_w, fc_b)


# ----------------------------- parameters / wrapper -----------------------------
def init_params(key, vocab_size, emb_dim, hid_dim):
    ks = jax.random.split(key, 8)
    s = 0.1
    return {
        # encoder
        "enc_emb": s * jax.random.normal(ks[0], (vocab_size, emb_dim), jnp.float32),
        "enc_wih": s * jax.random.normal(ks[1], (emb_dim, 4 * hid_dim), jnp.float32),
        "enc_whh": s * jax.random.normal(ks[2], (hid_dim, 4 * hid_dim), jnp.float32),
        "enc_b":   s * jax.random.normal(ks[3], (1, 4 * hid_dim), jnp.float32),
        # decoder
        "dec_emb": s * jax.random.normal(ks[4], (vocab_size, emb_dim), jnp.float32),
        "dec_wih": s * jax.random.normal(ks[5], (emb_dim, 4 * hid_dim), jnp.float32),
        "dec_whh": s * jax.random.normal(ks[6], (hid_dim, 4 * hid_dim), jnp.float32),
        "dec_b":   jnp.zeros((1, 4 * hid_dim), jnp.float32),
        "fc_w":    s * jax.random.normal(ks[7], (hid_dim, vocab_size), jnp.float32),
        "fc_b":    jnp.zeros((1, vocab_size), jnp.float32),
    }


@functools.partial(jax.jit, static_argnames=("teacher_forcing_ratio",))
def seq2seq_forward(params, source, target, teacher_forcing_ratio=1.0):
    """source, target: (B, T+1) int32 token ids -> outputs (B, V, T)."""
    assert teacher_forcing_ratio == 1.0  # see TODO(synk) above

    B, T_enc = source.shape
    T_dec = target.shape[1] - 1
    E = params["enc_emb"].shape[1]
    H = params["enc_whh"].shape[0]
    V = params["fc_w"].shape[1]

    Bp = max(8, -(-B // 8) * 8)          # sublane-pad the batch
    Vp = max(128, -(-V // 128) * 128)    # lane-pad the vocab (lane-dense stores)

    # ---- encoder inputs: torch.fliplr(source), embed, time-major, pad, flatten ----
    src_rev = source[:, ::-1]
    enc_emb = jnp.take(params["enc_emb"], src_rev, axis=0)          # (B, T+1, E)
    enc_x = jnp.transpose(enc_emb, (1, 0, 2)).astype(jnp.float32)   # (T+1, B, E)
    enc_x = jnp.pad(enc_x, ((0, 0), (0, Bp - B), (0, 0)))
    enc_x = enc_x.reshape(T_enc * Bp, E)

    # ---- decoder teacher-forced inputs: target[:, :-1] ----
    dec_in = target[:, :-1]
    dec_emb = jnp.take(params["dec_emb"], dec_in, axis=0)           # (B, T, E)
    dec_x = jnp.transpose(dec_emb, (1, 0, 2)).astype(jnp.float32)   # (T, B, E)
    dec_x = jnp.pad(dec_x, ((0, 0), (0, Bp - B), (0, 0)))
    dec_x = dec_x.reshape(T_dec * Bp, E)

    # ---- lane-dense FC head (pad vocab to Vp lanes, slice back below) ----
    fc_w = jnp.pad(params["fc_w"], ((0, 0), (0, Vp - V)))
    fc_b = jnp.pad(params["fc_b"], ((0, 0), (0, Vp - V)))

    logits_flat = _run_seq2seq(
        enc_x, dec_x,
        params["enc_wih"], params["enc_whh"], params["enc_b"],
        params["dec_wih"], params["dec_whh"], params["dec_b"],
        fc_w, fc_b,
        T_enc=T_enc, T_dec=T_dec, Bp=Bp, H=H, Vp=Vp)               # (T*Bp, Vp)

    logits = logits_flat.reshape(T_dec, Bp, Vp)[:, :B, :V]          # (T, B, V)
    return jnp.transpose(logits, (1, 2, 0))                         # (B, V, T)


# ------------------------------ pure-JAX reference -------------------------------
def _reference_forward(params, source, target):
    H = params["enc_whh"].shape[0]
    B = source.shape[0]

    def cell(x, h, c, wih, whh, b):
        gates = x @ wih + h @ whh + b
        i = jax.nn.sigmoid(gates[:, :H])
        f = jax.nn.sigmoid(gates[:, H:2 * H])
        g = jnp.tanh(gates[:, 2 * H:3 * H])
        o = jax.nn.sigmoid(gates[:, 3 * H:])
        c = f * c + i * g
        h = o * jnp.tanh(c)
        return h, c

    h = jnp.zeros((B, H), jnp.float32)
    c = jnp.zeros((B, H), jnp.float32)
    enc_x = jnp.take(params["enc_emb"], source[:, ::-1], axis=0)
    for t in range(enc_x.shape[1]):
        h, c = cell(enc_x[:, t], h, c,
                    params["enc_wih"], params["enc_whh"], params["enc_b"])

    dec_x = jnp.take(params["dec_emb"], target[:, :-1], axis=0)
    outs = []
    for t in range(dec_x.shape[1]):
        h, c = cell(dec_x[:, t], h, c,
                    params["dec_wih"], params["dec_whh"], params["dec_b"])
        outs.append(h @ params["fc_w"] + params["fc_b"])
    logits = jnp.stack(outs, axis=0)                                # (T, B, V)
    return jnp.transpose(logits, (1, 2, 0))                         # (B, V, T)


# ------------------------------------ main ---------------------------------------
if __name__ == "__main__":
    B, Tp1 = 2, 9          # source/target: (B, T+1)
    VOCAB, EMB, HID = 16, 32, 32

    key = jax.random.PRNGKey(0)
    k_p, k_s, k_t = jax.random.split(key, 3)

    params = init_params(k_p, VOCAB, EMB, HID)
    source = jax.random.randint(k_s, (B, Tp1), 0, VOCAB, dtype=jnp.int32)
    target = jax.random.randint(k_t, (B, Tp1), 0, VOCAB, dtype=jnp.int32)

    out = seq2seq_forward(params, source, target, teacher_forcing_ratio=1.0)
    out = jax.block_until_ready(out)

    assert out.shape == (B, VOCAB, Tp1 - 1), out.shape
    assert jnp.all(jnp.isfinite(out))

    ref = _reference_forward(params, source, target)
    max_err = float(jnp.max(jnp.abs(out - ref)))
    assert max_err < 1e-2, f"max abs err vs reference: {max_err}"

    print("KERNEL_OK")
</pallas_src>

<mosaic_0001>
module attributes {stable_mosaic.version = 11 : i64} {
  func.func @seq2seq_kernel(%arg0: memref<72x32xf32, #tpu.memory_space<vmem>>, %arg1: memref<64x32xf32, #tpu.memory_space<vmem>>, %arg2: memref<32x128xf32, #tpu.memory_space<vmem>>, %arg3: memref<32x128xf32, #tpu.memory_space<vmem>>, %arg4: memref<1x128xf32, #tpu.memory_space<vmem>>, %arg5: memref<32x128xf32, #tpu.memory_space<vmem>>, %arg6: memref<32x128xf32, #tpu.memory_space<vmem>>, %arg7: memref<1x128xf32, #tpu.memory_space<vmem>>, %arg8: memref<32x128xf32, #tpu.memory_space<vmem>>, %arg9: memref<1x128xf32, #tpu.memory_space<vmem>>, %arg10: memref<64x128xf32, #tpu.memory_space<vmem>>, %arg11: memref<8x32xf32, #tpu.memory_space<vmem>>, %arg12: memref<8x32xf32, #tpu.memory_space<vmem>>, %arg13: memref<64x32xf32, #tpu.memory_space<vmem>>) attributes {dimension_semantics = [], scalar_prefetch = 0 : i64, scratch_operands = 3 : i64, tpu.core_type = #tpu.core_type<tc>} {
    %cst = arith.constant 0.000000e+00 : f32
    %0 = vector.broadcast %cst : f32 to vector<8x32xf32>
    %c0 = arith.constant 0 : index
    %c0_0 = arith.constant 0 : index
    %1 = vector.load %arg11[%c0, %c0_0] : memref<8x32xf32, #tpu.memory_space<vmem>>, vector<8x32xf32>
    tpu.vector_store %arg11[%c0, %c0_0], %0 {strides = array<i32>} : memref<8x32xf32, #tpu.memory_space<vmem>>, vector<8x32xf32>,
    %cst_1 = arith.constant 0.000000e+00 : f32
    %2 = vector.broadcast %cst_1 : f32 to vector<8x32xf32>
    %c0_2 = arith.constant 0 : index
    %c0_3 = arith.constant 0 : index
    %3 = vector.load %arg12[%c0_2, %c0_3] : memref<8x32xf32, #tpu.memory_space<vmem>>, vector<8x32xf32>
    tpu.vector_store %arg12[%c0_2, %c0_3], %2 {strides = array<i32>} : memref<8x32xf32, #tpu.memory_space<vmem>>, vector<8x32xf32>,
    %c0_4 = arith.constant 0 : index
    %c0_5 = arith.constant 0 : index
    %4 = vector.load %arg2[%c0_4, %c0_5] : memref<32x128xf32, #tpu.memory_space<vmem>>, vector<32x128xf32>
    %c0_6 = arith.constant 0 : index
    %c0_7 = arith.constant 0 : index
    %5 = vector.load %arg3[%c0_6, %c0_7] : memref<32x128xf32, #tpu.memory_space<vmem>>, vector<32x128xf32>
    %c0_8 = arith.constant 0 : index
    %c0_9 = arith.constant 0 : index
    %6 = vector.load %arg4[%c0_8, %c0_9] : memref<1x128xf32, #tpu.memory_space<vmem>>, vector<1x128xf32>
    %c0_10 = arith.constant 0 : index
    %c0_11 = arith.constant 0 : index
    %7 = vector.load %arg5[%c0_10, %c0_11] : memref<32x128xf32, #tpu.memory_space<vmem>>, vector<32x128xf32>
    %c0_12 = arith.constant 0 : index
    %c0_13 = arith.constant 0 : index
    %8 = vector.load %arg6[%c0_12, %c0_13] : memref<32x128xf32, #tpu.memory_space<vmem>>, vector<32x128xf32>
    %c0_14 = arith.constant 0 : index
    %c0_15 = arith.constant 0 : index
    %9 = vector.load %arg7[%c0_14, %c0_15] : memref<1x128xf32, #tpu.memory_space<vmem>>, vector<1x128xf32>
    %c0_i32 = arith.constant 0 : i32
    %c8_i32 = arith.constant 8 : i32
    %10 = arith.muli %c0_i32, %c8_i32 : i32
    %11 = tpu.assume_multiple %10, 8 : i32
    %12 = arith.index_cast %11 : i32 to index
    %c0_16 = arith.constant 0 : index
    %13 = vector.load %arg0[%12, %c0_16] : memref<72x32xf32, #tpu.memory_space<vmem>>, vector<8x32xf32>
    %c0_17 = arith.constant 0 : index
    %c0_18 = arith.constant 0 : index
    %14 = vector.load %arg11[%c0_17, %c0_18] : memref<8x32xf32, #tpu.memory_space<vmem>>, vector<8x32xf32>
    %c0_19 = arith.constant 0 : index
    %c0_20 = arith.constant 0 : index
    %15 = vector.load %arg12[%c0_19, %c0_20] : memref<8x32xf32, #tpu.memory_space<vmem>>, vector<8x32xf32>
    %cst_21 = arith.constant dense<0.000000e+00> : vector<8x128xf32>
    %16 = tpu.matmul %13, %4, %cst_21 {dimension_numbers = #tpu.dot_dimension_numbers<[1], [0], [0], [1], [0, 0, 1, 1], [], []>} : vector<8x32xf32>, vector<32x128xf32>, vector<8x128xf32> -> vector<8x128xf32>
    %cst_22 = arith.constant dense<0.000000e+00> : vector<8x128xf32>
    %17 = tpu.matmul %14, %5, %cst_22 {dimension_numbers = #tpu.dot_dimension_numbers<[1], [0], [0], [1], [0, 0, 1, 1], [], []>} : vector<8x32xf32>, vector<32x128xf32>, vector<8x128xf32> -> vector<8x128xf32>
    %18 = arith.addf %16, %17 : vector<8x128xf32>
    %19 = vector.broadcast %6 : vector<1x128xf32> to vector<8x128xf32>
    %20 = arith.addf %18, %19 : vector<8x128xf32>
    %21 = vector.extract_strided_slice %20 {offsets = [0, 0], sizes = [8, 32], strides = [1, 1]} : vector<8x128xf32> to vector<8x32xf32>
    %22 = arith.negf %21 : vector<8x32xf32>
    %23 = math.exp %22 : vector<8x32xf32>
    %cst_23 = arith.constant 1.000000e+00 : f32
    %24 = vector.broadcast %cst_23 : f32 to vector<8x32xf32>
    %25 = arith.addf %24, %23 : vector<8x32xf32>
    %26 = arith.divf %24, %25 : vector<8x32xf32>
    %27 = vector.extract_strided_slice %20 {offsets = [0, 32], sizes = [8, 32], strides = [1, 1]} : vector<8x128xf32> to vector<8x32xf32>
    %28 = arith.negf %27 : vector<8x32xf32>
    %29 = math.exp %28 : vector<8x32xf32>
    %cst_24 = arith.constant 1.000000e+00 : f32
    %30 = vector.broadcast %cst_24 : f32 to vector<8x32xf32>
    %31 = arith.addf %30, %29 : vector<8x32xf32>
    %32 = arith.divf %30, %31 : vector<8x32xf32>
    %33 = vector.extract_strided_slice %20 {offsets = [0, 64], sizes = [8, 32], strides = [1, 1]} : vector<8x128xf32> to vector<8x32xf32>
    %34 = math.tanh %33 : vector<8x32xf32>
    %35 = vector.extract_strided_slice %20 {offsets = [0, 96], sizes = [8, 32], strides = [1, 1]} : vector<8x128xf32> to vector<8x32xf32>
    %36 = arith.negf %35 : vector<8x32xf32>
    %37 = math.exp %36 : vector<8x32xf32>
    %cst_25 = arith.constant 1.000000e+00 : f32
    %38 = vector.broadcast %cst_25 : f32 to vector<8x32xf32>
    %39 = arith.addf %38, %37 : vector<8x32xf32>
    %40 = arith.divf %38, %39 : vector<8x32xf32>
    %41 = arith.mulf %32, %15 : vector<8x32xf32>
    %42 = arith.mulf %26, %34 : vector<8x32xf32>
    %43 = arith.addf %41, %42 : vector<8x32xf32>
    %44 = math.tanh %43 : vector<8x32xf32>
    %45 = arith.mulf %40, %44 : vector<8x32xf32>
    %c0_26 = arith.constant 0 : index
    %c0_27 = arith.constant 0 : index
    %46 = vector.load %arg11[%c0_26, %c0_27] : memref<8x32xf32, #tpu.memory_space<vmem>>, vector<8x32xf32>
    tpu.vector_store %arg11[%c0_26, %c0_27], %45 {strides = array<i32>} : memref<8x32xf32, #tpu.memory_space<vmem>>, vector<8x32xf32>,
    %c0_28 = arith.constant 0 : index
    %c0_29 = arith.constant 0 : index
    %47 = vector.load %arg12[%c0_28, %c0_29] : memref<8x32xf32, #tpu.memory_space<vmem>>, vector<8x32xf32>
    tpu.vector_store %arg12[%c0_28, %c0_29], %43 {strides = array<i32>} : memref<8x32xf32, #tpu.memory_space<vmem>>, vector<8x32xf32>,
    %c1_i32 = arith.constant 1 : i32
    %c8_i32_30 = arith.constant 8 : i32
    %48 = arith.muli %c1_i32, %c8_i32_30 : i32
    %49 = tpu.assume_multiple %48, 8 : i32
    %50 = arith.index_cast %49 : i32 to index
    %c0_31 = arith.constant 0 : index
    %51 = vector.load %arg0[%50, %c0_31] : memref<72x32xf32, #tpu.memory_space<vmem>>, vector<8x32xf32>
    %c0_32 = arith.constant 0 : index
    %c0_33 = arith.constant 0 : index
    %52 = vector.load %arg11[%c0_32, %c0_33] : memref<8x32xf32, #tpu.memory_space<vmem>>, vector<8x32xf32>
    %c0_34 = arith.constant 0 : index
    %c0_35 = arith.constant 0 : index
    %53 = vector.load %arg12[%c0_34, %c0_35] : memref<8x32xf32, #tpu.memory_space<vmem>>, vector<8x32xf32>
    %cst_36 = arith.constant dense<0.000000e+00> : vector<8x128xf32>
    %54 = tpu.matmul %51, %4, %cst_36 {dimension_numbers = #tpu.dot_dimension_numbers<[1], [0], [0], [1], [0, 0, 1, 1], [], []>} : vector<8x32xf32>, vector<32x128xf32>, vector<8x128xf32> -> vector<8x128xf32>
    %cst_37 = arith.constant dense<0.000000e+00> : vector<8x128xf32>
    %55 = tpu.matmul %52, %5, %cst_37 {dimension_numbers = #tpu.dot_dimension_numbers<[1], [0], [0], [1], [0, 0, 1, 1], [], []>} : vector<8x32xf32>, vector<32x128xf32>, vector<8x128xf32> -> vector<8x128xf32>
    %56 = arith.addf %54, %55 : vector<8x128xf32>
    %57 = vector.broadcast %6 : vector<1x128xf32> to vector<8x128xf32>
    %58 = arith.addf %56, %57 : vector<8x128xf32>
    %59 = vector.extract_strided_slice %58 {offsets = [0, 0], sizes = [8, 32], strides = [1, 1]} : vector<8x128xf32> to vector<8x32xf32>
    %60 = arith.negf %59 : vector<8x32xf32>
    %61 = math.exp %60 : vector<8x32xf32>
    %cst_38 = arith.constant 1.000000e+00 : f32
    %62 = vector.broadcast %cst_38 : f32 to vector<8x32xf32>
    %63 = arith.addf %62, %61 : vector<8x32xf32>
    %64 = arith.divf %62, %63 : vector<8x32xf32>
    %65 = vector.extract_strided_slice %58 {offsets = [0, 32], sizes = [8, 32], strides = [1, 1]} : vector<8x128xf32> to vector<8x32xf32>
    %66 = arith.negf %65 : vector<8x32xf32>
    %67 = math.exp %66 : vector<8x32xf32>
    %cst_39 = arith.constant 1.000000e+00 : f32
    %68 = vector.broadcast %cst_39 : f32 to vector<8x32xf32>
    %69 = arith.addf %68, %67 : vector<8x32xf32>
    %70 = arith.divf %68, %69 : vector<8x32xf32>
    %71 = vector.extract_strided_slice %58 {offsets = [0, 64], sizes = [8, 32], strides = [1, 1]} : vector<8x128xf32> to vector<8x32xf32>
    %72 = math.tanh %71 : vector<8x32xf32>
    %73 = vector.extract_strided_slice %58 {offsets = [0, 96], sizes = [8, 32], strides = [1, 1]} : vector<8x128xf32> to vector<8x32xf32>
    %74 = arith.negf %73 : vector<8x32xf32>
    %75 = math.exp %74 : vector<8x32xf32>
    %cst_40 = arith.constant 1.000000e+00 : f32
    %76 = vector.broadcast %cst_40 : f32 to vector<8x32xf32>
    %77 = arith.addf %76, %75 : vector<8x32xf32>
    %78 = arith.divf %76, %77 : vector<8x32xf32>
    %79 = arith.mulf %70, %53 : vector<8x32xf32>
    %80 = arith.mulf %64, %72 : vector<8x32xf32>
    %81 = arith.addf %79, %80 : vector<8x32xf32>
    %82 = math.tanh %81 : vector<8x32xf32>
    %83 = arith.mulf %78, %82 : vector<8x32xf32>
    %c0_41 = arith.constant 0 : index
    %c0_42 = arith.constant 0 : index
    %84 = vector.load %arg11[%c0_41, %c0_42] : memref<8x32xf32, #tpu.memory_space<vmem>>, vector<8x32xf32>
    tpu.vector_store %arg11[%c0_41, %c0_42], %83 {strides = array<i32>} : memref<8x32xf32, #tpu.memory_space<vmem>>, vector<8x32xf32>,
    %c0_43 = arith.constant 0 : index
    %c0_44 = arith.constant 0 : index
    %85 = vector.load %arg12[%c0_43, %c0_44] : memref<8x32xf32, #tpu.memory_space<vmem>>, vector<8x32xf32>
    tpu.vector_store %arg12[%c0_43, %c0_44], %81 {strides = array<i32>} : memref<8x32xf32, #tpu.memory_space<vmem>>, vector<8x32xf32>,
    %c2_i32 = arith.constant 2 : i32
    %c8_i32_45 = arith.constant 8 : i32
    %86 = arith.muli %c2_i32, %c8_i32_45 : i32
    %87 = tpu.assume_multiple %86, 8 : i32
    %88 = arith.index_cast %87 : i32 to index
    %c0_46 = arith.constant 0 : index
    %89 = vector.load %arg0[%88, %c0_46] : memref<72x32xf32, #tpu.memory_space<vmem>>, vector<8x32xf32>
    %c0_47 = arith.constant 0 : index
    %c0_48 = arith.constant 0 : index
    %90 = vector.load %arg11[%c0_47, %c0_48] : memref<8x32xf32, #tpu.memory_space<vmem>>, vector<8x32xf32>
    %c0_49 = arith.constant 0 : index
    %c0_50 = arith.constant 0 : index
    %91 = vector.load %arg12[%c0_49, %c0_50] : memref<8x32xf32, #tpu.memory_space<vmem>>, vector<8x32xf32>
    %cst_51 = arith.constant dense<0.000000e+00> : vector<8x128xf32>
    %92 = tpu.matmul %89, %4, %cst_51 {dimension_numbers = #tpu.dot_dimension_numbers<[1], [0], [0], [1], [0, 0, 1, 1], [], []>} : vector<8x32xf32>, vector<32x128xf32>, vector<8x128xf32> -> vector<8x128xf32>
    %cst_52 = arith.constant dense<0.000000e+00> : vector<8x128xf32>
    %93 = tpu.matmul %90, %5, %cst_52 {dimension_numbers = #tpu.dot_dimension_numbers<[1], [0], [0], [1], [0, 0, 1, 1], [], []>} : vector<8x32xf32>, vector<32x128xf32>, vector<8x128xf32> -> vector<8x128xf32>
    %94 = arith.addf %92, %93 : vector<8x128xf32>
    %95 = vector.broadcast %6 : vector<1x128xf32> to vector<8x128xf32>
    %96 = arith.addf %94, %95 : vector<8x128xf32>
    %97 = vector.extract_strided_slice %96 {offsets = [0, 0], sizes = [8, 32], strides = [1, 1]} : vector<8x128xf32> to vector<8x32xf32>
    %98 = arith.negf %97 : vector<8x32xf32>
    %99 = math.exp %98 : vector<8x32xf32>
    %cst_53 = arith.constant 1.000000e+00 : f32
    %100 = vector.broadcast %cst_53 : f32 to vector<8x32xf32>
    %101 = arith.addf %100, %99 : vector<8x32xf32>
    %102 = arith.divf %100, %101 : vector<8x32xf32>
    %103 = vector.extract_strided_slice %96 {offsets = [0, 32], sizes = [8, 32], strides = [1, 1]} : vector<8x128xf32> to vector<8x32xf32>
    %104 = arith.negf %103 : vector<8x32xf32>
    %105 = math.exp %104 : vector<8x32xf32>
    %cst_54 = arith.constant 1.000000e+00 : f32
    %106 = vector.broadcast %cst_54 : f32 to vector<8x32xf32>
    %107 = arith.addf %106, %105 : vector<8x32xf32>
    %108 = arith.divf %106, %107 : vector<8x32xf32>
    %109 = vector.extract_strided_slice %96 {offsets = [0, 64], sizes = [8, 32], strides = [1, 1]} : vector<8x128xf32> to vector<8x32xf32>
    %110 = math.tanh %109 : vector<8x32xf32>
    %111 = vector.extract_strided_slice %96 {offsets = [0, 96], sizes = [8, 32], strides = [1, 1]} : vector<8x128xf32> to vector<8x32xf32>
    %112 = arith.negf %111 : vector<8x32xf32>
    %113 = math.exp %112 : vector<8x32xf32>
    %cst_55 = arith.constant 1.000000e+00 : f32
    %114 = vector.broadcast %cst_55 : f32 to vector<8x32xf32>
    %115 = arith.addf %114, %113 : vector<8x32xf32>
    %116 = arith.divf %114, %115 : vector<8x32xf32>
    %117 = arith.mulf %108, %91 : vector<8x32xf32>
    %118 = arith.mulf %102, %110 : vector<8x32xf32>
    %119 = arith.addf %117, %118 : vector<8x32xf32>
    %120 = math.tanh %119 : vector<8x32xf32>
    %121 = arith.mulf %116, %120 : vector<8x32xf32>
    %c0_56 = arith.constant 0 : index
    %c0_57 = arith.constant 0 : index
    %122 = vector.load %arg11[%c0_56, %c0_57] : memref<8x32xf32, #tpu.memory_space<vmem>>, vector<8x32xf32>
    tpu.vector_store %arg11[%c0_56, %c0_57], %121 {strides = array<i32>} : memref<8x32xf32, #tpu.memory_space<vmem>>, vector<8x32xf32>,
    %c0_58 = arith.constant 0 : index
    %c0_59 = arith.constant 0 : index
    %123 = vector.load %arg12[%c0_58, %c0_59] : memref<8x32xf32, #tpu.memory_space<vmem>>, vector<8x32xf32>
    tpu.vector_store %arg12[%c0_58, %c0_59], %119 {strides = array<i32>} : memref<8x32xf32, #tpu.memory_space<vmem>>, vector<8x32xf32>,
    %c3_i32 = arith.constant 3 : i32
    %c8_i32_60 = arith.constant 8 : i32
    %124 = arith.muli %c3_i32, %c8_i32_60 : i32
    %125 = tpu.assume_multiple %124, 8 : i32
    %126 = arith.index_cast %125 : i32 to index
    %c0_61 = arith.constant 0 : index
    %127 = vector.load %arg0[%126, %c0_61] : memref<72x32xf32, #tpu.memory_space<vmem>>, vector<8x32xf32>
    %c0_62 = arith.constant 0 : index
    %c0_63 = arith.constant 0 : index
    %128 = vector.load %arg11[%c0_62, %c0_63] : memref<8x32xf32, #tpu.memory_space<vmem>>, vector<8x32xf32>
    %c0_64 = arith.constant 0 : index
    %c0_65 = arith.constant 0 : index
    %129 = vector.load %arg12[%c0_64, %c0_65] : memref<8x32xf32, #tpu.memory_space<vmem>>, vector<8x32xf32>
    %cst_66 = arith.constant dense<0.000000e+00> : vector<8x128xf32>
    %130 = tpu.matmul %127, %4, %cst_66 {dimension_numbers = #tpu.dot_dimension_numbers<[1], [0], [0], [1], [0, 0, 1, 1], [], []>} : vector<8x32xf32>, vector<32x128xf32>, vector<8x128xf32> -> vector<8x128xf32>
    %cst_67 = arith.constant dense<0.000000e+00> : vector<8x128xf32>
    %131 = tpu.matmul %128, %5, %cst_67 {dimension_numbers = #tpu.dot_dimension_numbers<[1], [0], [0], [1], [0, 0, 1, 1], [], []>} : vector<8x32xf32>, vector<32x128xf32>, vector<8x128xf32> -> vector<8x128xf32>
    %132 = arith.addf %130, %131 : vector<8x128xf32>
    %133 = vector.broadcast %6 : vector<1x128xf32> to vector<8x128xf32>
    %134 = arith.addf %132, %133 : vector<8x128xf32>
    %135 = vector.extract_strided_slice %134 {offsets = [0, 0], sizes = [8, 32], strides = [1, 1]} : vector<8x128xf32> to vector<8x32xf32>
    %136 = arith.negf %135 : vector<8x32xf32>
    %137 = math.exp %136 : vector<8x32xf32>
    %cst_68 = arith.constant 1.000000e+00 : f32
    %138 = vector.broadcast %cst_68 : f32 to vector<8x32xf32>
    %139 = arith.addf %138, %137 : vector<8x32xf32>
    %140 = arith.divf %138, %139 : vector<8x32xf32>
    %141 = vector.extract_strided_slice %134 {offsets = [0, 32], sizes = [8, 32], strides = [1, 1]} : vector<8x128xf32> to vector<8x32xf32>
    %142 = arith.negf %141 : vector<8x32xf32>
    %143 = math.exp %142 : vector<8x32xf32>
    %cst_69 = arith.constant 1.000000e+00 : f32
    %144 = vector.broadcast %cst_69 : f32 to vector<8x32xf32>
    %145 = arith.addf %144, %143 : vector<8x32xf32>
    %146 = arith.divf %144, %145 : vector<8x32xf32>
    %147 = vector.extract_strided_slice %134 {offsets = [0, 64], sizes = [8, 32], strides = [1, 1]} : vector<8x128xf32> to vector<8x32xf32>
    %148 = math.tanh %147 : vector<8x32xf32>
    %149 = vector.extract_strided_slice %134 {offsets = [0, 96], sizes = [8, 32], strides = [1, 1]} : vector<8x128xf32> to vector<8x32xf32>
    %150 = arith.negf %149 : vector<8x32xf32>
    %151 = math.exp %150 : vector<8x32xf32>
    %cst_70 = arith.constant 1.000000e+00 : f32
    %152 = vector.broadcast %cst_70 : f32 to vector<8x32xf32>
    %153 = arith.addf %152, %151 : vector<8x32xf32>
    %154 = arith.divf %152, %153 : vector<8x32xf32>
    %155 = arith.mulf %146, %129 : vector<8x32xf32>
    %156 = arith.mulf %140, %148 : vector<8x32xf32>
    %157 = arith.addf %155, %156 : vector<8x32xf32>
    %158 = math.tanh %157 : vector<8x32xf32>
    %159 = arith.mulf %154, %158 : vector<8x32xf32>
    %c0_71 = arith.constant 0 : index
    %c0_72 = arith.constant 0 : index
    %160 = vector.load %arg11[%c0_71, %c0_72] : memref<8x32xf32, #tpu.memory_space<vmem>>, vector<8x32xf32>
    tpu.vector_store %arg11[%c0_71, %c0_72], %159 {strides = array<i32>} : memref<8x32xf32, #tpu.memory_space<vmem>>, vector<8x32xf32>,
    %c0_73 = arith.constant 0 : index
    %c0_74 = arith.constant 0 : index
    %161 = vector.load %arg12[%c0_73, %c0_74] : memref<8x32xf32, #tpu.memory_space<vmem>>, vector<8x32xf32>
    tpu.vector_store %arg12[%c0_73, %c0_74], %157 {strides = array<i32>} : memref<8x32xf32, #tpu.memory_space<vmem>>, vector<8x32xf32>,
    %c4_i32 = arith.constant 4 : i32
    %c8_i32_75 = arith.constant 8 : i32
    %162 = arith.muli %c4_i32, %c8_i32_75 : i32
    %163 = tpu.assume_multiple %162, 8 : i32
    %164 = arith.index_cast %163 : i32 to index
    %c0_76 = arith.constant 0 : index
    %165 = vector.load %arg0[%164, %c0_76] : memref<72x32xf32, #tpu.memory_space<vmem>>, vector<8x32xf32>
    %c0_77 = arith.constant 0 : index
    %c0_78 = arith.constant 0 : index
    %166 = vector.load %arg11[%c0_77, %c0_78] : memref<8x32xf32, #tpu.memory_space<vmem>>, vector<8x32xf32>
    %c0_79 = arith.constant 0 : index
    %c0_80 = arith.constant 0 : index
    %167 = vector.load %arg12[%c0_79, %c0_80] : memref<8x32xf32, #tpu.memory_space<vmem>>, vector<8x32xf32>
    %cst_81 = arith.constant dense<0.000000e+00> : vector<8x128xf32>
    %168 = tpu.matmul %165, %4, %cst_81 {dimension_numbers = #tpu.dot_dimension_numbers<[1], [0], [0], [1], [0, 0, 1, 1], [], []>} : vector<8x32xf32>, vector<32x128xf32>, vector<8x128xf32> -> vector<8x128xf32>
    %cst_82 = arith.constant dense<0.000000e+00> : vector<8x128xf32>
    %169 = tpu.matmul %166, %5, %cst_82 {dimension_numbers = #tpu.dot_dimension_numbers<[1], [0], [0], [1], [0, 0, 1, 1], [], []>} : vector<8x32xf32>, vector<32x128xf32>, vector<8x128xf32> -> vector<8x128xf32>
    %170 = arith.addf %168, %169 : vector<8x128xf32>
    %171 = vector.broadcast %6 : vector<1x128xf32> to vector<8x128xf32>
    %172 = arith.addf %170, %171 : vector<8x128xf32>
    %173 = vector.extract_strided_slice %172 {offsets = [0, 0], sizes = [8, 32], strides = [1, 1]} : vector<8x128xf32> to vector<8x32xf32>
    %174 = arith.negf %173 : vector<8x32xf32>
    %175 = math.exp %174 : vector<8x32xf32>
    %cst_83 = arith.constant 1.000000e+00 : f32
    %176 = vector.broadcast %cst_83 : f32 to vector<8x32xf32>
    %177 = arith.addf %176, %175 : vector<8x32xf32>
    %178 = arith.divf %176, %177 : vector<8x32xf32>
    %179 = vector.extract_strided_slice %172 {offsets = [0, 32], sizes = [8, 32], strides = [1, 1]} : vector<8x128xf32> to vector<8x32xf32>
    %180 = arith.negf %179 : vector<8x32xf32>
    %181 = math.exp %180 : vector<8x32xf32>
    %cst_84 = arith.constant 1.000000e+00 : f32
    %182 = vector.broadcast %cst_84 : f32 to vector<8x32xf32>
    %183 = arith.addf %182, %181 : vector<8x32xf32>
    %184 = arith.divf %182, %183 : vector<8x32xf32>
    %185 = vector.extract_strided_slice %172 {offsets = [0, 64], sizes = [8, 32], strides = [1, 1]} : vector<8x128xf32> to vector<8x32xf32>
    %186 = math.tanh %185 : vector<8x32xf32>
    %187 = vector.extract_strided_slice %172 {offsets = [0, 96], sizes = [8, 32], strides = [1, 1]} : vector<8x128xf32> to vector<8x32xf32>
    %188 = arith.negf %187 : vector<8x32xf32>
    %189 = math.exp %188 : vector<8x32xf32>
    %cst_85 = arith.constant 1.000000e+00 : f32
    %190 = vector.broadcast %cst_85 : f32 to vector<8x32xf32>
    %191 = arith.addf %190, %189 : vector<8x32xf32>
    %192 = arith.divf %190, %191 : vector<8x32xf32>
    %193 = arith.mulf %184, %167 : vector<8x32xf32>
    %194 = arith.mulf %178, %186 : vector<8x32xf32>
    %195 = arith.addf %193, %194 : vector<8x32xf32>
    %196 = math.tanh %195 : vector<8x32xf32>
    %197 = arith.mulf %192, %196 : vector<8x32xf32>
    %c0_86 = arith.constant 0 : index
    %c0_87 = arith.constant 0 : index
    %198 = vector.load %arg11[%c0_86, %c0_87] : memref<8x32xf32, #tpu.memory_space<vmem>>, vector<8x32xf32>
    tpu.vector_store %arg11[%c0_86, %c0_87], %197 {strides = array<i32>} : memref<8x32xf32, #tpu.memory_space<vmem>>, vector<8x32xf32>,
    %c0_88 = arith.constant 0 : index
    %c0_89 = arith.constant 0 : index
    %199 = vector.load %arg12[%c0_88, %c0_89] : memref<8x32xf32, #tpu.memory_space<vmem>>, vector<8x32xf32>
    tpu.vector_store %arg12[%c0_88, %c0_89], %195 {strides = array<i32>} : memref<8x32xf32, #tpu.memory_space<vmem>>, vector<8x32xf32>,
    %c5_i32 = arith.constant 5 : i32
    %c8_i32_90 = arith.constant 8 : i32
    %200 = arith.muli %c5_i32, %c8_i32_90 : i32
    %201 = tpu.assume_multiple %200, 8 : i32
    %202 = arith.index_cast %201 : i32 to index
    %c0_91 = arith.constant 0 : index
    %203 = vector.load %arg0[%202, %c0_91] : memref<72x32xf32, #tpu.memory_space<vmem>>, vector<8x32xf32>
    %c0_92 = arith.constant 0 : index
    %c0_93 = arith.constant 0 : index
    %204 = vector.load %arg11[%c0_92, %c0_93] : memref<8x32xf32, #tpu.memory_space<vmem>>, vector<8x32xf32>
    %c0_94 = arith.constant 0 : index
    %c0_95 = arith.constant 0 : index
    %205 = vector.load %arg12[%c0_94, %c0_95] : memref<8x32xf32, #tpu.memory_space<vmem>>, vector<8x32xf32>
    %cst_96 = arith.constant dense<0.000000e+00> : vector<8x128xf32>
    %206 = tpu.matmul %203, %4, %cst_96 {dimension_numbers = #tpu.dot_dimension_numbers<[1], [0], [0], [1], [0, 0, 1, 1], [], []>} : vector<8x32xf32>, vector<32x128xf32>, vector<8x128xf32> -> vector<8x128xf32>
    %cst_97 = arith.constant dense<0.000000e+00> : vector<8x128xf32>
    %207 = tpu.matmul %204, %5, %cst_97 {dimension_numbers = #tpu.dot_dimension_numbers<[1], [0], [0], [1], [0, 0, 1, 1], [], []>} : vector<8x32xf32>, vector<32x128xf32>, vector<8x128xf32> -> vector<8x128xf32>
    %208 = arith.addf %206, %207 : vector<8x128xf32>
    %209 = vector.broadcast %6 : vector<1x128xf32> to vector<8x128xf32>
    %210 = arith.addf %208, %209 : vector<8x128xf32>
    %211 = vector.extract_strided_slice %210 {offsets = [0, 0], sizes = [8, 32], strides = [1, 1]} : vector<8x128xf32> to vector<8x32xf32>
    %212 = arith.negf %211 : vector<8x32xf32>
    %213 = math.exp %212 : vector<8x32xf32>
    %cst_98 = arith.constant 1.000000e+00 : f32
    %214 = vector.broadcast %cst_98 : f32 to vector<8x32xf32>
    %215 = arith.addf %214, %213 : vector<8x32xf32>
    %216 = arith.divf %214, %215 : vector<8x32xf32>
    %217 = vector.extract_strided_slice %210 {offsets = [0, 32], sizes = [8, 32], strides = [1, 1]} : vector<8x128xf32> to vector<8x32xf32>
    %218 = arith.negf %217 : vector<8x32xf32>
    %219 = math.exp %218 : vector<8x32xf32>
    %cst_99 = arith.constant 1.000000e+00 : f32
    %220 = vector.broadcast %cst_99 : f32 to vector<8x32xf32>
    %221 = arith.addf %220, %219 : vector<8x32xf32>
    %222 = arith.divf %220, %221 : vector<8x32xf32>
    %223 = vector.extract_strided_slice %210 {offsets = [0, 64], sizes = [8, 32], strides = [1, 1]} : vector<8x128xf32> to vector<8x32xf32>
    %224 = math.tanh %223 : vector<8x32xf32>
    %225 = vector.extract_strided_slice %210 {offsets = [0, 96], sizes = [8, 32], strides = [1, 1]} : vector<8x128xf32> to vector<8x32xf32>
    %226 = arith.negf %225 : vector<8x32xf32>
    %227 = math.exp %226 : vector<8x32xf32>
    %cst_100 = arith.constant 1.000000e+00 : f32
    %228 = vector.broadcast %cst_100 : f32 to vector<8x32xf32>
    %229 = arith.addf %228, %227 : vector<8x32xf32>
    %230 = arith.divf %228, %229 : vector<8x32xf32>
    %231 = arith.mulf %222, %205 : vector<8x32xf32>
    %232 = arith.mulf %216, %224 : vector<8x32xf32>
    %233 = arith.addf %231, %232 : vector<8x32xf32>
    %234 = math.tanh %233 : vector<8x32xf32>
    %235 = arith.mulf %230, %234 : vector<8x32xf32>
    %c0_101 = arith.constant 0 : index
    %c0_102 = arith.constant 0 : index
    %236 = vector.load %arg11[%c0_101, %c0_102] : memref<8x32xf32, #tpu.memory_space<vmem>>, vector<8x32xf32>
    tpu.vector_store %arg11[%c0_101, %c0_102], %235 {strides = array<i32>} : memref<8x32xf32, #tpu.memory_space<vmem>>, vector<8x32xf32>,
    %c0_103 = arith.constant 0 : index
    %c0_104 = arith.constant 0 : index
    %237 = vector.load %arg12[%c0_103, %c0_104] : memref<8x32xf32, #tpu.memory_space<vmem>>, vector<8x32xf32>
    tpu.vector_store %arg12[%c0_103, %c0_104], %233 {strides = array<i32>} : memref<8x32xf32, #tpu.memory_space<vmem>>, vector<8x32xf32>,
    %c6_i32 = arith.constant 6 : i32
    %c8_i32_105 = arith.constant 8 : i32
    %238 = arith.muli %c6_i32, %c8_i32_105 : i32
    %239 = tpu.assume_multiple %238, 8 : i32
    %240 = arith.index_cast %239 : i32 to index
    %c0_106 = arith.constant 0 : index
    %241 = vector.load %arg0[%240, %c0_106] : memref<72x32xf32, #tpu.memory_space<vmem>>, vector<8x32xf32>
    %c0_107 = arith.constant 0 : index
    %c0_108 = arith.constant 0 : index
    %242 = vector.load %arg11[%c0_107, %c0_108] : memref<8x32xf32, #tpu.memory_space<vmem>>, vector<8x32xf32>
    %c0_109 = arith.constant 0 : index
    %c0_110 = arith.constant 0 : index
    %243 = vector.load %arg12[%c0_109, %c0_110] : memref<8x32xf32, #tpu.memory_space<vmem>>, vector<8x32xf32>
    %cst_111 = arith.constant dense<0.000000e+00> : vector<8x128xf32>
    %244 = tpu.matmul %241, %4, %cst_111 {dimension_numbers = #tpu.dot_dimension_numbers<[1], [0], [0], [1], [0, 0, 1, 1], [], []>} : vector<8x32xf32>, vector<32x128xf32>, vector<8x128xf32> -> vector<8x128xf32>
    %cst_112 = arith.constant dense<0.000000e+00> : vector<8x128xf32>
    %245 = tpu.matmul %242, %5, %cst_112 {dimension_numbers = #tpu.dot_dimension_numbers<[1], [0], [0], [1], [0, 0, 1, 1], [], []>} : vector<8x32xf32>, vector<32x128xf32>, vector<8x128xf32> -> vector<8x128xf32>
    %246 = arith.addf %244, %245 : vector<8x128xf32>
    %247 = vector.broadcast %6 : vector<1x128xf32> to vector<8x128xf32>
    %248 = arith.addf %246, %247 : vector<8x128xf32>
    %249 = vector.extract_strided_slice %248 {offsets = [0, 0], sizes = [8, 32], strides = [1, 1]} : vector<8x128xf32> to vector<8x32xf32>
    %250 = arith.negf %249 : vector<8x32xf32>
    %251 = math.exp %250 : vector<8x32xf32>
    %cst_113 = arith.constant 1.000000e+00 : f32
    %252 = vector.broadcast %cst_113 : f32 to vector<8x32xf32>
    %253 = arith.addf %252, %251 : vector<8x32xf32>
    %254 = arith.divf %252, %253 : vector<8x32xf32>
    %255 = vector.extract_strided_slice %248 {offsets = [0, 32], sizes = [8, 32], strides = [1, 1]} : vector<8x128xf32> to vector<8x32xf32>
    %256 = arith.negf %255 : vector<8x32xf32>
    %257 = math.exp %256 : vector<8x32xf32>
    %cst_114 = arith.constant 1.000000e+00 : f32
    %258 = vector.broadcast %cst_114 : f32 to vector<8x32xf32>
    %259 = arith.addf %258, %257 : vector<8x32xf32>
    %260 = arith.divf %258, %259 : vector<8x32xf32>
    %261 = vector.extract_strided_slice %248 {offsets = [0, 64], sizes = [8, 32], strides = [1, 1]} : vector<8x128xf32> to vector<8x32xf32>
    %262 = math.tanh %261 : vector<8x32xf32>
    %263 = vector.extract_strided_slice %248 {offsets = [0, 96], sizes = [8, 32], strides = [1, 1]} : vector<8x128xf32> to vector<8x32xf32>
    %264 = arith.negf %263 : vector<8x32xf32>
    %265 = math.exp %264 : vector<8x32xf32>
    %cst_115 = arith.constant 1.000000e+00 : f32
    %266 = vector.broadcast %cst_115 : f32 to vector<8x32xf32>
    %267 = arith.addf %266, %265 : vector<8x32xf32>
    %268 = arith.divf %266, %267 : vector<8x32xf32>
    %269 = arith.mulf %260, %243 : vector<8x32xf32>
    %270 = arith.mulf %254, %262 : vector<8x32xf32>
    %271 = arith.addf %269, %270 : vector<8x32xf32>
    %272 = math.tanh %271 : vector<8x32xf32>
    %273 = arith.mulf %268, %272 : vector<8x32xf32>
    %c0_116 = arith.constant 0 : index
    %c0_117 = arith.constant 0 : index
    %274 = vector.load %arg11[%c0_116, %c0_117] : memref<8x32xf32, #tpu.memory_space<vmem>>, vector<8x32xf32>
    tpu.vector_store %arg11[%c0_116, %c0_117], %273 {strides = array<i32>} : memref<8x32xf32, #tpu.memory_space<vmem>>, vector<8x32xf32>,
    %c0_118 = arith.constant 0 : index
    %c0_119 = arith.constant 0 : index
    %275 = vector.load %arg12[%c0_118, %c0_119] : memref<8x32xf32, #tpu.memory_space<vmem>>, vector<8x32xf32>
    tpu.vector_store %arg12[%c0_118, %c0_119], %271 {strides = array<i32>} : memref<8x32xf32, #tpu.memory_space<vmem>>, vector<8x32xf32>,
    %c7_i32 = arith.constant 7 : i32
    %c8_i32_120 = arith.constant 8 : i32
    %276 = arith.muli %c7_i32, %c8_i32_120 : i32
    %277 = tpu.assume_multiple %276, 8 : i32
    %278 = arith.index_cast %277 : i32 to index
    %c0_121 = arith.constant 0 : index
    %279 = vector.load %arg0[%278, %c0_121] : memref<72x32xf32, #tpu.memory_space<vmem>>, vector<8x32xf32>
    %c0_122 = arith.constant 0 : index
    %c0_123 = arith.constant 0 : index
    %280 = vector.load %arg11[%c0_122, %c0_123] : memref<8x32xf32, #tpu.memory_space<vmem>>, vector<8x32xf32>
    %c0_124 = arith.constant 0 : index
    %c0_125 = arith.constant 0 : index
    %281 = vector.load %arg12[%c0_124, %c0_125] : memref<8x32xf32, #tpu.memory_space<vmem>>, vector<8x32xf32>
    %cst_126 = arith.constant dense<0.000000e+00> : vector<8x128xf32>
    %282 = tpu.matmul %279, %4, %cst_126 {dimension_numbers = #tpu.dot_dimension_numbers<[1], [0], [0], [1], [0, 0, 1, 1], [], []>} : vector<8x32xf32>, vector<32x128xf32>, vector<8x128xf32> -> vector<8x128xf32>
    %cst_127 = arith.constant dense<0.000000e+00> : vector<8x128xf32>
    %283 = tpu.matmul %280, %5, %cst_127 {dimension_numbers = #tpu.dot_dimension_numbers<[1], [0], [0], [1], [0, 0, 1, 1], [], []>} : vector<8x32xf32>, vector<32x128xf32>, vector<8x128xf32> -> vector<8x128xf32>
    %284 = arith.addf %282, %283 : vector<8x128xf32>
    %285 = vector.broadcast %6 : vector<1x128xf32> to vector<8x128xf32>
    %286 = arith.addf %284, %285 : vector<8x128xf32>
    %287 = vector.extract_strided_slice %286 {offsets = [0, 0], sizes = [8, 32], strides = [1, 1]} : vector<8x128xf32> to vector<8x32xf32>
    %288 = arith.negf %287 : vector<8x32xf32>
    %289 = math.exp %288 : vector<8x32xf32>
    %cst_128 = arith.constant 1.000000e+00 : f32
    %290 = vector.broadcast %cst_128 : f32 to vector<8x32xf32>
    %291 = arith.addf %290, %289 : vector<8x32xf32>
    %292 = arith.divf %290, %291 : vector<8x32xf32>
    %293 = vector.extract_strided_slice %286 {offsets = [0, 32], sizes = [8, 32], strides = [1, 1]} : vector<8x128xf32> to vector<8x32xf32>
    %294 = arith.negf %293 : vector<8x32xf32>
    %295 = math.exp %294 : vector<8x32xf32>
    %cst_129 = arith.constant 1.000000e+00 : f32
    %296 = vector.broadcast %cst_129 : f32 to vector<8x32xf32>
    %297 = arith.addf %296, %295 : vector<8x32xf32>
    %298 = arith.divf %296, %297 : vector<8x32xf32>
    %299 = vector.extract_strided_slice %286 {offsets = [0, 64], sizes = [8, 32], strides = [1, 1]} : vector<8x128xf32> to vector<8x32xf32>
    %300 = math.tanh %299 : vector<8x32xf32>
    %301 = vector.extract_strided_slice %286 {offsets = [0, 96], sizes = [8, 32], strides = [1, 1]} : vector<8x128xf32> to vector<8x32xf32>
    %302 = arith.negf %301 : vector<8x32xf32>
    %303 = math.exp %302 : vector<8x32xf32>
    %cst_130 = arith.constant 1.000000e+00 : f32
    %304 = vector.broadcast %cst_130 : f32 to vector<8x32xf32>
    %305 = arith.addf %304, %303 : vector<8x32xf32>
    %306 = arith.divf %304, %305 : vector<8x32xf32>
    %307 = arith.mulf %298, %281 : vector<8x32xf32>
    %308 = arith.mulf %292, %300 : vector<8x32xf32>
    %309 = arith.addf %307, %308 : vector<8x32xf32>
    %310 = math.tanh %309 : vector<8x32xf32>
    %311 = arith.mulf %306, %310 : vector<8x32xf32>
    %c0_131 = arith.constant 0 : index
    %c0_132 = arith.constant 0 : index
    %312 = vector.load %arg11[%c0_131, %c0_132] : memref<8x32xf32, #tpu.memory_space<vmem>>, vector<8x32xf32>
    tpu.vector_store %arg11[%c0_131, %c0_132], %311 {strides = array<i32>} : memref<8x32xf32, #tpu.memory_space<vmem>>, vector<8x32xf32>,
    %c0_133 = arith.constant 0 : index
    %c0_134 = arith.constant 0 : index
    %313 = vector.load %arg12[%c0_133, %c0_134] : memref<8x32xf32, #tpu.memory_space<vmem>>, vector<8x32xf32>
    tpu.vector_store %arg12[%c0_133, %c0_134], %309 {strides = array<i32>} : memref<8x32xf32, #tpu.memory_space<vmem>>, vector<8x32xf32>,
    %c8_i32_135 = arith.constant 8 : i32
    %c8_i32_136 = arith.constant 8 : i32
    %314 = arith.muli %c8_i32_135, %c8_i32_136 : i32
    %315 = tpu.assume_multiple %314, 8 : i32
    %316 = arith.index_cast %315 : i32 to index
    %c0_137 = arith.constant 0 : index
    %317 = vector.load %arg0[%316, %c0_137] : memref<72x32xf32, #tpu.memory_space<vmem>>, vector<8x32xf32>
    %c0_138 = arith.constant 0 : index
    %c0_139 = arith.constant 0 : index
    %318 = vector.load %arg11[%c0_138, %c0_139] : memref<8x32xf32, #tpu.memory_space<vmem>>, vector<8x32xf32>
    %c0_140 = arith.constant 0 : index
    %c0_141 = arith.constant 0 : index
    %319 = vector.load %arg12[%c0_140, %c0_141] : memref<8x32xf32, #tpu.memory_space<vmem>>, vector<8x32xf32>
    %cst_142 = arith.constant dense<0.000000e+00> : vector<8x128xf32>
    %320 = tpu.matmul %317, %4, %cst_142 {dimension_numbers = #tpu.dot_dimension_numbers<[1], [0], [0], [1], [0, 0, 1, 1], [], []>} : vector<8x32xf32>, vector<32x128xf32>, vector<8x128xf32> -> vector<8x128xf32>
    %cst_143 = arith.constant dense<0.000000e+00> : vector<8x128xf32>
    %321 = tpu.matmul %318, %5, %cst_143 {dimension_numbers = #tpu.dot_dimension_numbers<[1], [0], [0], [1], [0, 0, 1, 1], [], []>} : vector<8x32xf32>, vector<32x128xf32>, vector<8x128xf32> -> vector<8x128xf32>
    %322 = arith.addf %320, %321 : vector<8x128xf32>
    %323 = vector.broadcast %6 : vector<1x128xf32> to vector<8x128xf32>
    %324 = arith.addf %322, %323 : vector<8x128xf32>
    %325 = vector.extract_strided_slice %324 {offsets = [0, 0], sizes = [8, 32], strides = [1, 1]} : vector<8x128xf32> to vector<8x32xf32>
    %326 = arith.negf %325 : vector<8x32xf32>
    %327 = math.exp %326 : vector<8x32xf32>
    %cst_144 = arith.constant 1.000000e+00 : f32
    %328 = vector.broadcast %cst_144 : f32 to vector<8x32xf32>
    %329 = arith.addf %328, %327 : vector<8x32xf32>
    %330 = arith.divf %328, %329 : vector<8x32xf32>
    %331 = vector.extract_strided_slice %324 {offsets = [0, 32], sizes = [8, 32], strides = [1, 1]} : vector<8x128xf32> to vector<8x32xf32>
    %332 = arith.negf %331 : vector<8x32xf32>
    %333 = math.exp %332 : vector<8x32xf32>
    %cst_145 = arith.constant 1.000000e+00 : f32
    %334 = vector.broadcast %cst_145 : f32 to vector<8x32xf32>
    %335 = arith.addf %334, %333 : vector<8x32xf32>
    %336 = arith.divf %334, %335 : vector<8x32xf32>
    %337 = vector.extract_strided_slice %324 {offsets = [0, 64], sizes = [8, 32], strides = [1, 1]} : vector<8x128xf32> to vector<8x32xf32>
    %338 = math.tanh %337 : vector<8x32xf32>
    %339 = vector.extract_strided_slice %324 {offsets = [0, 96], sizes = [8, 32], strides = [1, 1]} : vector<8x128xf32> to vector<8x32xf32>
    %340 = arith.negf %339 : vector<8x32xf32>
    %341 = math.exp %340 : vector<8x32xf32>
    %cst_146 = arith.constant 1.000000e+00 : f32
    %342 = vector.broadcast %cst_146 : f32 to vector<8x32xf32>
    %343 = arith.addf %342, %341 : vector<8x32xf32>
    %344 = arith.divf %342, %343 : vector<8x32xf32>
    %345 = arith.mulf %336, %319 : vector<8x32xf32>
    %346 = arith.mulf %330, %338 : vector<8x32xf32>
    %347 = arith.addf %345, %346 : vector<8x32xf32>
    %348 = math.tanh %347 : vector<8x32xf32>
    %349 = arith.mulf %344, %348 : vector<8x32xf32>
    %c0_147 = arith.constant 0 : index
    %c0_148 = arith.constant 0 : index
    %350 = vector.load %arg11[%c0_147, %c0_148] : memref<8x32xf32, #tpu.memory_space<vmem>>, vector<8x32xf32>
    tpu.vector_store %arg11[%c0_147, %c0_148], %349 {strides = array<i32>} : memref<8x32xf32, #tpu.memory_space<vmem>>, vector<8x32xf32>,
    %c0_149 = arith.constant 0 : index
    %c0_150 = arith.constant 0 : index
    %351 = vector.load %arg12[%c0_149, %c0_150] : memref<8x32xf32, #tpu.memory_space<vmem>>, vector<8x32xf32>
    tpu.vector_store %arg12[%c0_149, %c0_150], %347 {strides = array<i32>} : memref<8x32xf32, #tpu.memory_space<vmem>>, vector<8x32xf32>,
    %c9_i32 = arith.constant 9 : i32
    %c0_i32_151 = arith.constant 0 : i32
    %c8_i32_152 = arith.constant 8 : i32
    %352 = arith.muli %c0_i32_151, %c8_i32_152 : i32
    %353 = tpu.assume_multiple %352, 8 : i32
    %354 = arith.index_cast %353 : i32 to index
    %c0_153 = arith.constant 0 : index
    %355 = vector.load %arg1[%354, %c0_153] : memref<64x32xf32, #tpu.memory_space<vmem>>, vector<8x32xf32>
    %c0_154 = arith.constant 0 : index
    %c0_155 = arith.constant 0 : index
    %356 = vector.load %arg11[%c0_154, %c0_155] : memref<8x32xf32, #tpu.memory_space<vmem>>, vector<8x32xf32>
    %c0_156 = arith.constant 0 : index
    %c0_157 = arith.constant 0 : index
    %357 = vector.load %arg12[%c0_156, %c0_157] : memref<8x32xf32, #tpu.memory_space<vmem>>, vector<8x32xf32>
    %cst_158 = arith.constant dense<0.000000e+00> : vector<8x128xf32>
    %358 = tpu.matmul %355, %7, %cst_158 {dimension_numbers = #tpu.dot_dimension_numbers<[1], [0], [0], [1], [0, 0, 1, 1], [], []>} : vector<8x32xf32>, vector<32x128xf32>, vector<8x128xf32> -> vector<8x128xf32>
    %cst_159 = arith.constant dense<0.000000e+00> : vector<8x128xf32>
    %359 = tpu.matmul %356, %8, %cst_159 {dimension_numbers = #tpu.dot_dimension_numbers<[1], [0], [0], [1], [0, 0, 1, 1], [], []>} : vector<8x32xf32>, vector<32x128xf32>, vector<8x128xf32> -> vector<8x128xf32>
    %360 = arith.addf %358, %359 : vector<8x128xf32>
    %361 = vector.broadcast %9 : vector<1x128xf32> to vector<8x128xf32>
    %362 = arith.addf %360, %361 : vector<8x128xf32>
    %363 = vector.extract_strided_slice %362 {offsets = [0, 0], sizes = [8, 32], strides = [1, 1]} : vector<8x128xf32> to vector<8x32xf32>
    %364 = arith.negf %363 : vector<8x32xf32>
    %365 = math.exp %364 : vector<8x32xf32>
    %cst_160 = arith.constant 1.000000e+00 : f32
    %366 = vector.broadcast %cst_160 : f32 to vector<8x32xf32>
    %367 = arith.addf %366, %365 : vector<8x32xf32>
    %368 = arith.divf %366, %367 : vector<8x32xf32>
    %369 = vector.extract_strided_slice %362 {offsets = [0, 32], sizes = [8, 32], strides = [1, 1]} : vector<8x128xf32> to vector<8x32xf32>
    %370 = arith.negf %369 : vector<8x32xf32>
    %371 = math.exp %370 : vector<8x32xf32>
    %cst_161 = arith.constant 1.000000e+00 : f32
    %372 = vector.broadcast %cst_161 : f32 to vector<8x32xf32>
    %373 = arith.addf %372, %371 : vector<8x32xf32>
    %374 = arith.divf %372, %373 : vector<8x32xf32>
    %375 = vector.extract_strided_slice %362 {offsets = [0, 64], sizes = [8, 32], strides = [1, 1]} : vector<8x128xf32> to vector<8x32xf32>
    %376 = math.tanh %375 : vector<8x32xf32>
    %377 = vector.extract_strided_slice %362 {offsets = [0, 96], sizes = [8, 32], strides = [1, 1]} : vector<8x128xf32> to vector<8x32xf32>
    %378 = arith.negf %377 : vector<8x32xf32>
    %379 = math.exp %378 : vector<8x32xf32>
    %cst_162 = arith.constant 1.000000e+00 : f32
    %380 = vector.broadcast %cst_162 : f32 to vector<8x32xf32>
    %381 = arith.addf %380, %379 : vector<8x32xf32>
    %382 = arith.divf %380, %381 : vector<8x32xf32>
    %383 = arith.mulf %374, %357 : vector<8x32xf32>
    %384 = arith.mulf %368, %376 : vector<8x32xf32>
    %385 = arith.addf %383, %384 : vector<8x32xf32>
    %386 = math.tanh %385 : vector<8x32xf32>
    %387 = arith.mulf %382, %386 : vector<8x32xf32>
    %c0_163 = arith.constant 0 : index
    %c0_164 = arith.constant 0 : index
    %388 = vector.load %arg11[%c0_163, %c0_164] : memref<8x32xf32, #tpu.memory_space<vmem>>, vector<8x32xf32>
    tpu.vector_store %arg11[%c0_163, %c0_164], %387 {strides = array<i32>} : memref<8x32xf32, #tpu.memory_space<vmem>>, vector<8x32xf32>,
    %c0_165 = arith.constant 0 : index
    %c0_166 = arith.constant 0 : index
    %389 = vector.load %arg12[%c0_165, %c0_166] : memref<8x32xf32, #tpu.memory_space<vmem>>, vector<8x32xf32>
    tpu.vector_store %arg12[%c0_165, %c0_166], %385 {strides = array<i32>} : memref<8x32xf32, #tpu.memory_space<vmem>>, vector<8x32xf32>,
    %390 = arith.index_cast %353 : i32 to index
    %c0_167 = arith.constant 0 : index
    %391 = vector.load %arg13[%390, %c0_167] : memref<64x32xf32, #tpu.memory_space<vmem>>, vector<8x32xf32>
    tpu.vector_store %arg13[%390, %c0_167], %387 {strides = array<i32>} : memref<64x32xf32, #tpu.memory_space<vmem>>, vector<8x32xf32>,
    %c1_i32_168 = arith.constant 1 : i32
    %c8_i32_169 = arith.constant 8 : i32
    %392 = arith.muli %c1_i32_168, %c8_i32_169 : i32
    %393 = tpu.assume_multiple %392, 8 : i32
    %394 = arith.index_cast %393 : i32 to index
    %c0_170 = arith.constant 0 : index
    %395 = vector.load %arg1[%394, %c0_170] : memref<64x32xf32, #tpu.memory_space<vmem>>, vector<8x32xf32>
    %c0_171 = arith.constant 0 : index
    %c0_172 = arith.constant 0 : index
    %396 = vector.load %arg11[%c0_171, %c0_172] : memref<8x32xf32, #tpu.memory_space<vmem>>, vector<8x32xf32>
    %c0_173 = arith.constant 0 : index
    %c0_174 = arith.constant 0 : index
    %397 = vector.load %arg12[%c0_173, %c0_174] : memref<8x32xf32, #tpu.memory_space<vmem>>, vector<8x32xf32>
    %cst_175 = arith.constant dense<0.000000e+00> : vector<8x128xf32>
    %398 = tpu.matmul %395, %7, %cst_175 {dimension_numbers = #tpu.dot_dimension_numbers<[1], [0], [0], [1], [0, 0, 1, 1], [], []>} : vector<8x32xf32>, vector<32x128xf32>, vector<8x128xf32> -> vector<8x128xf32>
    %cst_176 = arith.constant dense<0.000000e+00> : vector<8x128xf32>
    %399 = tpu.matmul %396, %8, %cst_176 {dimension_numbers = #tpu.dot_dimension_numbers<[1], [0], [0], [1], [0, 0, 1, 1], [], []>} : vector<8x32xf32>, vector<32x128xf32>, vector<8x128xf32> -> vector<8x128xf32>
    %400 = arith.addf %398, %399 : vector<8x128xf32>
    %401 = vector.broadcast %9 : vector<1x128xf32> to vector<8x128xf32>
    %402 = arith.addf %400, %401 : vector<8x128xf32>
    %403 = vector.extract_strided_slice %402 {offsets = [0, 0], sizes = [8, 32], strides = [1, 1]} : vector<8x128xf32> to vector<8x32xf32>
    %404 = arith.negf %403 : vector<8x32xf32>
    %405 = math.exp %404 : vector<8x32xf32>
    %cst_177 = arith.constant 1.000000e+00 : f32
    %406 = vector.broadcast %cst_177 : f32 to vector<8x32xf32>
    %407 = arith.addf %406, %405 : vector<8x32xf32>
    %408 = arith.divf %406, %407 : vector<8x32xf32>
    %409 = vector.extract_strided_slice %402 {offsets = [0, 32], sizes = [8, 32], strides = [1, 1]} : vector<8x128xf32> to vector<8x32xf32>
    %410 = arith.negf %409 : vector<8x32xf32>
    %411 = math.exp %410 : vector<8x32xf32>
    %cst_178 = arith.constant 1.000000e+00 : f32
    %412 = vector.broadcast %cst_178 : f32 to vector<8x32xf32>
    %413 = arith.addf %412, %411 : vector<8x32xf32>
    %414 = arith.divf %412, %413 : vector<8x32xf32>
    %415 = vector.extract_strided_slice %402 {offsets = [0, 64], sizes = [8, 32], strides = [1, 1]} : vector<8x128xf32> to vector<8x32xf32>
    %416 = math.tanh %415 : vector<8x32xf32>
    %417 = vector.extract_strided_slice %402 {offsets = [0, 96], sizes = [8, 32], strides = [1, 1]} : vector<8x128xf32> to vector<8x32xf32>
    %418 = arith.negf %417 : vector<8x32xf32>
    %419 = math.exp %418 : vector<8x32xf32>
    %cst_179 = arith.constant 1.000000e+00 : f32
    %420 = vector.broadcast %cst_179 : f32 to vector<8x32xf32>
    %421 = arith.addf %420, %419 : vector<8x32xf32>
    %422 = arith.divf %420, %421 : vector<8x32xf32>
    %423 = arith.mulf %414, %397 : vector<8x32xf32>
    %424 = arith.mulf %408, %416 : vector<8x32xf32>
    %425 = arith.addf %423, %424 : vector<8x32xf32>
    %426 = math.tanh %425 : vector<8x32xf32>
    %427 = arith.mulf %422, %426 : vector<8x32xf32>
    %c0_180 = arith.constant 0 : index
    %c0_181 = arith.constant 0 : index
    %428 = vector.load %arg11[%c0_180, %c0_181] : memref<8x32xf32, #tpu.memory_space<vmem>>, vector<8x32xf32>
    tpu.vector_store %arg11[%c0_180, %c0_181], %427 {strides = array<i32>} : memref<8x32xf32, #tpu.memory_space<vmem>>, vector<8x32xf32>,
    %c0_182 = arith.constant 0 : index
    %c0_183 = arith.constant 0 : index
    %429 = vector.load %arg12[%c0_182, %c0_183] : memref<8x32xf32, #tpu.memory_space<vmem>>, vector<8x32xf32>
    tpu.vector_store %arg12[%c0_182, %c0_183], %425 {strides = array<i32>} : memref<8x32xf32, #tpu.memory_space<vmem>>, vector<8x32xf32>,
    %430 = arith.index_cast %393 : i32 to index
    %c0_184 = arith.constant 0 : index
    %431 = vector.load %arg13[%430, %c0_184] : memref<64x32xf32, #tpu.memory_space<vmem>>, vector<8x32xf32>
    tpu.vector_store %arg13[%430, %c0_184], %427 {strides = array<i32>} : memref<64x32xf32, #tpu.memory_space<vmem>>, vector<8x32xf32>,
    %c2_i32_185 = arith.constant 2 : i32
    %c8_i32_186 = arith.constant 8 : i32
    %432 = arith.muli %c2_i32_185, %c8_i32_186 : i32
    %433 = tpu.assume_multiple %432, 8 : i32
    %434 = arith.index_cast %433 : i32 to index
    %c0_187 = arith.constant 0 : index
    %435 = vector.load %arg1[%434, %c0_187] : memref<64x32xf32, #tpu.memory_space<vmem>>, vector<8x32xf32>
    %c0_188 = arith.constant 0 : index
    %c0_189 = arith.constant 0 : index
    %436 = vector.load %arg11[%c0_188, %c0_189] : memref<8x32xf32, #tpu.memory_space<vmem>>, vector<8x32xf32>
    %c0_190 = arith.constant 0 : index
    %c0_191 = arith.constant 0 : index
    %437 = vector.load %arg12[%c0_190, %c0_191] : memref<8x32xf32, #tpu.memory_space<vmem>>, vector<8x32xf32>
    %cst_192 = arith.constant dense<0.000000e+00> : vector<8x128xf32>
    %438 = tpu.matmul %435, %7, %cst_192 {dimension_numbers = #tpu.dot_dimension_numbers<[1], [0], [0], [1], [0, 0, 1, 1], [], []>} : vector<8x32xf32>, vector<32x128xf32>, vector<8x128xf32> -> vector<8x128xf32>
    %cst_193 = arith.constant dense<0.000000e+00> : vector<8x128xf32>
    %439 = tpu.matmul %436, %8, %cst_193 {dimension_numbers = #tpu.dot_dimension_numbers<[1], [0], [0], [1], [0, 0, 1, 1], [], []>} : vector<8x32xf32>, vector<32x128xf32>, vector<8x128xf32> -> vector<8x128xf32>
    %440 = arith.addf %438, %439 : vector<8x128xf32>
    %441 = vector.broadcast %9 : vector<1x128xf32> to vector<8x128xf32>
    %442 = arith.addf %440, %441 : vector<8x128xf32>
    %443 = vector.extract_strided_slice %442 {offsets = [0, 0], sizes = [8, 32], strides = [1, 1]} : vector<8x128xf32> to vector<8x32xf32>
    %444 = arith.negf %443 : vector<8x32xf32>
    %445 = math.exp %444 : vector<8x32xf32>
    %cst_194 = arith.constant 1.000000e+00 : f32
    %446 = vector.broadcast %cst_194 : f32 to vector<8x32xf32>
    %447 = arith.addf %446, %445 : vector<8x32xf32>
    %448 = arith.divf %446, %447 : vector<8x32xf32>
    %449 = vector.extract_strided_slice %442 {offsets = [0, 32], sizes = [8, 32], strides = [1, 1]} : vector<8x128xf32> to vector<8x32xf32>
    %450 = arith.negf %449 : vector<8x32xf32>
    %451 = math.exp %450 : vector<8x32xf32>
    %cst_195 = arith.constant 1.000000e+00 : f32
    %452 = vector.broadcast %cst_195 : f32 to vector<8x32xf32>
    %453 = arith.addf %452, %451 : vector<8x32xf32>
    %454 = arith.divf %452, %453 : vector<8x32xf32>
    %455 = vector.extract_strided_slice %442 {offsets = [0, 64], sizes = [8, 32], strides = [1, 1]} : vector<8x128xf32> to vector<8x32xf32>
    %456 = math.tanh %455 : vector<8x32xf32>
    %457 = vector.extract_strided_slice %442 {offsets = [0, 96], sizes = [8, 32], strides = [1, 1]} : vector<8x128xf32> to vector<8x32xf32>
    %458 = arith.negf %457 : vector<8x32xf32>
    %459 = math.exp %458 : vector<8x32xf32>
    %cst_196 = arith.constant 1.000000e+00 : f32
    %460 = vector.broadcast %cst_196 : f32 to vector<8x32xf32>
    %461 = arith.addf %460, %459 : vector<8x32xf32>
    %462 = arith.divf %460, %461 : vector<8x32xf32>
    %463 = arith.mulf %454, %437 : vector<8x32xf32>
    %464 = arith.mulf %448, %456 : vector<8x32xf32>
    %465 = arith.addf %463, %464 : vector<8x32xf32>
    %466 = math.tanh %465 : vector<8x32xf32>
    %467 = arith.mulf %462, %466 : vector<8x32xf32>
    %c0_197 = arith.constant 0 : index
    %c0_198 = arith.constant 0 : index
    %468 = vector.load %arg11[%c0_197, %c0_198] : memref<8x32xf32, #tpu.memory_space<vmem>>, vector<8x32xf32>
    tpu.vector_store %arg11[%c0_197, %c0_198], %467 {strides = array<i32>} : memref<8x32xf32, #tpu.memory_space<vmem>>, vector<8x32xf32>,
    %c0_199 = arith.constant 0 : index
    %c0_200 = arith.constant 0 : index
    %469 = vector.load %arg12[%c0_199, %c0_200] : memref<8x32xf32, #tpu.memory_space<vmem>>, vector<8x32xf32>
    tpu.vector_store %arg12[%c0_199, %c0_200], %465 {strides = array<i32>} : memref<8x32xf32, #tpu.memory_space<vmem>>, vector<8x32xf32>,
    %470 = arith.index_cast %433 : i32 to index
    %c0_201 = arith.constant 0 : index
    %471 = vector.load %arg13[%470, %c0_201] : memref<64x32xf32, #tpu.memory_space<vmem>>, vector<8x32xf32>
    tpu.vector_store %arg13[%470, %c0_201], %467 {strides = array<i32>} : memref<64x32xf32, #tpu.memory_space<vmem>>, vector<8x32xf32>,
    %c3_i32_202 = arith.constant 3 : i32
    %c8_i32_203 = arith.constant 8 : i32
    %472 = arith.muli %c3_i32_202, %c8_i32_203 : i32
    %473 = tpu.assume_multiple %472, 8 : i32
    %474 = arith.index_cast %473 : i32 to index
    %c0_204 = arith.constant 0 : index
    %475 = vector.load %arg1[%474, %c0_204] : memref<64x32xf32, #tpu.memory_space<vmem>>, vector<8x32xf32>
    %c0_205 = arith.constant 0 : index
    %c0_206 = arith.constant 0 : index
    %476 = vector.load %arg11[%c0_205, %c0_206] : memref<8x32xf32, #tpu.memory_space<vmem>>, vector<8x32xf32>
    %c0_207 = arith.constant 0 : index
    %c0_208 = arith.constant 0 : index
    %477 = vector.load %arg12[%c0_207, %c0_208] : memref<8x32xf32, #tpu.memory_space<vmem>>, vector<8x32xf32>
    %cst_209 = arith.constant dense<0.000000e+00> : vector<8x128xf32>
    %478 = tpu.matmul %475, %7, %cst_209 {dimension_numbers = #tpu.dot_dimension_numbers<[1], [0], [0], [1], [0, 0, 1, 1], [], []>} : vector<8x32xf32>, vector<32x128xf32>, vector<8x128xf32> -> vector<8x128xf32>
    %cst_210 = arith.constant dense<0.000000e+00> : vector<8x128xf32>
    %479 = tpu.matmul %476, %8, %cst_210 {dimension_numbers = #tpu.dot_dimension_numbers<[1], [0], [0], [1], [0, 0, 1, 1], [], []>} : vector<8x32xf32>, vector<32x128xf32>, vector<8x128xf32> -> vector<8x128xf32>
    %480 = arith.addf %478, %479 : vector<8x128xf32>
    %481 = vector.broadcast %9 : vector<1x128xf32> to vector<8x128xf32>
    %482 = arith.addf %480, %481 : vector<8x128xf32>
    %483 = vector.extract_strided_slice %482 {offsets = [0, 0], sizes = [8, 32], strides = [1, 1]} : vector<8x128xf32> to vector<8x32xf32>
    %484 = arith.negf %483 : vector<8x32xf32>
    %485 = math.exp %484 : vector<8x32xf32>
    %cst_211 = arith.constant 1.000000e+00 : f32
    %486 = vector.broadcast %cst_211 : f32 to vector<8x32xf32>
    %487 = arith.addf %486, %485 : vector<8x32xf32>
    %488 = arith.divf %486, %487 : vector<8x32xf32>
    %489 = vector.extract_strided_slice %482 {offsets = [0, 32], sizes = [8, 32], strides = [1, 1]} : vector<8x128xf32> to vector<8x32xf32>
    %490 = arith.negf %489 : vector<8x32xf32>
    %491 = math.exp %490 : vector<8x32xf32>
    %cst_212 = arith.constant 1.000000e+00 : f32
    %492 = vector.broadcast %cst_212 : f32 to vector<8x32xf32>
    %493 = arith.addf %492, %491 : vector<8x32xf32>
    %494 = arith.divf %492, %493 : vector<8x32xf32>
    %495 = vector.extract_strided_slice %482 {offsets = [0, 64], sizes = [8, 32], strides = [1, 1]} : vector<8x128xf32> to vector<8x32xf32>
    %496 = math.tanh %495 : vector<8x32xf32>
    %497 = vector.extract_strided_slice %482 {offsets = [0, 96], sizes = [8, 32], strides = [1, 1]} : vector<8x128xf32> to vector<8x32xf32>
    %498 = arith.negf %497 : vector<8x32xf32>
    %499 = math.exp %498 : vector<8x32xf32>
    %cst_213 = arith.constant 1.000000e+00 : f32
    %500 = vector.broadcast %cst_213 : f32 to vector<8x32xf32>
    %501 = arith.addf %500, %499 : vector<8x32xf32>
    %502 = arith.divf %500, %501 : vector<8x32xf32>
    %503 = arith.mulf %494, %477 : vector<8x32xf32>
    %504 = arith.mulf %488, %496 : vector<8x32xf32>
    %505 = arith.addf %503, %504 : vector<8x32xf32>
    %506 = math.tanh %505 : vector<8x32xf32>
    %507 = arith.mulf %502, %506 : vector<8x32xf32>
    %c0_214 = arith.constant 0 : index
    %c0_215 = arith.constant 0 : index
    %508 = vector.load %arg11[%c0_214, %c0_215] : memref<8x32xf32, #tpu.memory_space<vmem>>, vector<8x32xf32>
    tpu.vector_store %arg11[%c0_214, %c0_215], %507 {strides = array<i32>} : memref<8x32xf32, #tpu.memory_space<vmem>>, vector<8x32xf32>,
    %c0_216 = arith.constant 0 : index
    %c0_217 = arith.constant 0 : index
    %509 = vector.load %arg12[%c0_216, %c0_217] : memref<8x32xf32, #tpu.memory_space<vmem>>, vector<8x32xf32>
    tpu.vector_store %arg12[%c0_216, %c0_217], %505 {strides = array<i32>} : memref<8x32xf32, #tpu.memory_space<vmem>>, vector<8x32xf32>,
    %510 = arith.index_cast %473 : i32 to index
    %c0_218 = arith.constant 0 : index
    %511 = vector.load %arg13[%510, %c0_218] : memref<64x32xf32, #tpu.memory_space<vmem>>, vector<8x32xf32>
    tpu.vector_store %arg13[%510, %c0_218], %507 {strides = array<i32>} : memref<64x32xf32, #tpu.memory_space<vmem>>, vector<8x32xf32>,
    %c4_i32_219 = arith.constant 4 : i32
    %c8_i32_220 = arith.constant 8 : i32
    %512 = arith.muli %c4_i32_219, %c8_i32_220 : i32
    %513 = tpu.assume_multiple %512, 8 : i32
    %514 = arith.index_cast %513 : i32 to index
    %c0_221 = arith.constant 0 : index
    %515 = vector.load %arg1[%514, %c0_221] : memref<64x32xf32, #tpu.memory_space<vmem>>, vector<8x32xf32>
    %c0_222 = arith.constant 0 : index
    %c0_223 = arith.constant 0 : index
    %516 = vector.load %arg11[%c0_222, %c0_223] : memref<8x32xf32, #tpu.memory_space<vmem>>, vector<8x32xf32>
    %c0_224 = arith.constant 0 : index
    %c0_225 = arith.constant 0 : index
    %517 = vector.load %arg12[%c0_224, %c0_225] : memref<8x32xf32, #tpu.memory_space<vmem>>, vector<8x32xf32>
    %cst_226 = arith.constant dense<0.000000e+00> : vector<8x128xf32>
    %518 = tpu.matmul %515, %7, %cst_226 {dimension_numbers = #tpu.dot_dimension_numbers<[1], [0], [0], [1], [0, 0, 1, 1], [], []>} : vector<8x32xf32>, vector<32x128xf32>, vector<8x128xf32> -> vector<8x128xf32>
    %cst_227 = arith.constant dense<0.000000e+00> : vector<8x128xf32>
    %519 = tpu.matmul %516, %8, %cst_227 {dimension_numbers = #tpu.dot_dimension_numbers<[1], [0], [0], [1], [0, 0, 1, 1], [], []>} : vector<8x32xf32>, vector<32x128xf32>, vector<8x128xf32> -> vector<8x128xf32>
    %520 = arith.addf %518, %519 : vector<8x128xf32>
    %521 = vector.broadcast %9 : vector<1x128xf32> to vector<8x128xf32>
    %522 = arith.addf %520, %521 : vector<8x128xf32>
    %523 = vector.extract_strided_slice %522 {offsets = [0, 0], sizes = [8, 32], strides = [1, 1]} : vector<8x128xf32> to vector<8x32xf32>
    %524 = arith.negf %523 : vector<8x32xf32>
    %525 = math.exp %524 : vector<8x32xf32>
    %cst_228 = arith.constant 1.000000e+00 : f32
    %526 = vector.broadcast %cst_228 : f32 to vector<8x32xf32>
    %527 = arith.addf %526, %525 : vector<8x32xf32>
    %528 = arith.divf %526, %527 : vector<8x32xf32>
    %529 = vector.extract_strided_slice %522 {offsets = [0, 32], sizes = [8, 32], strides = [1, 1]} : vector<8x128xf32> to vector<8x32xf32>
    %530 = arith.negf %529 : vector<8x32xf32>
    %531 = math.exp %530 : vector<8x32xf32>
    %cst_229 = arith.constant 1.000000e+00 : f32
    %532 = vector.broadcast %cst_229 : f32 to vector<8x32xf32>
    %533 = arith.addf %532, %531 : vector<8x32xf32>
    %534 = arith.divf %532, %533 : vector<8x32xf32>
    %535 = vector.extract_strided_slice %522 {offsets = [0, 64], sizes = [8, 32], strides = [1, 1]} : vector<8x128xf32> to vector<8x32xf32>
    %536 = math.tanh %535 : vector<8x32xf32>
    %537 = vector.extract_strided_slice %522 {offsets = [0, 96], sizes = [8, 32], strides = [1, 1]} : vector<8x128xf32> to vector<8x32xf32>
    %538 = arith.negf %537 : vector<8x32xf32>
    %539 = math.exp %538 : vector<8x32xf32>
    %cst_230 = arith.constant 1.000000e+00 : f32
    %540 = vector.broadcast %cst_230 : f32 to vector<8x32xf32>
    %541 = arith.addf %540, %539 : vector<8x32xf32>
    %542 = arith.divf %540, %541 : vector<8x32xf32>
    %543 = arith.mulf %534, %517 : vector<8x32xf32>
    %544 = arith.mulf %528, %536 : vector<8x32xf32>
    %545 = arith.addf %543, %544 : vector<8x32xf32>
    %546 = math.tanh %545 : vector<8x32xf32>
    %547 = arith.mulf %542, %546 : vector<8x32xf32>
    %c0_231 = arith.constant 0 : index
    %c0_232 = arith.constant 0 : index
    %548 = vector.load %arg11[%c0_231, %c0_232] : memref<8x32xf32, #tpu.memory_space<vmem>>, vector<8x32xf32>
    tpu.vector_store %arg11[%c0_231, %c0_232], %547 {strides = array<i32>} : memref<8x32xf32, #tpu.memory_space<vmem>>, vector<8x32xf32>,
    %c0_233 = arith.constant 0 : index
    %c0_234 = arith.constant 0 : index
    %549 = vector.load %arg12[%c0_233, %c0_234] : memref<8x32xf32, #tpu.memory_space<vmem>>, vector<8x32xf32>
    tpu.vector_store %arg12[%c0_233, %c0_234], %545 {strides = array<i32>} : memref<8x32xf32, #tpu.memory_space<vmem>>, vector<8x32xf32>,
    %550 = arith.index_cast %513 : i32 to index
    %c0_235 = arith.constant 0 : index
    %551 = vector.load %arg13[%550, %c0_235] : memref<64x32xf32, #tpu.memory_space<vmem>>, vector<8x32xf32>
    tpu.vector_store %arg13[%550, %c0_235], %547 {strides = array<i32>} : memref<64x32xf32, #tpu.memory_space<vmem>>, vector<8x32xf32>,
    %c5_i32_236 = arith.constant 5 : i32
    %c8_i32_237 = arith.constant 8 : i32
    %552 = arith.muli %c5_i32_236, %c8_i32_237 : i32
    %553 = tpu.assume_multiple %552, 8 : i32
    %554 = arith.index_cast %553 : i32 to index
    %c0_238 = arith.constant 0 : index
    %555 = vector.load %arg1[%554, %c0_238] : memref<64x32xf32, #tpu.memory_space<vmem>>, vector<8x32xf32>
    %c0_239 = arith.constant 0 : index
    %c0_240 = arith.constant 0 : index
    %556 = vector.load %arg11[%c0_239, %c0_240] : memref<8x32xf32, #tpu.memory_space<vmem>>, vector<8x32xf32>
    %c0_241 = arith.constant 0 : index
    %c0_242 = arith.constant 0 : index
    %557 = vector.load %arg12[%c0_241, %c0_242] : memref<8x32xf32, #tpu.memory_space<vmem>>, vector<8x32xf32>
    %cst_243 = arith.constant dense<0.000000e+00> : vector<8x128xf32>
    %558 = tpu.matmul %555, %7, %cst_243 {dimension_numbers = #tpu.dot_dimension_numbers<[1], [0], [0], [1], [0, 0, 1, 1], [], []>} : vector<8x32xf32>, vector<32x128xf32>, vector<8x128xf32> -> vector<8x128xf32>
    %cst_244 = arith.constant dense<0.000000e+00> : vector<8x128xf32>
    %559 = tpu.matmul %556, %8, %cst_244 {dimension_numbers = #tpu.dot_dimension_numbers<[1], [0], [0], [1], [0, 0, 1, 1], [], []>} : vector<8x32xf32>, vector<32x128xf32>, vector<8x128xf32> -> vector<8x128xf32>
    %560 = arith.addf %558, %559 : vector<8x128xf32>
    %561 = vector.broadcast %9 : vector<1x128xf32> to vector<8x128xf32>
    %562 = arith.addf %560, %561 : vector<8x128xf32>
    %563 = vector.extract_strided_slice %562 {offsets = [0, 0], sizes = [8, 32], strides = [1, 1]} : vector<8x128xf32> to vector<8x32xf32>
    %564 = arith.negf %563 : vector<8x32xf32>
    %565 = math.exp %564 : vector<8x32xf32>
    %cst_245 = arith.constant 1.000000e+00 : f32
    %566 = vector.broadcast %cst_245 : f32 to vector<8x32xf32>
    %567 = arith.addf %566, %565 : vector<8x32xf32>
    %568 = arith.divf %566, %567 : vector<8x32xf32>
    %569 = vector.extract_strided_slice %562 {offsets = [0, 32], sizes = [8, 32], strides = [1, 1]} : vector<8x128xf32> to vector<8x32xf32>
    %570 = arith.negf %569 : vector<8x32xf32>
    %571 = math.exp %570 : vector<8x32xf32>
    %cst_246 = arith.constant 1.000000e+00 : f32
    %572 = vector.broadcast %cst_246 : f32 to vector<8x32xf32>
    %573 = arith.addf %572, %571 : vector<8x32xf32>
    %574 = arith.divf %572, %573 : vector<8x32xf32>
    %575 = vector.extract_strided_slice %562 {offsets = [0, 64], sizes = [8, 32], strides = [1, 1]} : vector<8x128xf32> to vector<8x32xf32>
    %576 = math.tanh %575 : vector<8x32xf32>
    %577 = vector.extract_strided_slice %562 {offsets = [0, 96], sizes = [8, 32], strides = [1, 1]} : vector<8x128xf32> to vector<8x32xf32>
    %578 = arith.negf %577 : vector<8x32xf32>
    %579 = math.exp %578 : vector<8x32xf32>
    %cst_247 = arith.constant 1.000000e+00 : f32
    %580 = vector.broadcast %cst_247 : f32 to vector<8x32xf32>
    %581 = arith.addf %580, %579 : vector<8x32xf32>
    %582 = arith.divf %580, %581 : vector<8x32xf32>
    %583 = arith.mulf %574, %557 : vector<8x32xf32>
    %584 = arith.mulf %568, %576 : vector<8x32xf32>
    %585 = arith.addf %583, %584 : vector<8x32xf32>
    %586 = math.tanh %585 : vector<8x32xf32>
    %587 = arith.mulf %582, %586 : vector<8x32xf32>
    %c0_248 = arith.constant 0 : index
    %c0_249 = arith.constant 0 : index
    %588 = vector.load %arg11[%c0_248, %c0_249] : memref<8x32xf32, #tpu.memory_space<vmem>>, vector<8x32xf32>
    tpu.vector_store %arg11[%c0_248, %c0_249], %587 {strides = array<i32>} : memref<8x32xf32, #tpu.memory_space<vmem>>, vector<8x32xf32>,
    %c0_250 = arith.constant 0 : index
    %c0_251 = arith.constant 0 : index
    %589 = vector.load %arg12[%c0_250, %c0_251] : memref<8x32xf32, #tpu.memory_space<vmem>>, vector<8x32xf32>
    tpu.vector_store %arg12[%c0_250, %c0_251], %585 {strides = array<i32>} : memref<8x32xf32, #tpu.memory_space<vmem>>, vector<8x32xf32>,
    %590 = arith.index_cast %553 : i32 to index
    %c0_252 = arith.constant 0 : index
    %591 = vector.load %arg13[%590, %c0_252] : memref<64x32xf32, #tpu.memory_space<vmem>>, vector<8x32xf32>
    tpu.vector_store %arg13[%590, %c0_252], %587 {strides = array<i32>} : memref<64x32xf32, #tpu.memory_space<vmem>>, vector<8x32xf32>,
    %c6_i32_253 = arith.constant 6 : i32
    %c8_i32_254 = arith.constant 8 : i32
    %592 = arith.muli %c6_i32_253, %c8_i32_254 : i32
    %593 = tpu.assume_multiple %592, 8 : i32
    %594 = arith.index_cast %593 : i32 to index
    %c0_255 = arith.constant 0 : index
    %595 = vector.load %arg1[%594, %c0_255] : memref<64x32xf32, #tpu.memory_space<vmem>>, vector<8x32xf32>
    %c0_256 = arith.constant 0 : index
    %c0_257 = arith.constant 0 : index
    %596 = vector.load %arg11[%c0_256, %c0_257] : memref<8x32xf32, #tpu.memory_space<vmem>>, vector<8x32xf32>
    %c0_258 = arith.constant 0 : index
    %c0_259 = arith.constant 0 : index
    %597 = vector.load %arg12[%c0_258, %c0_259] : memref<8x32xf32, #tpu.memory_space<vmem>>, vector<8x32xf32>
    %cst_260 = arith.constant dense<0.000000e+00> : vector<8x128xf32>
    %598 = tpu.matmul %595, %7, %cst_260 {dimension_numbers = #tpu.dot_dimension_numbers<[1], [0], [0], [1], [0, 0, 1, 1], [], []>} : vector<8x32xf32>, vector<32x128xf32>, vector<8x128xf32> -> vector<8x128xf32>
    %cst_261 = arith.constant dense<0.000000e+00> : vector<8x128xf32>
    %599 = tpu.matmul %596, %8, %cst_261 {dimension_numbers = #tpu.dot_dimension_numbers<[1], [0], [0], [1], [0, 0, 1, 1], [], []>} : vector<8x32xf32>, vector<32x128xf32>, vector<8x128xf32> -> vector<8x128xf32>
    %600 = arith.addf %598, %599 : vector<8x128xf32>
    %601 = vector.broadcast %9 : vector<1x128xf32> to vector<8x128xf32>
    %602 = arith.addf %600, %601 : vector<8x128xf32>
    %603 = vector.extract_strided_slice %602 {offsets = [0, 0], sizes = [8, 32], strides = [1, 1]} : vector<8x128xf32> to vector<8x32xf32>
    %604 = arith.negf %603 : vector<8x32xf32>
    %605 = math.exp %604 : vector<8x32xf32>
    %cst_262 = arith.constant 1.000000e+00 : f32
    %606 = vector.broadcast %cst_262 : f32 to vector<8x32xf32>
    %607 = arith.addf %606, %605 : vector<8x32xf32>
    %608 = arith.divf %606, %607 : vector<8x32xf32>
    %609 = vector.extract_strided_slice %602 {offsets = [0, 32], sizes = [8, 32], strides = [1, 1]} : vector<8x128xf32> to vector<8x32xf32>
    %610 = arith.negf %609 : vector<8x32xf32>
    %611 = math.exp %610 : vector<8x32xf32>
    %cst_263 = arith.constant 1.000000e+00 : f32
    %612 = vector.broadcast %cst_263 : f32 to vector<8x32xf32>
    %613 = arith.addf %612, %611 : vector<8x32xf32>
    %614 = arith.divf %612, %613 : vector<8x32xf32>
    %615 = vector.extract_strided_slice %602 {offsets = [0, 64], sizes = [8, 32], strides = [1, 1]} : vector<8x128xf32> to vector<8x32xf32>
    %616 = math.tanh %615 : vector<8x32xf32>
    %617 = vector.extract_strided_slice %602 {offsets = [0, 96], sizes = [8, 32], strides = [1, 1]} : vector<8x128xf32> to vector<8x32xf32>
    %618 = arith.negf %617 : vector<8x32xf32>
    %619 = math.exp %618 : vector<8x32xf32>
    %cst_264 = arith.constant 1.000000e+00 : f32
    %620 = vector.broadcast %cst_264 : f32 to vector<8x32xf32>
    %621 = arith.addf %620, %619 : vector<8x32xf32>
    %622 = arith.divf %620, %621 : vector<8x32xf32>
    %623 = arith.mulf %614, %597 : vector<8x32xf32>
    %624 = arith.mulf %608, %616 : vector<8x32xf32>
    %625 = arith.addf %623, %624 : vector<8x32xf32>
    %626 = math.tanh %625 : vector<8x32xf32>
    %627 = arith.mulf %622, %626 : vector<8x32xf32>
    %c0_265 = arith.constant 0 : index
    %c0_266 = arith.constant 0 : index
    %628 = vector.load %arg11[%c0_265, %c0_266] : memref<8x32xf32, #tpu.memory_space<vmem>>, vector<8x32xf32>
    tpu.vector_store %arg11[%c0_265, %c0_266], %627 {strides = array<i32>} : memref<8x32xf32, #tpu.memory_space<vmem>>, vector<8x32xf32>,
    %c0_267 = arith.constant 0 : index
    %c0_268 = arith.constant 0 : index
    %629 = vector.load %arg12[%c0_267, %c0_268] : memref<8x32xf32, #tpu.memory_space<vmem>>, vector<8x32xf32>
    tpu.vector_store %arg12[%c0_267, %c0_268], %625 {strides = array<i32>} : memref<8x32xf32, #tpu.memory_space<vmem>>, vector<8x32xf32>,
    %630 = arith.index_cast %593 : i32 to index
    %c0_269 = arith.constant 0 : index
    %631 = vector.load %arg13[%630, %c0_269] : memref<64x32xf32, #tpu.memory_space<vmem>>, vector<8x32xf32>
    tpu.vector_store %arg13[%630, %c0_269], %627 {strides = array<i32>} : memref<64x32xf32, #tpu.memory_space<vmem>>, vector<8x32xf32>,
    %c7_i32_270 = arith.constant 7 : i32
    %c8_i32_271 = arith.constant 8 : i32
    %632 = arith.muli %c7_i32_270, %c8_i32_271 : i32
    %633 = tpu.assume_multiple %632, 8 : i32
    %634 = arith.index_cast %633 : i32 to index
    %c0_272 = arith.constant 0 : index
    %635 = vector.load %arg1[%634, %c0_272] : memref<64x32xf32, #tpu.memory_space<vmem>>, vector<8x32xf32>
    %c0_273 = arith.constant 0 : index
    %c0_274 = arith.constant 0 : index
    %636 = vector.load %arg11[%c0_273, %c0_274] : memref<8x32xf32, #tpu.memory_space<vmem>>, vector<8x32xf32>
    %c0_275 = arith.constant 0 : index
    %c0_276 = arith.constant 0 : index
    %637 = vector.load %arg12[%c0_275, %c0_276] : memref<8x32xf32, #tpu.memory_space<vmem>>, vector<8x32xf32>
    %cst_277 = arith.constant dense<0.000000e+00> : vector<8x128xf32>
    %638 = tpu.matmul %635, %7, %cst_277 {dimension_numbers = #tpu.dot_dimension_numbers<[1], [0], [0], [1], [0, 0, 1, 1], [], []>} : vector<8x32xf32>, vector<32x128xf32>, vector<8x128xf32> -> vector<8x128xf32>
    %cst_278 = arith.constant dense<0.000000e+00> : vector<8x128xf32>
    %639 = tpu.matmul %636, %8, %cst_278 {dimension_numbers = #tpu.dot_dimension_numbers<[1], [0], [0], [1], [0, 0, 1, 1], [], []>} : vector<8x32xf32>, vector<32x128xf32>, vector<8x128xf32> -> vector<8x128xf32>
    %640 = arith.addf %638, %639 : vector<8x128xf32>
    %641 = vector.broadcast %9 : vector<1x128xf32> to vector<8x128xf32>
    %642 = arith.addf %640, %641 : vector<8x128xf32>
    %643 = vector.extract_strided_slice %642 {offsets = [0, 0], sizes = [8, 32], strides = [1, 1]} : vector<8x128xf32> to vector<8x32xf32>
    %644 = arith.negf %643 : vector<8x32xf32>
    %645 = math.exp %644 : vector<8x32xf32>
    %cst_279 = arith.constant 1.000000e+00 : f32
    %646 = vector.broadcast %cst_279 : f32 to vector<8x32xf32>
    %647 = arith.addf %646, %645 : vector<8x32xf32>
    %648 = arith.divf %646, %647 : vector<8x32xf32>
    %649 = vector.extract_strided_slice %642 {offsets = [0, 32], sizes = [8, 32], strides = [1, 1]} : vector<8x128xf32> to vector<8x32xf32>
    %650 = arith.negf %649 : vector<8x32xf32>
    %651 = math.exp %650 : vector<8x32xf32>
    %cst_280 = arith.constant 1.000000e+00 : f32
    %652 = vector.broadcast %cst_280 : f32 to vector<8x32xf32>
    %653 = arith.addf %652, %651 : vector<8x32xf32>
    %654 = arith.divf %652, %653 : vector<8x32xf32>
    %655 = vector.extract_strided_slice %642 {offsets = [0, 64], sizes = [8, 32], strides = [1, 1]} : vector<8x128xf32> to vector<8x32xf32>
    %656 = math.tanh %655 : vector<8x32xf32>
    %657 = vector.extract_strided_slice %642 {offsets = [0, 96], sizes = [8, 32], strides = [1, 1]} : vector<8x128xf32> to vector<8x32xf32>
    %658 = arith.negf %657 : vector<8x32xf32>
    %659 = math.exp %658 : vector<8x32xf32>
    %cst_281 = arith.constant 1.000000e+00 : f32
    %660 = vector.broadcast %cst_281 : f32 to vector<8x32xf32>
    %661 = arith.addf %660, %659 : vector<8x32xf32>
    %662 = arith.divf %660, %661 : vector<8x32xf32>
    %663 = arith.mulf %654, %637 : vector<8x32xf32>
    %664 = arith.mulf %648, %656 : vector<8x32xf32>
    %665 = arith.addf %663, %664 : vector<8x32xf32>
    %666 = math.tanh %665 : vector<8x32xf32>
    %667 = arith.mulf %662, %666 : vector<8x32xf32>
    %c0_282 = arith.constant 0 : index
    %c0_283 = arith.constant 0 : index
    %668 = vector.load %arg11[%c0_282, %c0_283] : memref<8x32xf32, #tpu.memory_space<vmem>>, vector<8x32xf32>
    tpu.vector_store %arg11[%c0_282, %c0_283], %667 {strides = array<i32>} : memref<8x32xf32, #tpu.memory_space<vmem>>, vector<8x32xf32>,
    %c0_284 = arith.constant 0 : index
    %c0_285 = arith.constant 0 : index
    %669 = vector.load %arg12[%c0_284, %c0_285] : memref<8x32xf32, #tpu.memory_space<vmem>>, vector<8x32xf32>
    tpu.vector_store %arg12[%c0_284, %c0_285], %665 {strides = array<i32>} : memref<8x32xf32, #tpu.memory_space<vmem>>, vector<8x32xf32>,
    %670 = arith.index_cast %633 : i32 to index
    %c0_286 = arith.constant 0 : index
    %671 = vector.load %arg13[%670, %c0_286] : memref<64x32xf32, #tpu.memory_space<vmem>>, vector<8x32xf32>
    tpu.vector_store %arg13[%670, %c0_286], %667 {strides = array<i32>} : memref<64x32xf32, #tpu.memory_space<vmem>>, vector<8x32xf32>,
    %c8_i32_287 = arith.constant 8 : i32
    %c0_288 = arith.constant 0 : index
    %c0_289 = arith.constant 0 : index
    %672 = vector.load %arg13[%c0_288, %c0_289] : memref<64x32xf32, #tpu.memory_space<vmem>>, vector<64x32xf32>
    %c0_290 = arith.constant 0 : index
    %c0_291 = arith.constant 0 : index
    %673 = vector.load %arg8[%c0_290, %c0_291] : memref<32x128xf32, #tpu.memory_space<vmem>>, vector<32x128xf32>
    %cst_292 = arith.constant dense<0.000000e+00> : vector<64x128xf32>
    %674 = tpu.matmul %672, %673, %cst_292 {dimension_numbers = #tpu.dot_dimension_numbers<[1], [0], [0], [1], [0, 0, 1, 1], [], []>} : vector<64x32xf32>, vector<32x128xf32>, vector<64x128xf32> -> vector<64x128xf32>
    %c0_293 = arith.constant 0 : index
    %c0_294 = arith.constant 0 : index
    %675 = vector.load %arg9[%c0_293, %c0_294] : memref<1x128xf32, #tpu.memory_space<vmem>>, vector<1x128xf32>
    %676 = vector.broadcast %675 : vector<1x128xf32> to vector<64x128xf32>
    %677 = arith.addf %674, %676 : vector<64x128xf32>
    %c0_295 = arith.constant 0 : index
    %c0_296 = arith.constant 0 : index
    %678 = vector.load %arg10[%c0_295, %c0_296] : memref<64x128xf32, #tpu.memory_space<vmem>>, vector<64x128xf32>
    tpu.vector_store %arg10[%c0_295, %c0_296], %677 {strides = array<i32>} : memref<64x128xf32, #tpu.memory_space<vmem>>, vector<64x128xf32>,
    return
  }
}

</mosaic_0001>

<llo_original>
// kernel: seq2seq_forward.1
$region0: #{seq2seq_forward.1}
  #allocation0 [shape = 'u32[]', space=smem, size = 0x4, offset = 0x4, fixed_abs, tag = 'smem constant byte address 0x4 - core index']
  #allocation1 [shape = 'u32[72,128]{1,0:T(1,128)}', space=vmem, size = 0x9000, scoped, tag = 'internal scratch']
  #allocation2 [shape = 'f32[8,32]{1,0:T(8,128)}', space=vmem, size = 0x1000, scoped, tag = 'scratch operand']
  #allocation3 [shape = 'f32[8,32]{1,0:T(8,128)}', space=vmem, size = 0x1000, scoped, tag = 'scratch operand']
  #allocation4 [shape = 'f32[64,32]{1,0:T(8,128)}', space=vmem, size = 0x8000, scoped, tag = 'scratch operand']
  %s0 = inlined_call_operand.vmem [shape: f32[72,32], index: 0, kind: input, shape index: {}]
  %s1 = inlined_call_operand.vmem [shape: f32[64,32], index: 1, kind: input, shape index: {}]
  %s2 = inlined_call_operand.vmem [shape: f32[32,128], index: 2, kind: input, shape index: {}]
  %s3 = inlined_call_operand.vmem [shape: f32[32,128], index: 3, kind: input, shape index: {}]
  %s4 = inlined_call_operand.vmem [shape: f32[1,128], index: 4, kind: input, shape index: {}]
  %s5 = inlined_call_operand.vmem [shape: f32[32,128], index: 5, kind: input, shape index: {}]
  %s6 = inlined_call_operand.vmem [shape: f32[32,128], index: 6, kind: input, shape index: {}]
  %s7 = inlined_call_operand.vmem [shape: f32[1,128], index: 7, kind: input, shape index: {}]
  %s8 = inlined_call_operand.vmem [shape: f32[32,128], index: 8, kind: input, shape index: {}]
  %s9 = inlined_call_operand.vmem [shape: f32[1,128], index: 9, kind: input, shape index: {}]
  %s10 = inlined_call_operand.vmem [shape: f32[64,128], index: 10, kind: output, shape index: {}]
  %s11 = sld [smem:[#allocation0]]
  $region50: #{seq2seq_forward.1} parent=0
    _
  %s13 = ssub.s32 1, %s11
  %s14 = scalar_select 0, %s13, %s11
  // Predicated region
  $region2: #{seq2seq_forward.1} parent=0 // pred_check
    _
  $region3: #{seq2seq_forward.1} parent=0 // pred_check_branch
    %16 = sbr.rel (0) target = $region5
  $region4: #{seq2seq_forward.1} parent=0 // pred_region
    _
  $region5: #{seq2seq_forward.1} parent=0 // pred_fallthru
    _
  // Predicated region
  $region6: #{seq2seq_forward.1} parent=0 // pred_check
    _
  $region7: #{seq2seq_forward.1} parent=0 // pred_check_branch
    %18 = sbr.rel (0) target = $region9
  $region8: #{seq2seq_forward.1} parent=0 // pred_region
    _
  $region9: #{seq2seq_forward.1} parent=0 // pred_fallthru
    _
  // Predicated region
  $region10: #{seq2seq_forward.1} parent=0 // pred_check
    _
  $region11: #{seq2seq_forward.1} parent=0 // pred_check_branch
    %20 = sbr.rel (0) target = $region13
  $region12: #{seq2seq_forward.1} parent=0 // pred_region
    _
  $region13: #{seq2seq_forward.1} parent=0 // pred_fallthru
    _
  // Predicated region
  $region14: #{seq2seq_forward.1} parent=0 // pred_check
    _
  $region15: #{seq2seq_forward.1} parent=0 // pred_check_branch
    %22 = sbr.rel (0) target = $region17
  $region16: #{seq2seq_forward.1} parent=0 // pred_region
    _
  $region17: #{seq2seq_forward.1} parent=0 // pred_fallthru
    _
  // Predicated region
  $region18: #{seq2seq_forward.1} parent=0 // pred_check
    _
  $region19: #{seq2seq_forward.1} parent=0 // pred_check_branch
    %24 = sbr.rel (0) target = $region21
  $region20: #{seq2seq_forward.1} parent=0 // pred_region
    _
  $region21: #{seq2seq_forward.1} parent=0 // pred_fallthru
    _
  // Predicated region
  $region22: #{seq2seq_forward.1} parent=0 // pred_check
    _
  $region23: #{seq2seq_forward.1} parent=0 // pred_check_branch
    %26 = sbr.rel (0) target = $region25
  $region24: #{seq2seq_forward.1} parent=0 // pred_region
    _
  $region25: #{seq2seq_forward.1} parent=0 // pred_fallthru
    _
  // Predicated region
  $region26: #{seq2seq_forward.1} parent=0 // pred_check
    _
  $region27: #{seq2seq_forward.1} parent=0 // pred_check_branch
    %28 = sbr.rel (0) target = $region29
  $region28: #{seq2seq_forward.1} parent=0 // pred_region
    _
  $region29: #{seq2seq_forward.1} parent=0 // pred_fallthru
    _
  // Predicated region
  $region30: #{seq2seq_forward.1} parent=0 // pred_check
    _
  $region31: #{seq2seq_forward.1} parent=0 // pred_check_branch
    %30 = sbr.rel (0) target = $region33
  $region32: #{seq2seq_forward.1} parent=0 // pred_region
    _
  $region33: #{seq2seq_forward.1} parent=0 // pred_fallthru
    _
  // Predicated region
  $region34: #{seq2seq_forward.1} parent=0 // pred_check
    _
  $region35: #{seq2seq_forward.1} parent=0 // pred_check_branch
    %32 = sbr.rel (0) target = $region37
  $region36: #{seq2seq_forward.1} parent=0 // pred_region
    _
  $region37: #{seq2seq_forward.1} parent=0 // pred_fallthru
    _
  // Predicated region
  $region38: #{seq2seq_forward.1} parent=0 // pred_check
    _
  $region39: #{seq2seq_forward.1} parent=0 // pred_check_branch
    %34 = sbr.rel (0) target = $region41
  $region40: #{seq2seq_forward.1} parent=0 // pred_region
    _
  $region41: #{seq2seq_forward.1} parent=0 // pred_fallthru
    _
  %vm35 = vcmask 261120
  %36 = vst.msk [vmem:[#allocation2] sm:$0xff] %vm35, 0.0
  %37 = vst.msk [vmem:[#allocation3] sm:$0xff] %vm35, 0.0
  %v38 = vld [vmem:[%s2] sm:$0xff]
  %v39 = vld [vmem:[%s2 + $0x8] sm:$0xff]
  %v40 = vld [vmem:[%s2 + $0x10] sm:$0xff]
  %v41 = vld [vmem:[%s2 + $0x18] sm:$0xff]
  %v42 = vld [vmem:[%s3] sm:$0xff]
  %v43 = vld [vmem:[%s3 + $0x8] sm:$0xff]
  %v44 = vld [vmem:[%s3 + $0x10] sm:$0xff]
  %v45 = vld [vmem:[%s3 + $0x18] sm:$0xff]
  %v46 = vld [vmem:[%s4] sm:$0x1]
  %v47 = vld [vmem:[%s5] sm:$0xff]
  %v48 = vld [vmem:[%s5 + $0x8] sm:$0xff]
  %v49 = vld [vmem:[%s5 + $0x10] sm:$0xff]
  %v50 = vld [vmem:[%s5 + $0x18] sm:$0xff]
  %v51 = vld [vmem:[%s6] sm:$0xff]
  %v52 = vld [vmem:[%s6 + $0x8] sm:$0xff]
  %v53 = vld [vmem:[%s6 + $0x10] sm:$0xff]
  %v54 = vld [vmem:[%s6 + $0x18] sm:$0xff]
  %v55 = vld [vmem:[%s7] sm:$0x1]
  %v56 = vld [vmem:[%s0] sm:$0xff]
  %v57 = vld [vmem:[#allocation2] sm:$0xff]
  %v58 = vld [vmem:[#allocation3] sm:$0xff]
  %v60 = vsel %vm35, %v57, 0
  %62 = vmatpush.msra.mxu0 0.0
  %63 = vmatpush.msra.mxu0 0.0
  %64 = vmatpush.msra.mxu0 0.0
  %65 = vmatpush.msra.mxu0 0.0
  %66 = vmatpush.msra.mxu0 0.0
  %67 = vmatpush.msra.mxu0 0.0
  %68 = vmatpush.msra.mxu0 0.0
  %69 = vmatpush.msra.mxu0 0.0
  %70 = vmatpush.msra.mxu0 0.0
  %71 = vmatpush.msra.mxu0 0.0
  %72 = vmatpush.msra.mxu0 0.0
  %73 = vmatpush.msra.mxu0 0.0
  %74 = vmatpush.msra.mxu0 %v45
  %75 = vmatpush.msra.mxu0 %v44
  %76 = vmatpush.msra.mxu0 %v43
  %77 = vmatpush.msra.mxu0 %v42
  %78 = vmatmul.f32.gmra.mxu0 %v60
  %v79 = vpop.f32.mrf.mxu0
  %v80 = vadd.f32 0.0, %v79
  %81 = vdwg.mxu0
  %v83 = vsel %vm35, %v56, 0
  %85 = vmatpush.msra.mxu0 0.0
  %86 = vmatpush.msra.mxu0 0.0
  %87 = vmatpush.msra.mxu0 0.0
  %88 = vmatpush.msra.mxu0 0.0
  %89 = vmatpush.msra.mxu0 0.0
  %90 = vmatpush.msra.mxu0 0.0
  %91 = vmatpush.msra.mxu0 0.0
  %92 = vmatpush.msra.mxu0 0.0
  %93 = vmatpush.msra.mxu0 0.0
  %94 = vmatpush.msra.mxu0 0.0
  %95 = vmatpush.msra.mxu0 0.0
  %96 = vmatpush.msra.mxu0 0.0
  %97 = vmatpush.msra.mxu0 %v41
  %98 = vmatpush.msra.mxu0 %v40
  %99 = vmatpush.msra.mxu0 %v39
  %100 = vmatpush.msra.mxu0 %v38
  %101 = vmatmul.f32.gmra.mxu0 %v83
  %v102 = vpop.f32.mrf.mxu0
  %v103 = vadd.f32 %v80, %v102
  %104 = vdwg.mxu0
  %v106 = vperm.slane %v46, 0
  %v108 = vadd.f32 %v103, %v106
  %v109 = vxor.u32 %v108, 2147483648
  %v110 = vmul.f32 %v109, 1.442695
  %v111 = vpow.pop %v110
  %v112 = vadd.f32 %v111, 1.0
  %v113 = vrcp.pop %v112
  %v114 = vmul.f32 %v112, %v113
  %v115 = vsub.f32 1.0, %v114
  %v116 = vmul.f32 %v113, %v115
  %v117 = vadd.f32 %v113, %v116
  %vm118 = vweird.f32 %v112
  %vm119 = vweird.f32 %v113
  %vm120 = vmor %vm118, %vm119
  %v121 = vsel %vm120, %v113, %v117
  %v122 = vand.u32 2147483647, %v112
  %vm123 = vcmp.eq.f32.partialorder %v122, 8.507059e+37
  %v124 = vand.u32 %v112, 2147483648
  %v125 = vor.u32 1.1754944e-38, %v124
  %v126 = vsel %vm123, %v125, %v121
  %v127 = vmul.f32 1.0, %v126
  %v128 = vtanh.pop %v108
  %130 = vrot.lane.b32.xlu0 %v58, 32
  %v131 = vpop.permute.xlu0 %130
  %v133 = vmul.f32 %v127, %v131
  %135 = vrot.lane.b32.xlu0 %v128, 64
  %v136 = vpop.permute.xlu0 %135
  %v138 = vmul.f32 %v127, %v136
  %140 = vrot.lane.b32.xlu0 %v138, 32
  %v141 = vpop.permute.xlu0 %140
  %v143 = vadd.f32 %v133, %v141
  %v144 = vtanh.pop %v143
  %146 = vrot.lane.b32.xlu0 %v144, 64
  %v147 = vpop.permute.xlu0 %146
  %v149 = vmul.f32 %v127, %v147
  %151 = vrot.lane.b32.xlu0 %v149, 32
  %v152 = vpop.permute.xlu0 %151
  %154 = vst.msk [vmem:[#allocation2] sm:$0xff] %vm35, %v152
  %156 = vrot.lane.b32.xlu0 %v143, 96
  %v157 = vpop.permute.xlu0 %156
  %159 = vst.msk [vmem:[#allocation3] sm:$0xff] %vm35, %v157
  %s160 = scalar_lea.vmem %s0, 8
  %v161 = vld [vmem:[%s160] sm:$0xff]
  %v162 = vld [vmem:[#allocation2] sm:$0xff]
  %v163 = vld [vmem:[#allocation3] sm:$0xff]
  %v165 = vsel %vm35, %v162, 0
  %167 = vmatpush.msra.mxu0 0.0
  %168 = vmatpush.msra.mxu0 0.0
  %169 = vmatpush.msra.mxu0 0.0
  %170 = vmatpush.msra.mxu0 0.0
  %171 = vmatpush.msra.mxu0 0.0
  %172 = vmatpush.msra.mxu0 0.0
  %173 = vmatpush.msra.mxu0 0.0
  %174 = vmatpush.msra.mxu0 0.0
  %175 = vmatpush.msra.mxu0 0.0
  %176 = vmatpush.msra.mxu0 0.0
  %177 = vmatpush.msra.mxu0 0.0
  %178 = vmatpush.msra.mxu0 0.0
  %179 = vmatpush.msra.mxu0 %v45
  %180 = vmatpush.msra.mxu0 %v44
  %181 = vmatpush.msra.mxu0 %v43
  %182 = vmatpush.msra.mxu0 %v42
  %183 = vmatmul.f32.gmra.mxu0 %v165
  %v184 = vpop.f32.mrf.mxu0
  %v185 = vadd.f32 0.0, %v184
  %186 = vdwg.mxu0
  %v188 = vsel %vm35, %v161, 0
  %190 = vmatpush.msra.mxu0 0.0
  %191 = vmatpush.msra.mxu0 0.0
  %192 = vmatpush.msra.mxu0 0.0
  %193 = vmatpush.msra.mxu0 0.0
  %194 = vmatpush.msra.mxu0 0.0
  %195 = vmatpush.msra.mxu0 0.0
  %196 = vmatpush.msra.mxu0 0.0
  %197 = vmatpush.msra.mxu0 0.0
  %198 = vmatpush.msra.mxu0 0.0
  %199 = vmatpush.msra.mxu0 0.0
  %200 = vmatpush.msra.mxu0 0.0
  %201 = vmatpush.msra.mxu0 0.0
  %202 = vmatpush.msra.mxu0 %v41
  %203 = vmatpush.msra.mxu0 %v40
  %204 = vmatpush.msra.mxu0 %v39
  %205 = vmatpush.msra.mxu0 %v38
  %206 = vmatmul.f32.gmra.mxu0 %v188
  %v207 = vpop.f32.mrf.mxu0
  %v208 = vadd.f32 %v185, %v207
  %209 = vdwg.mxu0
  %v210 = vadd.f32 %v208, %v106
  %v211 = vxor.u32 %v210, 2147483648
  %v212 = vmul.f32 %v211, 1.442695
  %v213 = vpow.pop %v212
  %v214 = vadd.f32 %v213, 1.0
  %v215 = vrcp.pop %v214
  %v216 = vmul.f32 %v214, %v215
  %v217 = vsub.f32 1.0, %v216
  %v218 = vmul.f32 %v215, %v217
  %v219 = vadd.f32 %v215, %v218
  %vm220 = vweird.f32 %v214
  %vm221 = vweird.f32 %v215
  %vm222 = vmor %vm220, %vm221
  %v223 = vsel %vm222, %v215, %v219
  %v224 = vand.u32 2147483647, %v214
  %vm225 = vcmp.eq.f32.partialorder %v224, 8.507059e+37
  %v226 = vand.u32 %v214, 2147483648
  %v227 = vor.u32 1.1754944e-38, %v226
  %v228 = vsel %vm225, %v227, %v223
  %v229 = vmul.f32 1.0, %v228
  %v230 = vtanh.pop %v210
  %232 = vrot.lane.b32.xlu0 %v163, 32
  %v233 = vpop.permute.xlu0 %232
  %v235 = vmul.f32 %v229, %v233
  %237 = vrot.lane.b32.xlu0 %v230, 64
  %v238 = vpop.permute.xlu0 %237
  %v240 = vmul.f32 %v229, %v238
  %242 = vrot.lane.b32.xlu0 %v240, 32
  %v243 = vpop.permute.xlu0 %242
  %v245 = vadd.f32 %v235, %v243
  %v246 = vtanh.pop %v245
  %248 = vrot.lane.b32.xlu0 %v246, 64
  %v249 = vpop.permute.xlu0 %248
  %v251 = vmul.f32 %v229, %v249
  %253 = vrot.lane.b32.xlu0 %v251, 32
  %v254 = vpop.permute.xlu0 %253
  %256 = vst.msk [vmem:[#allocation2] sm:$0xff] %vm35, %v254
  %258 = vrot.lane.b32.xlu0 %v245, 96
  %v259 = vpop.permute.xlu0 %258
  %261 = vst.msk [vmem:[#allocation3] sm:$0xff] %vm35, %v259
  %s262 = scalar_lea.vmem %s0, 16
  %v263 = vld [vmem:[%s262] sm:$0xff]
  %v264 = vld [vmem:[#allocation2] sm:$0xff]
  %v265 = vld [vmem:[#allocation3] sm:$0xff]
  %v267 = vsel %vm35, %v264, 0
  %269 = vmatpush.msra.mxu0 0.0
  %270 = vmatpush.msra.mxu0 0.0
  %271 = vmatpush.msra.mxu0 0.0
  %272 = vmatpush.msra.mxu0 0.0
  %273 = vmatpush.msra.mxu0 0.0
  %274 = vmatpush.msra.mxu0 0.0
  %275 = vmatpush.msra.mxu0 0.0
  %276 = vmatpush.msra.mxu0 0.0
  %277 = vmatpush.msra.mxu0 0.0
  %278 = vmatpush.msra.mxu0 0.0
  %279 = vmatpush.msra.mxu0 0.0
  %280 = vmatpush.msra.mxu0 0.0
  %281 = vmatpush.msra.mxu0 %v45
  %282 = vmatpush.msra.mxu0 %v44
  %283 = vmatpush.msra.mxu0 %v43
  %284 = vmatpush.msra.mxu0 %v42
  %285 = vmatmul.f32.gmra.mxu0 %v267
  %v286 = vpop.f32.mrf.mxu0
  %v287 = vadd.f32 0.0, %v286
  %288 = vdwg.mxu0
  %v290 = vsel %vm35, %v263, 0
  %292 = vmatpush.msra.mxu0 0.0
  %293 = vmatpush.msra.mxu0 0.0
  %294 = vmatpush.msra.mxu0 0.0
  %295 = vmatpush.msra.mxu0 0.0
  %296 = vmatpush.msra.mxu0 0.0
  %297 = vmatpush.msra.mxu0 0.0
  %298 = vmatpush.msra.mxu0 0.0
  %299 = vmatpush.msra.mxu0 0.0
  %300 = vmatpush.msra.mxu0 0.0
  %301 = vmatpush.msra.mxu0 0.0
  %302 = vmatpush.msra.mxu0 0.0
  %303 = vmatpush.msra.mxu0 0.0
  %304 = vmatpush.msra.mxu0 %v41
  %305 = vmatpush.msra.mxu0 %v40
  %306 = vmatpush.msra.mxu0 %v39
  %307 = vmatpush.msra.mxu0 %v38
  %308 = vmatmul.f32.gmra.mxu0 %v290
  %v309 = vpop.f32.mrf.mxu0
  %v310 = vadd.f32 %v287, %v309
  %311 = vdwg.mxu0
  %v312 = vadd.f32 %v310, %v106
  %v313 = vxor.u32 %v312, 2147483648
  %v314 = vmul.f32 %v313, 1.442695
  %v315 = vpow.pop %v314
  %v316 = vadd.f32 %v315, 1.0
  %v317 = vrcp.pop %v316
  %v318 = vmul.f32 %v316, %v317
  %v319 = vsub.f32 1.0, %v318
  %v320 = vmul.f32 %v317, %v319
  %v321 = vadd.f32 %v317, %v320
  %vm322 = vweird.f32 %v316
  %vm323 = vweird.f32 %v317
  %vm324 = vmor %vm322, %vm323
  %v325 = vsel %vm324, %v317, %v321
  %v326 = vand.u32 2147483647, %v316
  %vm327 = vcmp.eq.f32.partialorder %v326, 8.507059e+37
  %v328 = vand.u32 %v316, 2147483648
  %v329 = vor.u32 1.1754944e-38, %v328
  %v330 = vsel %vm327, %v329, %v325
  %v331 = vmul.f32 1.0, %v330
  %v332 = vtanh.pop %v312
  %334 = vrot.lane.b32.xlu0 %v265, 32
  %v335 = vpop.permute.xlu0 %334
  %v337 = vmul.f32 %v331, %v335
  %339 = vrot.lane.b32.xlu0 %v332, 64
  %v340 = vpop.permute.xlu0 %339
  %v342 = vmul.f32 %v331, %v340
  %344 = vrot.lane.b32.xlu0 %v342, 32
  %v345 = vpop.permute.xlu0 %344
  %v347 = vadd.f32 %v337, %v345
  %v348 = vtanh.pop %v347
  %350 = vrot.lane.b32.xlu0 %v348, 64
  %v351 = vpop.permute.xlu0 %350
  %v353 = vmul.f32 %v331, %v351
  %355 = vrot.lane.b32.xlu0 %v353, 32
  %v356 = vpop.permute.xlu0 %355
  %358 = vst.msk [vmem:[#allocation2] sm:$0xff] %vm35, %v356
  %360 = vrot.lane.b32.xlu0 %v347, 96
  %v361 = vpop.permute.xlu0 %360
  %363 = vst.msk [vmem:[#allocation3] sm:$0xff] %vm35, %v361
  %s364 = scalar_lea.vmem %s0, 24
  %v365 = vld [vmem:[%s364] sm:$0xff]
  %v366 = vld [vmem:[#allocation2] sm:$0xff]
  %v367 = vld [vmem:[#allocation3] sm:$0xff]
  %v369 = vsel %vm35, %v366, 0
  %371 = vmatpush.msra.mxu0 0.0
  %372 = vmatpush.msra.mxu0 0.0
  %373 = vmatpush.msra.mxu0 0.0
  %374 = vmatpush.msra.mxu0 0.0
  %375 = vmatpush.msra.mxu0 0.0
  %376 = vmatpush.msra.mxu0 0.0
  %377 = vmatpush.msra.mxu0 0.0
  %378 = vmatpush.msra.mxu0 0.0
  %379 = vmatpush.msra.mxu0 0.0
  %380 = vmatpush.msra.mxu0 0.0
  %381 = vmatpush.msra.mxu0 0.0
  %382 = vmatpush.msra.mxu0 0.0
  %383 = vmatpush.msra.mxu0 %v45
  %384 = vmatpush.msra.mxu0 %v44
  %385 = vmatpush.msra.mxu0 %v43
  %386 = vmatpush.msra.mxu0 %v42
  %387 = vmatmul.f32.gmra.mxu0 %v369
  %v388 = vpop.f32.mrf.mxu0
  %v389 = vadd.f32 0.0, %v388
  %390 = vdwg.mxu0
  %v392 = vsel %vm35, %v365, 0
  %394 = vmatpush.msra.mxu0 0.0
  %395 = vmatpush.msra.mxu0 0.0
  %396 = vmatpush.msra.mxu0 0.0
  %397 = vmatpush.msra.mxu0 0.0
  %398 = vmatpush.msra.mxu0 0.0
  %399 = vmatpush.msra.mxu0 0.0
  %400 = vmatpush.msra.mxu0 0.0
  %401 = vmatpush.msra.mxu0 0.0
  %402 = vmatpush.msra.mxu0 0.0
  %403 = vmatpush.msra.mxu0 0.0
  %404 = vmatpush.msra.mxu0 0.0
  %405 = vmatpush.msra.mxu0 0.0
  %406 = vmatpush.msra.mxu0 %v41
  %407 = vmatpush.msra.mxu0 %v40
  %408 = vmatpush.msra.mxu0 %v39
  %409 = vmatpush.msra.mxu0 %v38
  %410 = vmatmul.f32.gmra.mxu0 %v392
  %v411 = vpop.f32.mrf.mxu0
  %v412 = vadd.f32 %v389, %v411
  %413 = vdwg.mxu0
  %v414 = vadd.f32 %v412, %v106
  %v415 = vxor.u32 %v414, 2147483648
  %v416 = vmul.f32 %v415, 1.442695
  %v417 = vpow.pop %v416
  %v418 = vadd.f32 %v417, 1.0
  %v419 = vrcp.pop %v418
  %v420 = vmul.f32 %v418, %v419
  %v421 = vsub.f32 1.0, %v420
  %v422 = vmul.f32 %v419, %v421
  %v423 = vadd.f32 %v419, %v422
  %vm424 = vweird.f32 %v418
  %vm425 = vweird.f32 %v419
  %vm426 = vmor %vm424, %vm425
  %v427 = vsel %vm426, %v419, %v423
  %v428 = vand.u32 2147483647, %v418
  %vm429 = vcmp.eq.f32.partialorder %v428, 8.507059e+37
  %v430 = vand.u32 %v418, 2147483648
  %v431 = vor.u32 1.1754944e-38, %v430
  %v432 = vsel %vm429, %v431, %v427
  %v433 = vmul.f32 1.0, %v432
  %v434 = vtanh.pop %v414
  %436 = vrot.lane.b32.xlu0 %v367, 32
  %v437 = vpop.permute.xlu0 %436
  %v439 = vmul.f32 %v433, %v437
  %441 = vrot.lane.b32.xlu0 %v434, 64
  %v442 = vpop.permute.xlu0 %441
  %v444 = vmul.f32 %v433, %v442
  %446 = vrot.lane.b32.xlu0 %v444, 32
  %v447 = vpop.permute.xlu0 %446
  %v449 = vadd.f32 %v439, %v447
  %v450 = vtanh.pop %v449
  %452 = vrot.lane.b32.xlu0 %v450, 64
  %v453 = vpop.permute.xlu0 %452
  %v455 = vmul.f32 %v433, %v453
  %457 = vrot.lane.b32.xlu0 %v455, 32
  %v458 = vpop.permute.xlu0 %457
  %460 = vst.msk [vmem:[#allocation2] sm:$0xff] %vm35, %v458
  %462 = vrot.lane.b32.xlu0 %v449, 96
  %v463 = vpop.permute.xlu0 %462
  %465 = vst.msk [vmem:[#allocation3] sm:$0xff] %vm35, %v463
  %s466 = scalar_lea.vmem %s0, 32
  %v467 = vld [vmem:[%s466] sm:$0xff]
  %v468 = vld [vmem:[#allocation2] sm:$0xff]
  %v469 = vld [vmem:[#allocation3] sm:$0xff]
  %v471 = vsel %vm35, %v468, 0
  %473 = vmatpush.msra.mxu0 0.0
  %474 = vmatpush.msra.mxu0 0.0
  %475 = vmatpush.msra.mxu0 0.0
  %476 = vmatpush.msra.mxu0 0.0
  %477 = vmatpush.msra.mxu0 0.0
  %478 = vmatpush.msra.mxu0 0.0
  %479 = vmatpush.msra.mxu0 0.0
  %480 = vmatpush.msra.mxu0 0.0
  %481 = vmatpush.msra.mxu0 0.0
  %482 = vmatpush.msra.mxu0 0.0
  %483 = vmatpush.msra.mxu0 0.0
  %484 = vmatpush.msra.mxu0 0.0
  %485 = vmatpush.msra.mxu0 %v45
  %486 = vmatpush.msra.mxu0 %v44
  %487 = vmatpush.msra.mxu0 %v43
  %488 = vmatpush.msra.mxu0 %v42
  %489 = vmatmul.f32.gmra.mxu0 %v471
  %v490 = vpop.f32.mrf.mxu0
  %v491 = vadd.f32 0.0, %v490
  %492 = vdwg.mxu0
  %v494 = vsel %vm35, %v467, 0
  %496 = vmatpush.msra.mxu0 0.0
  %497 = vmatpush.msra.mxu0 0.0
  %498 = vmatpush.msra.mxu0 0.0
  %499 = vmatpush.msra.mxu0 0.0
  %500 = vmatpush.msra.mxu0 0.0
  %501 = vmatpush.msra.mxu0 0.0
  %502 = vmatpush.msra.mxu0 0.0
  %503 = vmatpush.msra.mxu0 0.0
  %504 = vmatpush.msra.mxu0 0.0
  %505 = vmatpush.msra.mxu0 0.0
  %506 = vmatpush.msra.mxu0 0.0
  %507 = vmatpush.msra.mxu0 0.0
  %508 = vmatpush.msra.mxu0 %v41
  %509 = vmatpush.msra.mxu0 %v40
  %510 = vmatpush.msra.mxu0 %v39
  %511 = vmatpush.msra.mxu0 %v38
  %512 = vmatmul.f32.gmra.mxu0 %v494
  %v513 = vpop.f32.mrf.mxu0
  %v514 = vadd.f32 %v491, %v513
  %515 = vdwg.mxu0
  %v516 = vadd.f32 %v514, %v106
  %v517 = vxor.u32 %v516, 2147483648
  %v518 = vmul.f32 %v517, 1.442695
  %v519 = vpow.pop %v518
  %v520 = vadd.f32 %v519, 1.0
  %v521 = vrcp.pop %v520
  %v522 = vmul.f32 %v520, %v521
  %v523 = vsub.f32 1.0, %v522
  %v524 = vmul.f32 %v521, %v523
  %v525 = vadd.f32 %v521, %v524
  %vm526 = vweird.f32 %v520
  %vm527 = vweird.f32 %v521
  %vm528 = vmor %vm526, %vm527
  %v529 = vsel %vm528, %v521, %v525
  %v530 = vand.u32 2147483647, %v520
  %vm531 = vcmp.eq.f32.partialorder %v530, 8.507059e+37
  %v532 = vand.u32 %v520, 2147483648
  %v533 = vor.u32 1.1754944e-38, %v532
  %v534 = vsel %vm531, %v533, %v529
  %v535 = vmul.f32 1.0, %v534
  %v536 = vtanh.pop %v516
  %538 = vrot.lane.b32.xlu0 %v469, 32
  %v539 = vpop.permute.xlu0 %538
  %v541 = vmul.f32 %v535, %v539
  %543 = vrot.lane.b32.xlu0 %v536, 64
  %v544 = vpop.permute.xlu0 %543
  %v546 = vmul.f32 %v535, %v544
  %548 = vrot.lane.b32.xlu0 %v546, 32
  %v549 = vpop.permute.xlu0 %548
  %v551 = vadd.f32 %v541, %v549
  %v552 = vtanh.pop %v551
  %554 = vrot.lane.b32.xlu0 %v552, 64
  %v555 = vpop.permute.xlu0 %554
  %v557 = vmul.f32 %v535, %v555
  %559 = vrot.lane.b32.xlu0 %v557, 32
  %v560 = vpop.permute.xlu0 %559
  %562 = vst.msk [vmem:[#allocation2] sm:$0xff] %vm35, %v560
  %564 = vrot.lane.b32.xlu0 %v551, 96
  %v565 = vpop.permute.xlu0 %564
  %567 = vst.msk [vmem:[#allocation3] sm:$0xff] %vm35, %v565
  %s568 = scalar_lea.vmem %s0, 40
  %v569 = vld [vmem:[%s568] sm:$0xff]
  %v570 = vld [vmem:[#allocation2] sm:$0xff]
  %v571 = vld [vmem:[#allocation3] sm:$0xff]
  %v573 = vsel %vm35, %v570, 0
  %575 = vmatpush.msra.mxu0 0.0
  %576 = vmatpush.msra.mxu0 0.0
  %577 = vmatpush.msra.mxu0 0.0
  %578 = vmatpush.msra.mxu0 0.0
  %579 = vmatpush.msra.mxu0 0.0
  %580 = vmatpush.msra.mxu0 0.0
  %581 = vmatpush.msra.mxu0 0.0
  %582 = vmatpush.msra.mxu0 0.0
  %583 = vmatpush.msra.mxu0 0.0
  %584 = vmatpush.msra.mxu0 0.0
  %585 = vmatpush.msra.mxu0 0.0
  %586 = vmatpush.msra.mxu0 0.0
  %587 = vmatpush.msra.mxu0 %v45
  %588 = vmatpush.msra.mxu0 %v44
  %589 = vmatpush.msra.mxu0 %v43
  %590 = vmatpush.msra.mxu0 %v42
  %591 = vmatmul.f32.gmra.mxu0 %v573
  %v592 = vpop.f32.mrf.mxu0
  %v593 = vadd.f32 0.0, %v592
  %594 = vdwg.mxu0
  %v596 = vsel %vm35, %v569, 0
  %598 = vmatpush.msra.mxu0 0.0
  %599 = vmatpush.msra.mxu0 0.0
  %600 = vmatpush.msra.mxu0 0.0
  %601 = vmatpush.msra.mxu0 0.0
  %602 = vmatpush.msra.mxu0 0.0
  %603 = vmatpush.msra.mxu0 0.0
  %604 = vmatpush.msra.mxu0 0.0
  %605 = vmatpush.msra.mxu0 0.0
  %606 = vmatpush.msra.mxu0 0.0
  %607 = vmatpush.msra.mxu0 0.0
  %608 = vmatpush.msra.mxu0 0.0
  %609 = vmatpush.msra.mxu0 0.0
  %610 = vmatpush.msra.mxu0 %v41
  %611 = vmatpush.msra.mxu0 %v40
  %612 = vmatpush.msra.mxu0 %v39
  %613 = vmatpush.msra.mxu0 %v38
  %614 = vmatmul.f32.gmra.mxu0 %v596
  %v615 = vpop.f32.mrf.mxu0
  %v616 = vadd.f32 %v593, %v615
  %617 = vdwg.mxu0
  %v618 = vadd.f32 %v616, %v106
  %v619 = vxor.u32 %v618, 2147483648
  %v620 = vmul.f32 %v619, 1.442695
  %v621 = vpow.pop %v620
  %v622 = vadd.f32 %v621, 1.0
  %v623 = vrcp.pop %v622
  %v624 = vmul.f32 %v622, %v623
  %v625 = vsub.f32 1.0, %v624
  %v626 = vmul.f32 %v623, %v625
  %v627 = vadd.f32 %v623, %v626
  %vm628 = vweird.f32 %v622
  %vm629 = vweird.f32 %v623
  %vm630 = vmor %vm628, %vm629
  %v631 = vsel %vm630, %v623, %v627
  %v632 = vand.u32 2147483647, %v622
  %vm633 = vcmp.eq.f32.partialorder %v632, 8.507059e+37
  %v634 = vand.u32 %v622, 2147483648
  %v635 = vor.u32 1.1754944e-38, %v634
  %v636 = vsel %vm633, %v635, %v631
  %v637 = vmul.f32 1.0, %v636
  %v638 = vtanh.pop %v618
  %640 = vrot.lane.b32.xlu0 %v571, 32
  %v641 = vpop.permute.xlu0 %640
  %v643 = vmul.f32 %v637, %v641
  %645 = vrot.lane.b32.xlu0 %v638, 64
  %v646 = vpop.permute.xlu0 %645
  %v648 = vmul.f32 %v637, %v646
  %650 = vrot.lane.b32.xlu0 %v648, 32
  %v651 = vpop.permute.xlu0 %650
  %v653 = vadd.f32 %v643, %v651
  %v654 = vtanh.pop %v653
  %656 = vrot.lane.b32.xlu0 %v654, 64
  %v657 = vpop.permute.xlu0 %656
  %v659 = vmul.f32 %v637, %v657
  %661 = vrot.lane.b32.xlu0 %v659, 32
  %v662 = vpop.permute.xlu0 %661
  %664 = vst.msk [vmem:[#allocation2] sm:$0xff] %vm35, %v662
  %666 = vrot.lane.b32.xlu0 %v653, 96
  %v667 = vpop.permute.xlu0 %666
  %669 = vst.msk [vmem:[#allocation3] sm:$0xff] %vm35, %v667
  %s670 = scalar_lea.vmem %s0, 48
  %v671 = vld [vmem:[%s670] sm:$0xff]
  %v672 = vld [vmem:[#allocation2] sm:$0xff]
  %v673 = vld [vmem:[#allocation3] sm:$0xff]
  %v675 = vsel %vm35, %v672, 0
  %677 = vmatpush.msra.mxu0 0.0
  %678 = vmatpush.msra.mxu0 0.0
  %679 = vmatpush.msra.mxu0 0.0
  %680 = vmatpush.msra.mxu0 0.0
  %681 = vmatpush.msra.mxu0 0.0
  %682 = vmatpush.msra.mxu0 0.0
  %683 = vmatpush.msra.mxu0 0.0
  %684 = vmatpush.msra.mxu0 0.0
  %685 = vmatpush.msra.mxu0 0.0
  %686 = vmatpush.msra.mxu0 0.0
  %687 = vmatpush.msra.mxu0 0.0
  %688 = vmatpush.msra.mxu0 0.0
  %689 = vmatpush.msra.mxu0 %v45
  %690 = vmatpush.msra.mxu0 %v44
  %691 = vmatpush.msra.mxu0 %v43
  %692 = vmatpush.msra.mxu0 %v42
  %693 = vmatmul.f32.gmra.mxu0 %v675
  %v694 = vpop.f32.mrf.mxu0
  %v695 = vadd.f32 0.0, %v694
  %696 = vdwg.mxu0
  %v698 = vsel %vm35, %v671, 0
  %700 = vmatpush.msra.mxu0 0.0
  %701 = vmatpush.msra.mxu0 0.0
  %702 = vmatpush.msra.mxu0 0.0
  %703 = vmatpush.msra.mxu0 0.0
  %704 = vmatpush.msra.mxu0 0.0
  %705 = vmatpush.msra.mxu0 0.0
  %706 = vmatpush.msra.mxu0 0.0
  %707 = vmatpush.msra.mxu0 0.0
  %708 = vmatpush.msra.mxu0 0.0
  %709 = vmatpush.msra.mxu0 0.0
  %710 = vmatpush.msra.mxu0 0.0
  %711 = vmatpush.msra.mxu0 0.0
  %712 = vmatpush.msra.mxu0 %v41
  %713 = vmatpush.msra.mxu0 %v40
  %714 = vmatpush.msra.mxu0 %v39
  %715 = vmatpush.msra.mxu0 %v38
  %716 = vmatmul.f32.gmra.mxu0 %v698
  %v717 = vpop.f32.mrf.mxu0
  %v718 = vadd.f32 %v695, %v717
  %719 = vdwg.mxu0
  %v720 = vadd.f32 %v718, %v106
  %v721 = vxor.u32 %v720, 2147483648
  %v722 = vmul.f32 %v721, 1.442695
  %v723 = vpow.pop %v722
  %v724 = vadd.f32 %v723, 1.0
  %v725 = vrcp.pop %v724
  %v726 = vmul.f32 %v724, %v725
  %v727 = vsub.f32 1.0, %v726
  %v728 = vmul.f32 %v725, %v727
  %v729 = vadd.f32 %v725, %v728
  %vm730 = vweird.f32 %v724
  %vm731 = vweird.f32 %v725
  %vm732 = vmor %vm730, %vm731
  %v733 = vsel %vm732, %v725, %v729
  %v734 = vand.u32 2147483647, %v724
  %vm735 = vcmp.eq.f32.partialorder %v734, 8.507059e+37
  %v736 = vand.u32 %v724, 2147483648
  %v737 = vor.u32 1.1754944e-38, %v736
  %v738 = vsel %vm735, %v737, %v733
  %v739 = vmul.f32 1.0, %v738
  %v740 = vtanh.pop %v720
  %742 = vrot.lane.b32.xlu0 %v673, 32
  %v743 = vpop.permute.xlu0 %742
  %v745 = vmul.f32 %v739, %v743
  %747 = vrot.lane.b32.xlu0 %v740, 64
  %v748 = vpop.permute.xlu0 %747
  %v750 = vmul.f32 %v739, %v748
  %752 = vrot.lane.b32.xlu0 %v750, 32
  %v753 = vpop.permute.xlu0 %752
  %v755 = vadd.f32 %v745, %v753
  %v756 = vtanh.pop %v755
  %758 = vrot.lane.b32.xlu0 %v756, 64
  %v759 = vpop.permute.xlu0 %758
  %v761 = vmul.f32 %v739, %v759
  %763 = vrot.lane.b32.xlu0 %v761, 32
  %v764 = vpop.permute.xlu0 %763
  %766 = vst.msk [vmem:[#allocation2] sm:$0xff] %vm35, %v764
  %768 = vrot.lane.b32.xlu0 %v755, 96
  %v769 = vpop.permute.xlu0 %768
  %771 = vst.msk [vmem:[#allocation3] sm:$0xff] %vm35, %v769
  %s772 = scalar_lea.vmem %s0, 56
  %v773 = vld [vmem:[%s772] sm:$0xff]
  %v774 = vld [vmem:[#allocation2] sm:$0xff]
  %v775 = vld [vmem:[#allocation3] sm:$0xff]
  %v777 = vsel %vm35, %v774, 0
  %779 = vmatpush.msra.mxu0 0.0
  %780 = vmatpush.msra.mxu0 0.0
  %781 = vmatpush.msra.mxu0 0.0
  %782 = vmatpush.msra.mxu0 0.0
  %783 = vmatpush.msra.mxu0 0.0
  %784 = vmatpush.msra.mxu0 0.0
  %785 = vmatpush.msra.mxu0 0.0
  %786 = vmatpush.msra.mxu0 0.0
  %787 = vmatpush.msra.mxu0 0.0
  %788 = vmatpush.msra.mxu0 0.0
  %789 = vmatpush.msra.mxu0 0.0
  %790 = vmatpush.msra.mxu0 0.0
  %791 = vmatpush.msra.mxu0 %v45
  %792 = vmatpush.msra.mxu0 %v44
  %793 = vmatpush.msra.mxu0 %v43
  %794 = vmatpush.msra.mxu0 %v42
  %795 = vmatmul.f32.gmra.mxu0 %v777
  %v796 = vpop.f32.mrf.mxu0
  %v797 = vadd.f32 0.0, %v796
  %798 = vdwg.mxu0
  %v800 = vsel %vm35, %v773, 0
  %802 = vmatpush.msra.mxu0 0.0
  %803 = vmatpush.msra.mxu0 0.0
  %804 = vmatpush.msra.mxu0 0.0
  %805 = vmatpush.msra.mxu0 0.0
  %806 = vmatpush.msra.mxu0 0.0
  %807 = vmatpush.msra.mxu0 0.0
  %808 = vmatpush.msra.mxu0 0.0
  %809 = vmatpush.msra.mxu0 0.0
  %810 = vmatpush.msra.mxu0 0.0
  %811 = vmatpush.msra.mxu0 0.0
  %812 = vmatpush.msra.mxu0 0.0
  %813 = vmatpush.msra.mxu0 0.0
  %814 = vmatpush.msra.mxu0 %v41
  %815 = vmatpush.msra.mxu0 %v40
  %816 = vmatpush.msra.mxu0 %v39
  %817 = vmatpush.msra.mxu0 %v38
  %818 = vmatmul.f32.gmra.mxu0 %v800
  %v819 = vpop.f32.mrf.mxu0
  %v820 = vadd.f32 %v797, %v819
  %821 = vdwg.mxu0
  %v822 = vadd.f32 %v820, %v106
  %v823 = vxor.u32 %v822, 2147483648
  %v824 = vmul.f32 %v823, 1.442695
  %v825 = vpow.pop %v824
  %v826 = vadd.f32 %v825, 1.0
  %v827 = vrcp.pop %v826
  %v828 = vmul.f32 %v826, %v827
  %v829 = vsub.f32 1.0, %v828
  %v830 = vmul.f32 %v827, %v829
  %v831 = vadd.f32 %v827, %v830
  %vm832 = vweird.f32 %v826
  %vm833 = vweird.f32 %v827
  %vm834 = vmor %vm832, %vm833
  %v835 = vsel %vm834, %v827, %v831
  %v836 = vand.u32 2147483647, %v826
  %vm837 = vcmp.eq.f32.partialorder %v836, 8.507059e+37
  %v838 = vand.u32 %v826, 2147483648
  %v839 = vor.u32 1.1754944e-38, %v838
  %v840 = vsel %vm837, %v839, %v835
  %v841 = vmul.f32 1.0, %v840
  %v842 = vtanh.pop %v822
  %844 = vrot.lane.b32.xlu0 %v775, 32
  %v845 = vpop.permute.xlu0 %844
  %v847 = vmul.f32 %v841, %v845
  %849 = vrot.lane.b32.xlu0 %v842, 64
  %v850 = vpop.permute.xlu0 %849
  %v852 = vmul.f32 %v841, %v850
  %854 = vrot.lane.b32.xlu0 %v852, 32
  %v855 = vpop.permute.xlu0 %854
  %v857 = vadd.f32 %v847, %v855
  %v858 = vtanh.pop %v857
  %860 = vrot.lane.b32.xlu0 %v858, 64
  %v861 = vpop.permute.xlu0 %860
  %v863 = vmul.f32 %v841, %v861
  %865 = vrot.lane.b32.xlu0 %v863, 32
  %v866 = vpop.permute.xlu0 %865
  %868 = vst.msk [vmem:[#allocation2] sm:$0xff] %vm35, %v866
  %870 = vrot.lane.b32.xlu0 %v857, 96
  %v871 = vpop.permute.xlu0 %870
  %873 = vst.msk [vmem:[#allocation3] sm:$0xff] %vm35, %v871
  %s874 = scalar_lea.vmem %s0, 64
  %v875 = vld [vmem:[%s874] sm:$0xff]
  %v876 = vld [vmem:[#allocation2] sm:$0xff]
  %v877 = vld [vmem:[#allocation3] sm:$0xff]
  %v879 = vsel %vm35, %v876, 0
  %881 = vmatpush.msra.mxu0 0.0
  %882 = vmatpush.msra.mxu0 0.0
  %883 = vmatpush.msra.mxu0 0.0
  %884 = vmatpush.msra.mxu0 0.0
  %885 = vmatpush.msra.mxu0 0.0
  %886 = vmatpush.msra.mxu0 0.0
  %887 = vmatpush.msra.mxu0 0.0
  %888 = vmatpush.msra.mxu0 0.0
  %889 = vmatpush.msra.mxu0 0.0
  %890 = vmatpush.msra.mxu0 0.0
  %891 = vmatpush.msra.mxu0 0.0
  %892 = vmatpush.msra.mxu0 0.0
  %893 = vmatpush.msra.mxu0 %v45
  %894 = vmatpush.msra.mxu0 %v44
  %895 = vmatpush.msra.mxu0 %v43
  %896 = vmatpush.msra.mxu0 %v42
  %897 = vmatmul.f32.gmra.mxu0 %v879
  %v898 = vpop.f32.mrf.mxu0
  %v899 = vadd.f32 0.0, %v898
  %900 = vdwg.mxu0
  %v902 = vsel %vm35, %v875, 0
  %904 = vmatpush.msra.mxu0 0.0
  %905 = vmatpush.msra.mxu0 0.0
  %906 = vmatpush.msra.mxu0 0.0
  %907 = vmatpush.msra.mxu0 0.0
  %908 = vmatpush.msra.mxu0 0.0
  %909 = vmatpush.msra.mxu0 0.0
  %910 = vmatpush.msra.mxu0 0.0
  %911 = vmatpush.msra.mxu0 0.0
  %912 = vmatpush.msra.mxu0 0.0
  %913 = vmatpush.msra.mxu0 0.0
  %914 = vmatpush.msra.mxu0 0.0
  %915 = vmatpush.msra.mxu0 0.0
  %916 = vmatpush.msra.mxu0 %v41
  %917 = vmatpush.msra.mxu0 %v40
  %918 = vmatpush.msra.mxu0 %v39
  %919 = vmatpush.msra.mxu0 %v38
  %920 = vmatmul.f32.gmra.mxu0 %v902
  %v921 = vpop.f32.mrf.mxu0
  %v922 = vadd.f32 %v899, %v921
  %923 = vdwg.mxu0
  %v924 = vadd.f32 %v922, %v106
  %v925 = vxor.u32 %v924, 2147483648
  %v926 = vmul.f32 %v925, 1.442695
  %v927 = vpow.pop %v926
  %v928 = vadd.f32 %v927, 1.0
  %v929 = vrcp.pop %v928
  %v930 = vmul.f32 %v928, %v929
  %v931 = vsub.f32 1.0, %v930
  %v932 = vmul.f32 %v929, %v931
  %v933 = vadd.f32 %v929, %v932
  %vm934 = vweird.f32 %v928
  %vm935 = vweird.f32 %v929
  %vm936 = vmor %vm934, %vm935
  %v937 = vsel %vm936, %v929, %v933
  %v938 = vand.u32 2147483647, %v928
  %vm939 = vcmp.eq.f32.partialorder %v938, 8.507059e+37
  %v940 = vand.u32 %v928, 2147483648
  %v941 = vor.u32 1.1754944e-38, %v940
  %v942 = vsel %vm939, %v941, %v937
  %v943 = vmul.f32 1.0, %v942
  %v944 = vtanh.pop %v924
  %946 = vrot.lane.b32.xlu0 %v877, 32
  %v947 = vpop.permute.xlu0 %946
  %v949 = vmul.f32 %v943, %v947
  %951 = vrot.lane.b32.xlu0 %v944, 64
  %v952 = vpop.permute.xlu0 %951
  %v954 = vmul.f32 %v943, %v952
  %956 = vrot.lane.b32.xlu0 %v954, 32
  %v957 = vpop.permute.xlu0 %956
  %v959 = vadd.f32 %v949, %v957
  %v960 = vtanh.pop %v959
  %962 = vrot.lane.b32.xlu0 %v960, 64
  %v963 = vpop.permute.xlu0 %962
  %v965 = vmul.f32 %v943, %v963
  %967 = vrot.lane.b32.xlu0 %v965, 32
  %v968 = vpop.permute.xlu0 %967
  %970 = vst.msk [vmem:[#allocation2] sm:$0xff] %vm35, %v968
  %972 = vrot.lane.b32.xlu0 %v959, 96
  %v973 = vpop.permute.xlu0 %972
  %975 = vst.msk [vmem:[#allocation3] sm:$0xff] %vm35, %v973
  %v976 = vld [vmem:[%s1] sm:$0xff]
  %v977 = vld [vmem:[#allocation2] sm:$0xff]
  %v978 = vld [vmem:[#allocation3] sm:$0xff]
  %v980 = vsel %vm35, %v977, 0
  %982 = vmatpush.msra.mxu0 0.0
  %983 = vmatpush.msra.mxu0 0.0
  %984 = vmatpush.msra.mxu0 0.0
  %985 = vmatpush.msra.mxu0 0.0
  %986 = vmatpush.msra.mxu0 0.0
  %987 = vmatpush.msra.mxu0 0.0
  %988 = vmatpush.msra.mxu0 0.0
  %989 = vmatpush.msra.mxu0 0.0
  %990 = vmatpush.msra.mxu0 0.0
  %991 = vmatpush.msra.mxu0 0.0
  %992 = vmatpush.msra.mxu0 0.0
  %993 = vmatpush.msra.mxu0 0.0
  %994 = vmatpush.msra.mxu0 %v54
  %995 = vmatpush.msra.mxu0 %v53
  %996 = vmatpush.msra.mxu0 %v52
  %997 = vmatpush.msra.mxu0 %v51
  %998 = vmatmul.f32.gmra.mxu0 %v980
  %v999 = vpop.f32.mrf.mxu0
  %v1000 = vadd.f32 0.0, %v999
  %1001 = vdwg.mxu0
  %v1003 = vsel %vm35, %v976, 0
  %1005 = vmatpush.msra.mxu0 0.0
  %1006 = vmatpush.msra.mxu0 0.0
  %1007 = vmatpush.msra.mxu0 0.0
  %1008 = vmatpush.msra.mxu0 0.0
  %1009 = vmatpush.msra.mxu0 0.0
  %1010 = vmatpush.msra.mxu0 0.0
  %1011 = vmatpush.msra.mxu0 0.0
  %1012 = vmatpush.msra.mxu0 0.0
  %1013 = vmatpush.msra.mxu0 0.0
  %1014 = vmatpush.msra.mxu0 0.0
  %1015 = vmatpush.msra.mxu0 0.0
  %1016 = vmatpush.msra.mxu0 0.0
  %1017 = vmatpush.msra.mxu0 %v50
  %1018 = vmatpush.msra.mxu0 %v49
  %1019 = vmatpush.msra.mxu0 %v48
  %1020 = vmatpush.msra.mxu0 %v47
  %1021 = vmatmul.f32.gmra.mxu0 %v1003
  %v1022 = vpop.f32.mrf.mxu0
  %v1023 = vadd.f32 %v1000, %v1022
  %1024 = vdwg.mxu0
  %v1026 = vperm.slane %v55, 0
  %v1028 = vadd.f32 %v1023, %v1026
  %v1029 = vxor.u32 %v1028, 2147483648
  %v1030 = vmul.f32 %v1029, 1.442695
  %v1031 = vpow.pop %v1030
  %v1032 = vadd.f32 %v1031, 1.0
  %v1033 = vrcp.pop %v1032
  %v1034 = vmul.f32 %v1032, %v1033
  %v1035 = vsub.f32 1.0, %v1034
  %v1036 = vmul.f32 %v1033, %v1035
  %v1037 = vadd.f32 %v1033, %v1036
  %vm1038 = vweird.f32 %v1032
  %vm1039 = vweird.f32 %v1033
  %vm1040 = vmor %vm1038, %vm1039
  %v1041 = vsel %vm1040, %v1033, %v1037
  %v1042 = vand.u32 2147483647, %v1032
  %vm1043 = vcmp.eq.f32.partialorder %v1042, 8.507059e+37
  %v1044 = vand.u32 %v1032, 2147483648
  %v1045 = vor.u32 1.1754944e-38, %v1044
  %v1046 = vsel %vm1043, %v1045, %v1041
  %v1047 = vmul.f32 1.0, %v1046
  %v1048 = vtanh.pop %v1028
  %1050 = vrot.lane.b32.xlu0 %v978, 32
  %v1051 = vpop.permute.xlu0 %1050
  %v1053 = vmul.f32 %v1047, %v1051
  %1055 = vrot.lane.b32.xlu0 %v1048, 64
  %v1056 = vpop.permute.xlu0 %1055
  %v1058 = vmul.f32 %v1047, %v1056
  %1060 = vrot.lane.b32.xlu0 %v1058, 32
  %v1061 = vpop.permute.xlu0 %1060
  %v1063 = vadd.f32 %v1053, %v1061
  %v1064 = vtanh.pop %v1063
  %1066 = vrot.lane.b32.xlu0 %v1064, 64
  %v1067 = vpop.permute.xlu0 %1066
  %v1069 = vmul.f32 %v1047, %v1067
  %1071 = vrot.lane.b32.xlu0 %v1069, 32
  %v1072 = vpop.permute.xlu0 %1071
  %1074 = vst.msk [vmem:[#allocation2] sm:$0xff] %vm35, %v1072
  %1076 = vrot.lane.b32.xlu0 %v1063, 96
  %v1077 = vpop.permute.xlu0 %1076
  %1079 = vst.msk [vmem:[#allocation3] sm:$0xff] %vm35, %v1077
  %1080 = vst.msk [vmem:[#allocation4] sm:$0xff] %vm35, %v1072
  %s1081 = scalar_lea.vmem %s1, 8
  %v1082 = vld [vmem:[%s1081] sm:$0xff]
  %v1083 = vld [vmem:[#allocation2] sm:$0xff]
  %v1084 = vld [vmem:[#allocation3] sm:$0xff]
  %v1086 = vsel %vm35, %v1083, 0
  %1088 = vmatpush.msra.mxu0 0.0
  %1089 = vmatpush.msra.mxu0 0.0
  %1090 = vmatpush.msra.mxu0 0.0
  %1091 = vmatpush.msra.mxu0 0.0
  %1092 = vmatpush.msra.mxu0 0.0
  %1093 = vmatpush.msra.mxu0 0.0
  %1094 = vmatpush.msra.mxu0 0.0
  %1095 = vmatpush.msra.mxu0 0.0
  %1096 = vmatpush.msra.mxu0 0.0
  %1097 = vmatpush.msra.mxu0 0.0
  %1098 = vmatpush.msra.mxu0 0.0
  %1099 = vmatpush.msra.mxu0 0.0
  %1100 = vmatpush.msra.mxu0 %v54
  %1101 = vmatpush.msra.mxu0 %v53
  %1102 = vmatpush.msra.mxu0 %v52
  %1103 = vmatpush.msra.mxu0 %v51
  %1104 = vmatmul.f32.gmra.mxu0 %v1086
  %v1105 = vpop.f32.mrf.mxu0
  %v1106 = vadd.f32 0.0, %v1105
  %1107 = vdwg.mxu0
  %v1109 = vsel %vm35, %v1082, 0
  %1111 = vmatpush.msra.mxu0 0.0
  %1112 = vmatpush.msra.mxu0 0.0
  %1113 = vmatpush.msra.mxu0 0.0
  %1114 = vmatpush.msra.mxu0 0.0
  %1115 = vmatpush.msra.mxu0 0.0
  %1116 = vmatpush.msra.mxu0 0.0
  %1117 = vmatpush.msra.mxu0 0.0
  %1118 = vmatpush.msra.mxu0 0.0
  %1119 = vmatpush.msra.mxu0 0.0
  %1120 = vmatpush.msra.mxu0 0.0
  %1121 = vmatpush.msra.mxu0 0.0
  %1122 = vmatpush.msra.mxu0 0.0
  %1123 = vmatpush.msra.mxu0 %v50
  %1124 = vmatpush.msra.mxu0 %v49
  %1125 = vmatpush.msra.mxu0 %v48
  %1126 = vmatpush.msra.mxu0 %v47
  %1127 = vmatmul.f32.gmra.mxu0 %v1109
  %v1128 = vpop.f32.mrf.mxu0
  %v1129 = vadd.f32 %v1106, %v1128
  %1130 = vdwg.mxu0
  %v1131 = vadd.f32 %v1129, %v1026
  %v1132 = vxor.u32 %v1131, 2147483648
  %v1133 = vmul.f32 %v1132, 1.442695
  %v1134 = vpow.pop %v1133
  %v1135 = vadd.f32 %v1134, 1.0
  %v1136 = vrcp.pop %v1135
  %v1137 = vmul.f32 %v1135, %v1136
  %v1138 = vsub.f32 1.0, %v1137
  %v1139 = vmul.f32 %v1136, %v1138
  %v1140 = vadd.f32 %v1136, %v1139
  %vm1141 = vweird.f32 %v1135
  %vm1142 = vweird.f32 %v1136
  %vm1143 = vmor %vm1141, %vm1142
  %v1144 = vsel %vm1143, %v1136, %v1140
  %v1145 = vand.u32 2147483647, %v1135
  %vm1146 = vcmp.eq.f32.partialorder %v1145, 8.507059e+37
  %v1147 = vand.u32 %v1135, 2147483648
  %v1148 = vor.u32 1.1754944e-38, %v1147
  %v1149 = vsel %vm1146, %v1148, %v1144
  %v1150 = vmul.f32 1.0, %v1149
  %v1151 = vtanh.pop %v1131
  %1153 = vrot.lane.b32.xlu0 %v1084, 32
  %v1154 = vpop.permute.xlu0 %1153
  %v1156 = vmul.f32 %v1150, %v1154
  %1158 = vrot.lane.b32.xlu0 %v1151, 64
  %v1159 = vpop.permute.xlu0 %1158
  %v1161 = vmul.f32 %v1150, %v1159
  %1163 = vrot.lane.b32.xlu0 %v1161, 32
  %v1164 = vpop.permute.xlu0 %1163
  %v1166 = vadd.f32 %v1156, %v1164
  %v1167 = vtanh.pop %v1166
  %1169 = vrot.lane.b32.xlu0 %v1167, 64
  %v1170 = vpop.permute.xlu0 %1169
  %v1172 = vmul.f32 %v1150, %v1170
  %1174 = vrot.lane.b32.xlu0 %v1172, 32
  %v1175 = vpop.permute.xlu0 %1174
  %1177 = vst.msk [vmem:[#allocation2] sm:$0xff] %vm35, %v1175
  %1179 = vrot.lane.b32.xlu0 %v1166, 96
  %v1180 = vpop.permute.xlu0 %1179
  %1182 = vst.msk [vmem:[#allocation3] sm:$0xff] %vm35, %v1180
  %s1183 = scalar_lea.vmem [#allocation4], 8
  %1184 = vst.msk [vmem:[%s1183] sm:$0xff] %vm35, %v1175
  %s1185 = scalar_lea.vmem %s1, 16
  %v1186 = vld [vmem:[%s1185] sm:$0xff]
  %v1187 = vld [vmem:[#allocation2] sm:$0xff]
  %v1188 = vld [vmem:[#allocation3] sm:$0xff]
  %v1190 = vsel %vm35, %v1187, 0
  %1192 = vmatpush.msra.mxu0 0.0
  %1193 = vmatpush.msra.mxu0 0.0
  %1194 = vmatpush.msra.mxu0 0.0
  %1195 = vmatpush.msra.mxu0 0.0
  %1196 = vmatpush.msra.mxu0 0.0
  %1197 = vmatpush.msra.mxu0 0.0
  %1198 = vmatpush.msra.mxu0 0.0
  %1199 = vmatpush.msra.mxu0 0.0
  %1200 = vmatpush.msra.mxu0 0.0
  %1201 = vmatpush.msra.mxu0 0.0
  %1202 = vmatpush.msra.mxu0 0.0
  %1203 = vmatpush.msra.mxu0 0.0
  %1204 = vmatpush.msra.mxu0 %v54
  %1205 = vmatpush.msra.mxu0 %v53
  %1206 = vmatpush.msra.mxu0 %v52
  %1207 = vmatpush.msra.mxu0 %v51
  %1208 = vmatmul.f32.gmra.mxu0 %v1190
  %v1209 = vpop.f32.mrf.mxu0
  %v1210 = vadd.f32 0.0, %v1209
  %1211 = vdwg.mxu0
  %v1213 = vsel %vm35, %v1186, 0
  %1215 = vmatpush.msra.mxu0 0.0
  %1216 = vmatpush.msra.mxu0 0.0
  %1217 = vmatpush.msra.mxu0 0.0
  %1218 = vmatpush.msra.mxu0 0.0
  %1219 = vmatpush.msra.mxu0 0.0
  %1220 = vmatpush.msra.mxu0 0.0
  %1221 = vmatpush.msra.mxu0 0.0
  %1222 = vmatpush.msra.mxu0 0.0
  %1223 = vmatpush.msra.mxu0 0.0
  %1224 = vmatpush.msra.mxu0 0.0
  %1225 = vmatpush.msra.mxu0 0.0
  %1226 = vmatpush.msra.mxu0 0.0
  %1227 = vmatpush.msra.mxu0 %v50
  %1228 = vmatpush.msra.mxu0 %v49
  %1229 = vmatpush.msra.mxu0 %v48
  %1230 = vmatpush.msra.mxu0 %v47
  %1231 = vmatmul.f32.gmra.mxu0 %v1213
  %v1232 = vpop.f32.mrf.mxu0
  %v1233 = vadd.f32 %v1210, %v1232
  %1234 = vdwg.mxu0
  %v1235 = vadd.f32 %v1233, %v1026
  %v1236 = vxor.u32 %v1235, 2147483648
  %v1237 = vmul.f32 %v1236, 1.442695
  %v1238 = vpow.pop %v1237
  %v1239 = vadd.f32 %v1238, 1.0
  %v1240 = vrcp.pop %v1239
  %v1241 = vmul.f32 %v1239, %v1240
  %v1242 = vsub.f32 1.0, %v1241
  %v1243 = vmul.f32 %v1240, %v1242
  %v1244 = vadd.f32 %v1240, %v1243
  %vm1245 = vweird.f32 %v1239
  %vm1246 = vweird.f32 %v1240
  %vm1247 = vmor %vm1245, %vm1246
  %v1248 = vsel %vm1247, %v1240, %v1244
  %v1249 = vand.u32 2147483647, %v1239
  %vm1250 = vcmp.eq.f32.partialorder %v1249, 8.507059e+37
  %v1251 = vand.u32 %v1239, 2147483648
  %v1252 = vor.u32 1.1754944e-38, %v1251
  %v1253 = vsel %vm1250, %v1252, %v1248
  %v1254 = vmul.f32 1.0, %v1253
  %v1255 = vtanh.pop %v1235
  %1257 = vrot.lane.b32.xlu0 %v1188, 32
  %v1258 = vpop.permute.xlu0 %1257
  %v1260 = vmul.f32 %v1254, %v1258
  %1262 = vrot.lane.b32.xlu0 %v1255, 64
  %v1263 = vpop.permute.xlu0 %1262
  %v1265 = vmul.f32 %v1254, %v1263
  %1267 = vrot.lane.b32.xlu0 %v1265, 32
  %v1268 = vpop.permute.xlu0 %1267
  %v1270 = vadd.f32 %v1260, %v1268
  %v1271 = vtanh.pop %v1270
  %1273 = vrot.lane.b32.xlu0 %v1271, 64
  %v1274 = vpop.permute.xlu0 %1273
  %v1276 = vmul.f32 %v1254, %v1274
  %1278 = vrot.lane.b32.xlu0 %v1276, 32
  %v1279 = vpop.permute.xlu0 %1278
  %1281 = vst.msk [vmem:[#allocation2] sm:$0xff] %vm35, %v1279
  %1283 = vrot.lane.b32.xlu0 %v1270, 96
  %v1284 = vpop.permute.xlu0 %1283
  %1286 = vst.msk [vmem:[#allocation3] sm:$0xff] %vm35, %v1284
  %s1287 = scalar_lea.vmem [#allocation4], 16
  %1288 = vst.msk [vmem:[%s1287] sm:$0xff] %vm35, %v1279
  %s1289 = scalar_lea.vmem %s1, 24
  %v1290 = vld [vmem:[%s1289] sm:$0xff]
  %v1291 = vld [vmem:[#allocation2] sm:$0xff]
  %v1292 = vld [vmem:[#allocation3] sm:$0xff]
  %v1294 = vsel %vm35, %v1291, 0
  %1296 = vmatpush.msra.mxu0 0.0
  %1297 = vmatpush.msra.mxu0 0.0
  %1298 = vmatpush.msra.mxu0 0.0
  %1299 = vmatpush.msra.mxu0 0.0
  %1300 = vmatpush.msra.mxu0 0.0
  %1301 = vmatpush.msra.mxu0 0.0
  %1302 = vmatpush.msra.mxu0 0.0
  %1303 = vmatpush.msra.mxu0 0.0
  %1304 = vmatpush.msra.mxu0 0.0
  %1305 = vmatpush.msra.mxu0 0.0
  %1306 = vmatpush.msra.mxu0 0.0
  %1307 = vmatpush.msra.mxu0 0.0
  %1308 = vmatpush.msra.mxu0 %v54
  %1309 = vmatpush.msra.mxu0 %v53
  %1310 = vmatpush.msra.mxu0 %v52
  %1311 = vmatpush.msra.mxu0 %v51
  %1312 = vmatmul.f32.gmra.mxu0 %v1294
  %v1313 = vpop.f32.mrf.mxu0
  %v1314 = vadd.f32 0.0, %v1313
  %1315 = vdwg.mxu0
  %v1317 = vsel %vm35, %v1290, 0
  %1319 = vmatpush.msra.mxu0 0.0
  %1320 = vmatpush.msra.mxu0 0.0
  %1321 = vmatpush.msra.mxu0 0.0
  %1322 = vmatpush.msra.mxu0 0.0
  %1323 = vmatpush.msra.mxu0 0.0
  %1324 = vmatpush.msra.mxu0 0.0
  %1325 = vmatpush.msra.mxu0 0.0
  %1326 = vmatpush.msra.mxu0 0.0
  %1327 = vmatpush.msra.mxu0 0.0
  %1328 = vmatpush.msra.mxu0 0.0
  %1329 = vmatpush.msra.mxu0 0.0
  %1330 = vmatpush.msra.mxu0 0.0
  %1331 = vmatpush.msra.mxu0 %v50
  %1332 = vmatpush.msra.mxu0 %v49
  %1333 = vmatpush.msra.mxu0 %v48
  %1334 = vmatpush.msra.mxu0 %v47
  %1335 = vmatmul.f32.gmra.mxu0 %v1317
  %v1336 = vpop.f32.mrf.mxu0
  %v1337 = vadd.f32 %v1314, %v1336
  %1338 = vdwg.mxu0
  %v1339 = vadd.f32 %v1337, %v1026
  %v1340 = vxor.u32 %v1339, 2147483648
  %v1341 = vmul.f32 %v1340, 1.442695
  %v1342 = vpow.pop %v1341
  %v1343 = vadd.f32 %v1342, 1.0
  %v1344 = vrcp.pop %v1343
  %v1345 = vmul.f32 %v1343, %v1344
  %v1346 = vsub.f32 1.0, %v1345
  %v1347 = vmul.f32 %v1344, %v1346
  %v1348 = vadd.f32 %v1344, %v1347
  %vm1349 = vweird.f32 %v1343
  %vm1350 = vweird.f32 %v1344
  %vm1351 = vmor %vm1349, %vm1350
  %v1352 = vsel %vm1351, %v1344, %v1348
  %v1353 = vand.u32 2147483647, %v1343
  %vm1354 = vcmp.eq.f32.partialorder %v1353, 8.507059e+37
  %v1355 = vand.u32 %v1343, 2147483648
  %v1356 = vor.u32 1.1754944e-38, %v1355
  %v1357 = vsel %vm1354, %v1356, %v1352
  %v1358 = vmul.f32 1.0, %v1357
  %v1359 = vtanh.pop %v1339
  %1361 = vrot.lane.b32.xlu0 %v1292, 32
  %v1362 = vpop.permute.xlu0 %1361
  %v1364 = vmul.f32 %v1358, %v1362
  %1366 = vrot.lane.b32.xlu0 %v1359, 64
  %v1367 = vpop.permute.xlu0 %1366
  %v1369 = vmul.f32 %v1358, %v1367
  %1371 = vrot.lane.b32.xlu0 %v1369, 32
  %v1372 = vpop.permute.xlu0 %1371
  %v1374 = vadd.f32 %v1364, %v1372
  %v1375 = vtanh.pop %v1374
  %1377 = vrot.lane.b32.xlu0 %v1375, 64
  %v1378 = vpop.permute.xlu0 %1377
  %v1380 = vmul.f32 %v1358, %v1378
  %1382 = vrot.lane.b32.xlu0 %v1380, 32
  %v1383 = vpop.permute.xlu0 %1382
  %1385 = vst.msk [vmem:[#allocation2] sm:$0xff] %vm35, %v1383
  %1387 = vrot.lane.b32.xlu0 %v1374, 96
  %v1388 = vpop.permute.xlu0 %1387
  %1390 = vst.msk [vmem:[#allocation3] sm:$0xff] %vm35, %v1388
  %s1391 = scalar_lea.vmem [#allocation4], 24
  %1392 = vst.msk [vmem:[%s1391] sm:$0xff] %vm35, %v1383
  %s1393 = scalar_lea.vmem %s1, 32
  %v1394 = vld [vmem:[%s1393] sm:$0xff]
  %v1395 = vld [vmem:[#allocation2] sm:$0xff]
  %v1396 = vld [vmem:[#allocation3] sm:$0xff]
  %v1398 = vsel %vm35, %v1395, 0
  %1400 = vmatpush.msra.mxu0 0.0
  %1401 = vmatpush.msra.mxu0 0.0
  %1402 = vmatpush.msra.mxu0 0.0
  %1403 = vmatpush.msra.mxu0 0.0
  %1404 = vmatpush.msra.mxu0 0.0
  %1405 = vmatpush.msra.mxu0 0.0
  %1406 = vmatpush.msra.mxu0 0.0
  %1407 = vmatpush.msra.mxu0 0.0
  %1408 = vmatpush.msra.mxu0 0.0
  %1409 = vmatpush.msra.mxu0 0.0
  %1410 = vmatpush.msra.mxu0 0.0
  %1411 = vmatpush.msra.mxu0 0.0
  %1412 = vmatpush.msra.mxu0 %v54
  %1413 = vmatpush.msra.mxu0 %v53
  %1414 = vmatpush.msra.mxu0 %v52
  %1415 = vmatpush.msra.mxu0 %v51
  %1416 = vmatmul.f32.gmra.mxu0 %v1398
  %v1417 = vpop.f32.mrf.mxu0
  %v1418 = vadd.f32 0.0, %v1417
  %1419 = vdwg.mxu0
  %v1421 = vsel %vm35, %v1394, 0
  %1423 = vmatpush.msra.mxu0 0.0
  %1424 = vmatpush.msra.mxu0 0.0
  %1425 = vmatpush.msra.mxu0 0.0
  %1426 = vmatpush.msra.mxu0 0.0
  %1427 = vmatpush.msra.mxu0 0.0
  %1428 = vmatpush.msra.mxu0 0.0
  %1429 = vmatpush.msra.mxu0 0.0
  %1430 = vmatpush.msra.mxu0 0.0
  %1431 = vmatpush.msra.mxu0 0.0
  %1432 = vmatpush.msra.mxu0 0.0
  %1433 = vmatpush.msra.mxu0 0.0
  %1434 = vmatpush.msra.mxu0 0.0
  %1435 = vmatpush.msra.mxu0 %v50
  %1436 = vmatpush.msra.mxu0 %v49
  %1437 = vmatpush.msra.mxu0 %v48
  %1438 = vmatpush.msra.mxu0 %v47
  %1439 = vmatmul.f32.gmra.mxu0 %v1421
  %v1440 = vpop.f32.mrf.mxu0
  %v1441 = vadd.f32 %v1418, %v1440
  %1442 = vdwg.mxu0
  %v1443 = vadd.f32 %v1441, %v1026
  %v1444 = vxor.u32 %v1443, 2147483648
  %v1445 = vmul.f32 %v1444, 1.442695
  %v1446 = vpow.pop %v1445
  %v1447 = vadd.f32 %v1446, 1.0
  %v1448 = vrcp.pop %v1447
  %v1449 = vmul.f32 %v1447, %v1448
  %v1450 = vsub.f32 1.0, %v1449
  %v1451 = vmul.f32 %v1448, %v1450
  %v1452 = vadd.f32 %v1448, %v1451
  %vm1453 = vweird.f32 %v1447
  %vm1454 = vweird.f32 %v1448
  %vm1455 = vmor %vm1453, %vm1454
  %v1456 = vsel %vm1455, %v1448, %v1452
  %v1457 = vand.u32 2147483647, %v1447
  %vm1458 = vcmp.eq.f32.partialorder %v1457, 8.507059e+37
  %v1459 = vand.u32 %v1447, 2147483648
  %v1460 = vor.u32 1.1754944e-38, %v1459
  %v1461 = vsel %vm1458, %v1460, %v1456
  %v1462 = vmul.f32 1.0, %v1461
  %v1463 = vtanh.pop %v1443
  %1465 = vrot.lane.b32.xlu0 %v1396, 32
  %v1466 = vpop.permute.xlu0 %1465
  %v1468 = vmul.f32 %v1462, %v1466
  %1470 = vrot.lane.b32.xlu0 %v1463, 64
  %v1471 = vpop.permute.xlu0 %1470
  %v1473 = vmul.f32 %v1462, %v1471
  %1475 = vrot.lane.b32.xlu0 %v1473, 32
  %v1476 = vpop.permute.xlu0 %1475
  %v1478 = vadd.f32 %v1468, %v1476
  %v1479 = vtanh.pop %v1478
  %1481 = vrot.lane.b32.xlu0 %v1479, 64
  %v1482 = vpop.permute.xlu0 %1481
  %v1484 = vmul.f32 %v1462, %v1482
  %1486 = vrot.lane.b32.xlu0 %v1484, 32
  %v1487 = vpop.permute.xlu0 %1486
  %1489 = vst.msk [vmem:[#allocation2] sm:$0xff] %vm35, %v1487
  %1491 = vrot.lane.b32.xlu0 %v1478, 96
  %v1492 = vpop.permute.xlu0 %1491
  %1494 = vst.msk [vmem:[#allocation3] sm:$0xff] %vm35, %v1492
  %s1495 = scalar_lea.vmem [#allocation4], 32
  %1496 = vst.msk [vmem:[%s1495] sm:$0xff] %vm35, %v1487
  %s1497 = scalar_lea.vmem %s1, 40
  %v1498 = vld [vmem:[%s1497] sm:$0xff]
  %v1499 = vld [vmem:[#allocation2] sm:$0xff]
  %v1500 = vld [vmem:[#allocation3] sm:$0xff]
  %v1502 = vsel %vm35, %v1499, 0
  %1504 = vmatpush.msra.mxu0 0.0
  %1505 = vmatpush.msra.mxu0 0.0
  %1506 = vmatpush.msra.mxu0 0.0
  %1507 = vmatpush.msra.mxu0 0.0
  %1508 = vmatpush.msra.mxu0 0.0
  %1509 = vmatpush.msra.mxu0 0.0
  %1510 = vmatpush.msra.mxu0 0.0
  %1511 = vmatpush.msra.mxu0 0.0
  %1512 = vmatpush.msra.mxu0 0.0
  %1513 = vmatpush.msra.mxu0 0.0
  %1514 = vmatpush.msra.mxu0 0.0
  %1515 = vmatpush.msra.mxu0 0.0
  %1516 = vmatpush.msra.mxu0 %v54
  %1517 = vmatpush.msra.mxu0 %v53
  %1518 = vmatpush.msra.mxu0 %v52
  %1519 = vmatpush.msra.mxu0 %v51
  %1520 = vmatmul.f32.gmra.mxu0 %v1502
  %v1521 = vpop.f32.mrf.mxu0
  %v1522 = vadd.f32 0.0, %v1521
  %1523 = vdwg.mxu0
  %v1525 = vsel %vm35, %v1498, 0
  %1527 = vmatpush.msra.mxu0 0.0
  %1528 = vmatpush.msra.mxu0 0.0
  %1529 = vmatpush.msra.mxu0 0.0
  %1530 = vmatpush.msra.mxu0 0.0
  %1531 = vmatpush.msra.mxu0 0.0
  %1532 = vmatpush.msra.mxu0 0.0
  %1533 = vmatpush.msra.mxu0 0.0
  %1534 = vmatpush.msra.mxu0 0.0
  %1535 = vmatpush.msra.mxu0 0.0
  %1536 = vmatpush.msra.mxu0 0.0
  %1537 = vmatpush.msra.mxu0 0.0
  %1538 = vmatpush.msra.mxu0 0.0
  %1539 = vmatpush.msra.mxu0 %v50
  %1540 = vmatpush.msra.mxu0 %v49
  %1541 = vmatpush.msra.mxu0 %v48
  %1542 = vmatpush.msra.mxu0 %v47
  %1543 = vmatmul.f32.gmra.mxu0 %v1525
  %v1544 = vpop.f32.mrf.mxu0
  %v1545 = vadd.f32 %v1522, %v1544
  %1546 = vdwg.mxu0
  %v1547 = vadd.f32 %v1545, %v1026
  %v1548 = vxor.u32 %v1547, 2147483648
  %v1549 = vmul.f32 %v1548, 1.442695
  %v1550 = vpow.pop %v1549
  %v1551 = vadd.f32 %v1550, 1.0
  %v1552 = vrcp.pop %v1551
  %v1553 = vmul.f32 %v1551, %v1552
  %v1554 = vsub.f32 1.0, %v1553
  %v1555 = vmul.f32 %v1552, %v1554
  %v1556 = vadd.f32 %v1552, %v1555
  %vm1557 = vweird.f32 %v1551
  %vm1558 = vweird.f32 %v1552
  %vm1559 = vmor %vm1557, %vm1558
  %v1560 = vsel %vm1559, %v1552, %v1556
  %v1561 = vand.u32 2147483647, %v1551
  %vm1562 = vcmp.eq.f32.partialorder %v1561, 8.507059e+37
  %v1563 = vand.u32 %v1551, 2147483648
  %v1564 = vor.u32 1.1754944e-38, %v1563
  %v1565 = vsel %vm1562, %v1564, %v1560
  %v1566 = vmul.f32 1.0, %v1565
  %v1567 = vtanh.pop %v1547
  %1569 = vrot.lane.b32.xlu0 %v1500, 32
  %v1570 = vpop.permute.xlu0 %1569
  %v1572 = vmul.f32 %v1566, %v1570
  %1574 = vrot.lane.b32.xlu0 %v1567, 64
  %v1575 = vpop.permute.xlu0 %1574
  %v1577 = vmul.f32 %v1566, %v1575
  %1579 = vrot.lane.b32.xlu0 %v1577, 32
  %v1580 = vpop.permute.xlu0 %1579
  %v1582 = vadd.f32 %v1572, %v1580
  %v1583 = vtanh.pop %v1582
  %1585 = vrot.lane.b32.xlu0 %v1583, 64
  %v1586 = vpop.permute.xlu0 %1585
  %v1588 = vmul.f32 %v1566, %v1586
  %1590 = vrot.lane.b32.xlu0 %v1588, 32
  %v1591 = vpop.permute.xlu0 %1590
  %1593 = vst.msk [vmem:[#allocation2] sm:$0xff] %vm35, %v1591
  %1595 = vrot.lane.b32.xlu0 %v1582, 96
  %v1596 = vpop.permute.xlu0 %1595
  %1598 = vst.msk [vmem:[#allocation3] sm:$0xff] %vm35, %v1596
  %s1599 = scalar_lea.vmem [#allocation4], 40
  %1600 = vst.msk [vmem:[%s1599] sm:$0xff] %vm35, %v1591
  %s1601 = scalar_lea.vmem %s1, 48
  %v1602 = vld [vmem:[%s1601] sm:$0xff]
  %v1603 = vld [vmem:[#allocation2] sm:$0xff]
  %v1604 = vld [vmem:[#allocation3] sm:$0xff]
  %v1606 = vsel %vm35, %v1603, 0
  %1608 = vmatpush.msra.mxu0 0.0
  %1609 = vmatpush.msra.mxu0 0.0
  %1610 = vmatpush.msra.mxu0 0.0
  %1611 = vmatpush.msra.mxu0 0.0
  %1612 = vmatpush.msra.mxu0 0.0
  %1613 = vmatpush.msra.mxu0 0.0
  %1614 = vmatpush.msra.mxu0 0.0
  %1615 = vmatpush.msra.mxu0 0.0
  %1616 = vmatpush.msra.mxu0 0.0
  %1617 = vmatpush.msra.mxu0 0.0
  %1618 = vmatpush.msra.mxu0 0.0
  %1619 = vmatpush.msra.mxu0 0.0
  %1620 = vmatpush.msra.mxu0 %v54
  %1621 = vmatpush.msra.mxu0 %v53
  %1622 = vmatpush.msra.mxu0 %v52
  %1623 = vmatpush.msra.mxu0 %v51
  %1624 = vmatmul.f32.gmra.mxu0 %v1606
  %v1625 = vpop.f32.mrf.mxu0
  %v1626 = vadd.f32 0.0, %v1625
  %1627 = vdwg.mxu0
  %v1629 = vsel %vm35, %v1602, 0
  %1631 = vmatpush.msra.mxu0 0.0
  %1632 = vmatpush.msra.mxu0 0.0
  %1633 = vmatpush.msra.mxu0 0.0
  %1634 = vmatpush.msra.mxu0 0.0
  %1635 = vmatpush.msra.mxu0 0.0
  %1636 = vmatpush.msra.mxu0 0.0
  %1637 = vmatpush.msra.mxu0 0.0
  %1638 = vmatpush.msra.mxu0 0.0
  %1639 = vmatpush.msra.mxu0 0.0
  %1640 = vmatpush.msra.mxu0 0.0
  %1641 = vmatpush.msra.mxu0 0.0
  %1642 = vmatpush.msra.mxu0 0.0
  %1643 = vmatpush.msra.mxu0 %v50
  %1644 = vmatpush.msra.mxu0 %v49
  %1645 = vmatpush.msra.mxu0 %v48
  %1646 = vmatpush.msra.mxu0 %v47
  %1647 = vmatmul.f32.gmra.mxu0 %v1629
  %v1648 = vpop.f32.mrf.mxu0
  %v1649 = vadd.f32 %v1626, %v1648
  %1650 = vdwg.mxu0
  %v1651 = vadd.f32 %v1649, %v1026
  %v1652 = vxor.u32 %v1651, 2147483648
  %v1653 = vmul.f32 %v1652, 1.442695
  %v1654 = vpow.pop %v1653
  %v1655 = vadd.f32 %v1654, 1.0
  %v1656 = vrcp.pop %v1655
  %v1657 = vmul.f32 %v1655, %v1656
  %v1658 = vsub.f32 1.0, %v1657
  %v1659 = vmul.f32 %v1656, %v1658
  %v1660 = vadd.f32 %v1656, %v1659
  %vm1661 = vweird.f32 %v1655
  %vm1662 = vweird.f32 %v1656
  %vm1663 = vmor %vm1661, %vm1662
  %v1664 = vsel %vm1663, %v1656, %v1660
  %v1665 = vand.u32 2147483647, %v1655
  %vm1666 = vcmp.eq.f32.partialorder %v1665, 8.507059e+37
  %v1667 = vand.u32 %v1655, 2147483648
  %v1668 = vor.u32 1.1754944e-38, %v1667
  %v1669 = vsel %vm1666, %v1668, %v1664
  %v1670 = vmul.f32 1.0, %v1669
  %v1671 = vtanh.pop %v1651
  %1673 = vrot.lane.b32.xlu0 %v1604, 32
  %v1674 = vpop.permute.xlu0 %1673
  %v1676 = vmul.f32 %v1670, %v1674
  %1678 = vrot.lane.b32.xlu0 %v1671, 64
  %v1679 = vpop.permute.xlu0 %1678
  %v1681 = vmul.f32 %v1670, %v1679
  %1683 = vrot.lane.b32.xlu0 %v1681, 32
  %v1684 = vpop.permute.xlu0 %1683
  %v1686 = vadd.f32 %v1676, %v1684
  %v1687 = vtanh.pop %v1686
  %1689 = vrot.lane.b32.xlu0 %v1687, 64
  %v1690 = vpop.permute.xlu0 %1689
  %v1692 = vmul.f32 %v1670, %v1690
  %1694 = vrot.lane.b32.xlu0 %v1692, 32
  %v1695 = vpop.permute.xlu0 %1694
  %1697 = vst.msk [vmem:[#allocation2] sm:$0xff] %vm35, %v1695
  %1699 = vrot.lane.b32.xlu0 %v1686, 96
  %v1700 = vpop.permute.xlu0 %1699
  %1702 = vst.msk [vmem:[#allocation3] sm:$0xff] %vm35, %v1700
  %s1703 = scalar_lea.vmem [#allocation4], 48
  %1704 = vst.msk [vmem:[%s1703] sm:$0xff] %vm35, %v1695
  %s1705 = scalar_lea.vmem %s1, 56
  %v1706 = vld [vmem:[%s1705] sm:$0xff]
  %v1707 = vld [vmem:[#allocation2] sm:$0xff]
  %v1708 = vld [vmem:[#allocation3] sm:$0xff]
  %v1710 = vsel %vm35, %v1707, 0
  %1712 = vmatpush.msra.mxu0 0.0
  %1713 = vmatpush.msra.mxu0 0.0
  %1714 = vmatpush.msra.mxu0 0.0
  %1715 = vmatpush.msra.mxu0 0.0
  %1716 = vmatpush.msra.mxu0 0.0
  %1717 = vmatpush.msra.mxu0 0.0
  %1718 = vmatpush.msra.mxu0 0.0
  %1719 = vmatpush.msra.mxu0 0.0
  %1720 = vmatpush.msra.mxu0 0.0
  %1721 = vmatpush.msra.mxu0 0.0
  %1722 = vmatpush.msra.mxu0 0.0
  %1723 = vmatpush.msra.mxu0 0.0
  %1724 = vmatpush.msra.mxu0 %v54
  %1725 = vmatpush.msra.mxu0 %v53
  %1726 = vmatpush.msra.mxu0 %v52
  %1727 = vmatpush.msra.mxu0 %v51
  %1728 = vmatmul.f32.gmra.mxu0 %v1710
  %v1729 = vpop.f32.mrf.mxu0
  %v1730 = vadd.f32 0.0, %v1729
  %1731 = vdwg.mxu0
  %v1733 = vsel %vm35, %v1706, 0
  %1735 = vmatpush.msra.mxu0 0.0
  %1736 = vmatpush.msra.mxu0 0.0
  %1737 = vmatpush.msra.mxu0 0.0
  %1738 = vmatpush.msra.mxu0 0.0
  %1739 = vmatpush.msra.mxu0 0.0
  %1740 = vmatpush.msra.mxu0 0.0
  %1741 = vmatpush.msra.mxu0 0.0
  %1742 = vmatpush.msra.mxu0 0.0
  %1743 = vmatpush.msra.mxu0 0.0
  %1744 = vmatpush.msra.mxu0 0.0
  %1745 = vmatpush.msra.mxu0 0.0
  %1746 = vmatpush.msra.mxu0 0.0
  %1747 = vmatpush.msra.mxu0 %v50
  %1748 = vmatpush.msra.mxu0 %v49
  %1749 = vmatpush.msra.mxu0 %v48
  %1750 = vmatpush.msra.mxu0 %v47
  %1751 = vmatmul.f32.gmra.mxu0 %v1733
  %v1752 = vpop.f32.mrf.mxu0
  %v1753 = vadd.f32 %v1730, %v1752
  %1754 = vdwg.mxu0
  %v1755 = vadd.f32 %v1753, %v1026
  %v1756 = vxor.u32 %v1755, 2147483648
  %v1757 = vmul.f32 %v1756, 1.442695
  %v1758 = vpow.pop %v1757
  %v1759 = vadd.f32 %v1758, 1.0
  %v1760 = vrcp.pop %v1759
  %v1761 = vmul.f32 %v1759, %v1760
  %v1762 = vsub.f32 1.0, %v1761
  %v1763 = vmul.f32 %v1760, %v1762
  %v1764 = vadd.f32 %v1760, %v1763
  %vm1765 = vweird.f32 %v1759
  %vm1766 = vweird.f32 %v1760
  %vm1767 = vmor %vm1765, %vm1766
  %v1768 = vsel %vm1767, %v1760, %v1764
  %v1769 = vand.u32 2147483647, %v1759
  %vm1770 = vcmp.eq.f32.partialorder %v1769, 8.507059e+37
  %v1771 = vand.u32 %v1759, 2147483648
  %v1772 = vor.u32 1.1754944e-38, %v1771
  %v1773 = vsel %vm1770, %v1772, %v1768
  %v1774 = vmul.f32 1.0, %v1773
  %v1775 = vtanh.pop %v1755
  %1777 = vrot.lane.b32.xlu0 %v1708, 32
  %v1778 = vpop.permute.xlu0 %1777
  %v1780 = vmul.f32 %v1774, %v1778
  %1782 = vrot.lane.b32.xlu0 %v1775, 64
  %v1783 = vpop.permute.xlu0 %1782
  %v1785 = vmul.f32 %v1774, %v1783
  %1787 = vrot.lane.b32.xlu0 %v1785, 32
  %v1788 = vpop.permute.xlu0 %1787
  %v1790 = vadd.f32 %v1780, %v1788
  %v1791 = vtanh.pop %v1790
  %1793 = vrot.lane.b32.xlu0 %v1791, 64
  %v1794 = vpop.permute.xlu0 %1793
  %v1796 = vmul.f32 %v1774, %v1794
  %1798 = vrot.lane.b32.xlu0 %v1796, 32
  %v1799 = vpop.permute.xlu0 %1798
  %1801 = vst.msk [vmem:[#allocation2] sm:$0xff] %vm35, %v1799
  %1803 = vrot.lane.b32.xlu0 %v1790, 96
  %v1804 = vpop.permute.xlu0 %1803
  %1806 = vst.msk [vmem:[#allocation3] sm:$0xff] %vm35, %v1804
  %s1807 = scalar_lea.vmem [#allocation4], 56
  %1808 = vst.msk [vmem:[%s1807] sm:$0xff] %vm35, %v1799
  %v1809 = vld [vmem:[#allocation4] sm:$0xff]
  %v1810 = vld [vmem:[#allocation4 + $0x8] sm:$0xff]
  %v1811 = vld [vmem:[#allocation4 + $0x10] sm:$0xff]
  %v1812 = vld [vmem:[#allocation4 + $0x18] sm:$0xff]
  %v1813 = vld [vmem:[#allocation4 + $0x20] sm:$0xff]
  %v1814 = vld [vmem:[#allocation4 + $0x28] sm:$0xff]
  %v1815 = vld [vmem:[#allocation4 + $0x30] sm:$0xff]
  %v1816 = vld [vmem:[#allocation4 + $0x38] sm:$0xff]
  %v1817 = vld [vmem:[%s8] sm:$0xff]
  %v1818 = vld [vmem:[%s8 + $0x8] sm:$0xff]
  %v1819 = vld [vmem:[%s8 + $0x10] sm:$0xff]
  %v1820 = vld [vmem:[%s8 + $0x18] sm:$0xff]
  %v1821 = vld [vmem:[%s9] sm:$0x1]
  %v1823 = vperm.slane %v1821, 0
  %v1826 = vsel %vm35, %v1809, 0
  %v1829 = vsel %vm35, %v1810, 0
  %v1832 = vsel %vm35, %v1811, 0
  %v1835 = vsel %vm35, %v1812, 0
  %v1838 = vsel %vm35, %v1813, 0
  %v1841 = vsel %vm35, %v1814, 0
  %v1844 = vsel %vm35, %v1815, 0
  %v1847 = vsel %vm35, %v1816, 0
  %1849 = vmatpush.msra.mxu0 0.0
  %1850 = vmatpush.msra.mxu0 0.0
  %1851 = vmatpush.msra.mxu0 0.0
  %1852 = vmatpush.msra.mxu0 0.0
  %1853 = vmatpush.msra.mxu0 0.0
  %1854 = vmatpush.msra.mxu0 0.0
  %1855 = vmatpush.msra.mxu0 0.0
  %1856 = vmatpush.msra.mxu0 0.0
  %1857 = vmatpush.msra.mxu0 0.0
  %1858 = vmatpush.msra.mxu0 0.0
  %1859 = vmatpush.msra.mxu0 0.0
  %1860 = vmatpush.msra.mxu0 0.0
  %1861 = vmatpush.msra.mxu0 %v1820
  %1862 = vmatpush.msra.mxu0 %v1819
  %1863 = vmatpush.msra.mxu0 %v1818
  %1864 = vmatpush.msra.mxu0 %v1817
  %1865 = vmatmul.f32.gmra.mxu0 %v1826
  %v1866 = vpop.f32.mrf.mxu0
  %v1867 = vadd.f32 %v1823, %v1866
  %1868 = vmatmul.f32.gmra.mxu0 %v1829
  %v1869 = vpop.f32.mrf.mxu0
  %v1870 = vadd.f32 %v1823, %v1869
  %1871 = vmatmul.f32.gmra.mxu0 %v1832
  %v1872 = vpop.f32.mrf.mxu0
  %v1873 = vadd.f32 %v1823, %v1872
  %1874 = vmatmul.f32.gmra.mxu0 %v1835
  %v1875 = vpop.f32.mrf.mxu0
  %v1876 = vadd.f32 %v1823, %v1875
  %1877 = vmatmul.f32.gmra.mxu0 %v1838
  %v1878 = vpop.f32.mrf.mxu0
  %v1879 = vadd.f32 %v1823, %v1878
  %1880 = vmatmul.f32.gmra.mxu0 %v1841
  %v1881 = vpop.f32.mrf.mxu0
  %v1882 = vadd.f32 %v1823, %v1881
  %1883 = vmatmul.f32.gmra.mxu0 %v1844
  %v1884 = vpop.f32.mrf.mxu0
  %v1885 = vadd.f32 %v1823, %v1884
  %1886 = vmatmul.f32.gmra.mxu0 %v1847
  %v1887 = vpop.f32.mrf.mxu0
  %v1888 = vadd.f32 %v1823, %v1887
  %1889 = vdwg.mxu0
  %1890 = vst [vmem:[%s10] sm:$0xff] %v1867
  %1891 = vst [vmem:[%s10 + $0x8] sm:$0xff] %v1870
  %1892 = vst [vmem:[%s10 + $0x10] sm:$0xff] %v1873
  %1893 = vst [vmem:[%s10 + $0x18] sm:$0xff] %v1876
  %1894 = vst [vmem:[%s10 + $0x20] sm:$0xff] %v1879
  %1895 = vst [vmem:[%s10 + $0x28] sm:$0xff] %v1882
  %1896 = vst [vmem:[%s10 + $0x30] sm:$0xff] %v1885
  %1897 = vst [vmem:[%s10 + $0x38] sm:$0xff] %v1888
  // Predicated region
  $region42: #{seq2seq_forward.1} parent=0 // pred_check
    _
  $region43: #{seq2seq_forward.1} parent=0 // pred_check_branch
    %1899 = sbr.rel (0) target = $region45
  $region44: #{seq2seq_forward.1} parent=0 // pred_region
    _
  $region45: #{seq2seq_forward.1} parent=0 // pred_fallthru
    _
  // Predicated region
  $region46: #{seq2seq_forward.1} parent=0 // pred_check
    _
  $region47: #{seq2seq_forward.1} parent=0 // pred_check_branch
    %1901 = sbr.rel (0) target = $region49
  $region48: #{seq2seq_forward.1} parent=0 // pred_region
    _
  $region49: #{seq2seq_forward.1} parent=0 // pred_fallthru
    _

</llo_original>
